<compile_context>
chip_gen: v5e
topology: v5e:2x2
jax: 0.10.0
libtpu: 0.0.40
codegen_flags: <defaults>
</compile_context>

<pallas_src>
import functools
import numpy as np
import jax
import jax.numpy as jnp
from jax.experimental import pallas as pl
from jax.experimental.pallas import tpu as pltpu


# ----------------------------- helpers (host) -----------------------------

def rope_tables(n, dim_head, n_head):
    """cos/sin tables matching rotary-embedding-torch (interleaved pairs),
    tiled across heads so they apply directly to the (N, H*D) q/k slabs."""
    # TODO(synk): verify the interleaved-pair RoPE convention once against the
    # original rotary-embedding-torch module (kernel and reference share it).
    inv_freq = 1.0 / (10000.0 ** (np.arange(0, dim_head, 2, dtype=np.float32) / dim_head))
    pos = np.arange(n, dtype=np.float32)
    angles = pos[:, None] * inv_freq[None, :]            # (N, D/2)
    angles = np.repeat(angles, 2, axis=-1)               # (N, D), interleave-duplicated
    cos = np.tile(np.cos(angles), (1, n_head)).astype(np.float32)   # (N, H*D)
    sin = np.tile(np.sin(angles), (1, n_head)).astype(np.float32)
    return jnp.asarray(cos), jnp.asarray(sin)


def rotate_half_matrix(hd):
    """R such that x @ R == rotate_half(x) (interleaved pair swap w/ negation)."""
    R = np.zeros((hd, hd), dtype=np.float32)
    for i in range(hd // 2):
        R[2 * i + 1, 2 * i] = -1.0
        R[2 * i, 2 * i + 1] = 1.0
    return jnp.asarray(R)


def init_params(key, dim, dim_head, n_head):
    """Deterministic synthetic parameters (same shapes as the torch module)."""
    HD = n_head * dim_head
    ks = jax.random.split(key, 10)

    def lin(k, fan_in, shape):
        return (jax.random.normal(k, shape, jnp.float32) * (fan_in ** -0.5)).astype(jnp.float32)

    return dict(
        gamma_attn=(jnp.ones((1, dim), jnp.float32)
                    + 0.02 * jax.random.normal(ks[0], (1, dim), jnp.float32)),
        wqkv_t=lin(ks[1], dim, (dim, 3 * HD)),           # to_qkv.weight.T
        wg_t=lin(ks[2], dim, (dim, n_head)),             # to_gates.weight.T
        bg=0.1 * jax.random.normal(ks[3], (1, n_head), jnp.float32),
        wo_t=lin(ks[4], HD, (HD, dim)),                  # to_out[0].weight.T
        gamma_ff=(jnp.ones((1, dim), jnp.float32)
                  + 0.02 * jax.random.normal(ks[5], (1, dim), jnp.float32)),
        w1_t=lin(ks[6], dim, (dim, 4 * dim)),            # ff Linear1 weight.T
        b1=0.1 * jax.random.normal(ks[7], (1, 4 * dim), jnp.float32),
        w2_t=lin(ks[8], 4 * dim, (4 * dim, dim)),        # ff Linear2 weight.T
        b2=0.1 * jax.random.normal(ks[9], (1, dim), jnp.float32),
    )


# ----------------------------- Pallas kernel ------------------------------

def _rmsnorm(x, gamma_scaled):
    # F.normalize(x, dim=-1) * sqrt(dim) * gamma, with sqrt(dim) pre-folded
    # into gamma_scaled on the host.  rsqrt goes to the EUP slot.
    ss = jnp.sum(x * x, axis=-1, keepdims=True)
    return x * jax.lax.rsqrt(jnp.maximum(ss, 1e-24)) * gamma_scaled


def _erf(x):
    # Abramowitz & Stegun 7.1.26 (|error| < 1.5e-7).  Uses only exp / abs /
    # mul / add / where, so it never depends on an erf lowering in Mosaic.
    p = 0.3275911
    a1, a2, a3, a4, a5 = (0.254829592, -0.284496736, 1.421413741,
                          -1.453152027, 1.061405429)
    ax = jnp.abs(x)
    t = 1.0 / (1.0 + p * ax)
    poly = ((((a5 * t + a4) * t + a3) * t + a2) * t + a1) * t
    e = 1.0 - poly * jnp.exp(-ax * ax)
    return jnp.where(x >= 0, e, -e)


def partial_roformer_kernel(x_ref, cos_ref, sin_ref, ga_ref, wfused_ref, bg_ref,
                            wo_ref, gf_ref, w1_ref, b1_ref, w2_ref, b2_ref,
                            o_ref, *, n_head, dim_head, seq_len, tb):
    H, D, N = n_head, dim_head, seq_len
    HD = H * D
    M = tb * N                                            # rows per grid step
    bf16 = jnp.bfloat16

    x = x_ref[...]                                        # (M, C) f32

    # ---------------- Attention ----------------
    xn = _rmsnorm(x, ga_ref[...])                         # f32
    # ONE fused projection [Q | K | V | Q@R | K@R | Gate]; bf16 MXU, f32 acc.
    proj = jnp.dot(xn.astype(bf16), wfused_ref[...],
                   preferred_element_type=jnp.float32)    # (M, 6*HD) f32

    cos = cos_ref[...]                                    # (N, HD), bcast over tb
    sin = sin_ref[...]
    qp = proj[:, 0 * HD:1 * HD].reshape(tb, N, HD)
    kp = proj[:, 1 * HD:2 * HD].reshape(tb, N, HD)
    v3 = proj[:, 2 * HD:3 * HD].reshape(tb, N, HD)
    qr = proj[:, 3 * HD:4 * HD].reshape(tb, N, HD)
    kr = proj[:, 4 * HD:5 * HD].reshape(tb, N, HD)
    gates = jax.nn.sigmoid(proj[:, 5 * HD:6 * HD] + bg_ref[...])    # (M, HD) f32

    # RoPE is pure VPU work: rotate_half was folded into the fused weight.
    q3 = qp * cos + qr * sin                              # (tb, N, HD) f32
    k3 = kp * cos + kr * sin

    # Per-head attention, batched over the tb sequences in this step.
    # (Q was pre-scaled by dim_head**-0.5 on the host.)
    heads = []
    for h in range(H):
        sl = slice(h * D, (h + 1) * D)
        s = jnp.einsum("bnd,bmd->bnm",
                       q3[:, :, sl].astype(bf16),
                       k3[:, :, sl].astype(bf16),
                       preferred_element_type=jnp.float32)          # (tb, N, N)
        s = s - jnp.max(s, axis=-1, keepdims=True)
        p = jnp.exp(s)
        p = p / jnp.sum(p, axis=-1, keepdims=True)                  # exact softmax
        heads.append(jnp.einsum("bnm,bmd->bnd",
                                p.astype(bf16),
                                v3[:, :, sl].astype(bf16),
                                preferred_element_type=jnp.float32))  # (tb, N, D)

    attn = jnp.concatenate(heads, axis=-1).reshape(M, HD) * gates   # (M, HD) f32
    y = x + jnp.dot(attn.astype(bf16), wo_ref[...],
                    preferred_element_type=jnp.float32)             # (M, C) f32

    # ---------------- FeedForward ----------------
    yn = _rmsnorm(y, gf_ref[...])
    h1 = jnp.dot(yn.astype(bf16), w1_ref[...],
                 preferred_element_type=jnp.float32) + b1_ref[...]
    h1 = 0.5 * h1 * (1.0 + _erf(h1 * (2.0 ** -0.5)))                # exact GELU
    h2 = jnp.dot(h1.astype(bf16), w2_ref[...],
                 preferred_element_type=jnp.float32) + b2_ref[...]

    o_ref[...] = y + h2                                             # (M, C) f32


# ------------------------------- wrapper -----------------------------------

def _num_tensorcores():
    """TensorCores sharing one Pallas grid on the current device."""
    try:
        kind = jax.devices()[0].device_kind.lower()
    except Exception:
        return 2
    if any(s in kind for s in ("v2", "v3", "v5 lite", "v5e", "v6 lite", "v6e")):
        return 1          # single TC per device: grid steps are a serial loop
    return 2              # v4/v5p megacore, v7x: 2 TCs share parallel grid axes


def _choose_seq_tile(B, n_cores):
    """Largest TB dividing B with at least `n_cores` grid steps (G=1 on 1-TC chips)."""
    target = max(1, min(n_cores, B))
    tb = max(1, B // target)
    while B % tb:
        tb -= 1
    return tb


def partial_roformer_forward(x, params, *, n_head, dim_head, direction="f"):
    b, c, f, t = x.shape
    if direction == "f":
        xr = jnp.transpose(x, (0, 3, 2, 1)).reshape(b * t, f, c)   # (b t) f c
    else:
        xr = jnp.transpose(x, (0, 2, 3, 1)).reshape(b * f, t, c)   # (b f) t c
    B, N, C = xr.shape
    H, D = n_head, dim_head
    HD = H * D

    TB = _choose_seq_tile(B, _num_tensorcores())
    G = B // TB
    M = TB * N

    x2 = xr.reshape(B * N, C)                      # row-slab layout for the kernel

    # RoPE tables: (N, HD) once, broadcast over TB inside the kernel.
    cos, sin = rope_tables(N, D, H)
    R = rotate_half_matrix(HD)

    # Host-side constant folding.
    rms_scale = jnp.float32(C ** 0.5)
    ga = params["gamma_attn"] * rms_scale          # gamma * sqrt(C)
    gf = params["gamma_ff"] * rms_scale
    wq = params["wqkv_t"][:, :HD] * jnp.float32(D ** -0.5)   # attn scale folded in
    wk = params["wqkv_t"][:, HD:2 * HD]
    wv = params["wqkv_t"][:, 2 * HD:]
    wg = jnp.repeat(params["wg_t"], D, axis=1)     # (C, HD): gate repeated D-wise
    bg = jnp.repeat(params["bg"], D, axis=1)       # (1, HD)
    # Fused projection weight: [Q | K | V | Q@R | K@R | Gate]  -> (C, 6*HD)
    w_fused = jnp.concatenate([wq, wk, wv, wq @ R, wk @ R, wg], axis=1)

    # MXU operands live in bf16 (f32 accumulation inside the kernel).
    w_fused = w_fused.astype(jnp.bfloat16)
    wo = params["wo_t"].astype(jnp.bfloat16)
    w1 = params["w1_t"].astype(jnp.bfloat16)
    w2 = params["w2_t"].astype(jnp.bfloat16)
    b1 = params["b1"]
    b2 = params["b2"]

    kern = functools.partial(partial_roformer_kernel,
                             n_head=H, dim_head=D, seq_len=N, tb=TB)

    def const2d(arr):
        # Grid-invariant operand: full-array block, constant index_map.
        return pl.BlockSpec(arr.shape, lambda i: (0, 0))

    # Advisory cost estimate for the XLA scheduler.
    flops = B * (2 * N * C * 6 * HD          # fused projection
                 + 4 * H * N * N * D         # qk^T + pv
                 + 2 * N * HD * C            # out proj
                 + 2 * N * C * 4 * C         # ff1
                 + 2 * N * 4 * C * C)        # ff2
    transcendentals = B * (H * N * N + N * HD + 2 * N * 4 * C + 2 * N)
    weight_bytes = sum(int(a.size) * a.dtype.itemsize
                       for a in (cos, sin, ga, w_fused, bg, wo, gf, w1, b1, w2, b2))
    bytes_accessed = int(2 * B * N * C * 4 + weight_bytes)

    out = pl.pallas_call(
        kern,
        out_shape=jax.ShapeDtypeStruct((B * N, C), jnp.float32),
        grid_spec=pltpu.PrefetchScalarGridSpec(
            num_scalar_prefetch=0,
            grid=(G,),
            in_specs=[
                pl.BlockSpec((M, C), lambda i: (i, 0)),   # x slab: TB sequences
                const2d(cos),                             # cos (N, HD)
                const2d(sin),                             # sin (N, HD)
                const2d(ga),                              # attn gamma * sqrt(C)
                const2d(w_fused),                         # fused projection (bf16)
                const2d(bg),                              # gate bias (D-repeated)
                const2d(wo),                              # Wout^T (bf16)
                const2d(gf),                              # ff gamma * sqrt(C)
                const2d(w1),                              # ff W1^T (bf16)
                const2d(b1),                              # ff b1
                const2d(w2),                              # ff W2^T (bf16)
                const2d(b2),                              # ff b2
            ],
            out_specs=pl.BlockSpec((M, C), lambda i: (i, 0)),
        ),
        compiler_params=pltpu.CompilerParams(
            dimension_semantics=("parallel",)),
        cost_estimate=pl.CostEstimate(flops=int(flops),
                                      transcendentals=int(transcendentals),
                                      bytes_accessed=bytes_accessed),
    )(x2, cos, sin, ga, w_fused, bg, wo, gf, w1, b1, w2, b2)

    out = out.reshape(B, N, C)
    if direction == "f":
        return out.reshape(b, t, f, c).transpose(0, 3, 2, 1)
    return out.reshape(b, f, t, c).transpose(0, 3, 1, 2)


# --------------------------- pure-JAX reference -----------------------------

def reference_forward(x, params, *, n_head, dim_head, direction="f"):
    b, c, f, t = x.shape
    if direction == "f":
        xr = jnp.transpose(x, (0, 3, 2, 1)).reshape(b * t, f, c)
    else:
        xr = jnp.transpose(x, (0, 2, 3, 1)).reshape(b * f, t, c)
    B, N, C = xr.shape
    HD = n_head * dim_head
    cos, sin = rope_tables(N, dim_head, n_head)
    R = rotate_half_matrix(HD)
    rs = C ** 0.5

    def rms(v, g):
        nrm = jnp.sqrt(jnp.sum(v * v, -1, keepdims=True))
        return v / jnp.maximum(nrm, 1e-12) * rs * g

    xn = rms(xr, params["gamma_attn"])
    qkv = xn @ params["wqkv_t"]
    q, k, v = qkv[..., :HD], qkv[..., HD:2 * HD], qkv[..., 2 * HD:]
    q = q * cos + (q @ R) * sin
    k = k * cos + (k @ R) * sin
    gates = jax.nn.sigmoid(xn @ params["wg_t"] + params["bg"])
    qh = q.reshape(B, N, n_head, dim_head).transpose(0, 2, 1, 3)
    kh = k.reshape(B, N, n_head, dim_head).transpose(0, 2, 1, 3)
    vh = v.reshape(B, N, n_head, dim_head).transpose(0, 2, 1, 3)
    s = jnp.einsum("bhnd,bhmd->bhnm", qh, kh) * dim_head ** -0.5
    p = jax.nn.softmax(s, -1)
    o = jnp.einsum("bhnm,bhmd->bhnd", p, vh)
    o = o * gates.transpose(0, 2, 1)[..., None]
    o = o.transpose(0, 2, 1, 3).reshape(B, N, HD)
    y = xr + o @ params["wo_t"]
    yn = rms(y, params["gamma_ff"])
    h1 = yn @ params["w1_t"] + params["b1"]
    h1 = 0.5 * h1 * (1.0 + jax.lax.erf(h1 * 2.0 ** -0.5))
    yr = y + h1 @ params["w2_t"] + params["b2"]
    if direction == "f":
        return yr.reshape(b, t, f, c).transpose(0, 3, 2, 1)
    return yr.reshape(b, f, t, c).transpose(0, 3, 1, 2)


# ---------------------------------- main ------------------------------------

if __name__ == "__main__":
    key = jax.random.PRNGKey(0)
    b, dim, f, t = 2, 32, 16, 8          # x: (batch, channels=dim, freqs, time)
    dim_head, n_head = 8, 4              # dim == dim_head * n_head
    direction = "f"

    kx, kp = jax.random.split(key)
    x = jax.random.normal(kx, (b, dim, f, t), jnp.float32)
    params = init_params(kp, dim, dim_head, n_head)

    y = partial_roformer_forward(x, params, n_head=n_head, dim_head=dim_head,
                                 direction=direction)
    y = jax.block_until_ready(y)

    y_ref = reference_forward(x, params, n_head=n_head, dim_head=dim_head,
                              direction=direction)
    assert y.shape == x.shape
    # Tolerance accounts for bf16 MXU operands in the kernel vs. the f32 reference.
    np.testing.assert_allclose(np.asarray(y), np.asarray(y_ref), rtol=5e-2, atol=5e-2)
    print("KERNEL_OK")
</pallas_src>

<mosaic_0001>
module attributes {stable_mosaic.version = 11 : i64} {
  func.func @partial_roformer_kernel(%arg0: i32, %arg1: memref<128x32xf32, #tpu.memory_space<vmem>>, %arg2: memref<16x32xf32, #tpu.memory_space<vmem>>, %arg3: memref<16x32xf32, #tpu.memory_space<vmem>>, %arg4: memref<1x32xf32, #tpu.memory_space<vmem>>, %arg5: memref<32x192xbf16, #tpu.memory_space<vmem>>, %arg6: memref<1x32xf32, #tpu.memory_space<vmem>>, %arg7: memref<32x32xbf16, #tpu.memory_space<vmem>>, %arg8: memref<1x32xf32, #tpu.memory_space<vmem>>, %arg9: memref<32x128xbf16, #tpu.memory_space<vmem>>, %arg10: memref<1x128xf32, #tpu.memory_space<vmem>>, %arg11: memref<128x32xbf16, #tpu.memory_space<vmem>>, %arg12: memref<1x32xf32, #tpu.memory_space<vmem>>, %arg13: memref<128x32xf32, #tpu.memory_space<vmem>>) attributes {dimension_semantics = [#tpu.dimension_semantics<parallel>], iteration_bounds = array<i64: 2>, scalar_prefetch = 0 : i64, scratch_operands = 0 : i64, tpu.core_type = #tpu.core_type<tc>, window_params = [{transform_indices = @transform_0, window_bounds = array<i64: 128, 32>}, {pipeline_mode = #tpu.pipeline_mode<synchronous>, transform_indices = @transform_1, window_bounds = array<i64: 16, 32>}, {pipeline_mode = #tpu.pipeline_mode<synchronous>, transform_indices = @transform_2, window_bounds = array<i64: 16, 32>}, {pipeline_mode = #tpu.pipeline_mode<synchronous>, transform_indices = @transform_3, window_bounds = array<i64: 1, 32>}, {pipeline_mode = #tpu.pipeline_mode<synchronous>, transform_indices = @transform_4, window_bounds = array<i64: 32, 192>}, {pipeline_mode = #tpu.pipeline_mode<synchronous>, transform_indices = @transform_5, window_bounds = array<i64: 1, 32>}, {pipeline_mode = #tpu.pipeline_mode<synchronous>, transform_indices = @transform_6, window_bounds = array<i64: 32, 32>}, {pipeline_mode = #tpu.pipeline_mode<synchronous>, transform_indices = @transform_7, window_bounds = array<i64: 1, 32>}, {pipeline_mode = #tpu.pipeline_mode<synchronous>, transform_indices = @transform_8, window_bounds = array<i64: 32, 128>}, {pipeline_mode = #tpu.pipeline_mode<synchronous>, transform_indices = @transform_9, window_bounds = array<i64: 1, 128>}, {pipeline_mode = #tpu.pipeline_mode<synchronous>, transform_indices = @transform_10, window_bounds = array<i64: 128, 32>}, {pipeline_mode = #tpu.pipeline_mode<synchronous>, transform_indices = @transform_11, window_bounds = array<i64: 1, 32>}, {transform_indices = @transform_12, window_bounds = array<i64: 128, 32>}]} {
    %c0 = arith.constant 0 : index
    %c0_0 = arith.constant 0 : index
    %0 = vector.load %arg1[%c0, %c0_0] : memref<128x32xf32, #tpu.memory_space<vmem>>, vector<128x32xf32>
    %c0_1 = arith.constant 0 : index
    %c0_2 = arith.constant 0 : index
    %1 = vector.load %arg4[%c0_1, %c0_2] : memref<1x32xf32, #tpu.memory_space<vmem>>, vector<1x32xf32>
    %2 = arith.mulf %0, %0 : vector<128x32xf32>
    %cst = arith.constant dense<0.000000e+00> : vector<128xf32>
    %3 = vector.multi_reduction <add>, %2, %cst [1] : vector<128x32xf32> to vector<128xf32>
    %4 = vector.shape_cast %3 : vector<128xf32> to vector<128x1xf32>
    %cst_3 = arith.constant 1.000000e-24 : f32
    %5 = vector.broadcast %cst_3 : f32 to vector<128x1xf32>
    %6 = arith.maximumf %4, %5 : vector<128x1xf32>
    %7 = math.rsqrt %6 : vector<128x1xf32>
    %8 = vector.broadcast %7 : vector<128x1xf32> to vector<128x32xf32>
    %9 = arith.mulf %0, %8 : vector<128x32xf32>
    %10 = vector.broadcast %1 : vector<1x32xf32> to vector<128x32xf32>
    %11 = arith.mulf %9, %10 : vector<128x32xf32>
    %12 = arith.truncf %11 : vector<128x32xf32> to vector<128x32xbf16>
    %c0_4 = arith.constant 0 : index
    %c0_5 = arith.constant 0 : index
    %13 = vector.load %arg5[%c0_4, %c0_5] : memref<32x192xbf16, #tpu.memory_space<vmem>>, vector<32x192xbf16>
    %cst_6 = arith.constant dense<0.000000e+00> : vector<128x192xf32>
    %14 = tpu.matmul %12, %13, %cst_6 {dimension_numbers = #tpu.dot_dimension_numbers<[1], [0], [0], [1], [0, 0, 1, 1], [], []>} : vector<128x32xbf16>, vector<32x192xbf16>, vector<128x192xf32> -> vector<128x192xf32>
    %c0_7 = arith.constant 0 : index
    %c0_8 = arith.constant 0 : index
    %15 = vector.load %arg2[%c0_7, %c0_8] : memref<16x32xf32, #tpu.memory_space<vmem>>, vector<16x32xf32>
    %c0_9 = arith.constant 0 : index
    %c0_10 = arith.constant 0 : index
    %16 = vector.load %arg3[%c0_9, %c0_10] : memref<16x32xf32, #tpu.memory_space<vmem>>, vector<16x32xf32>
    %17 = vector.extract_strided_slice %14 {offsets = [0, 0], sizes = [128, 32], strides = [1, 1]} : vector<128x192xf32> to vector<128x32xf32>
    %18 = vector.shape_cast %17 : vector<128x32xf32> to vector<8x16x32xf32>
    %19 = vector.extract_strided_slice %14 {offsets = [0, 32], sizes = [128, 32], strides = [1, 1]} : vector<128x192xf32> to vector<128x32xf32>
    %20 = vector.shape_cast %19 : vector<128x32xf32> to vector<8x16x32xf32>
    %21 = vector.extract_strided_slice %14 {offsets = [0, 64], sizes = [128, 32], strides = [1, 1]} : vector<128x192xf32> to vector<128x32xf32>
    %22 = vector.shape_cast %21 : vector<128x32xf32> to vector<8x16x32xf32>
    %23 = vector.extract_strided_slice %14 {offsets = [0, 96], sizes = [128, 32], strides = [1, 1]} : vector<128x192xf32> to vector<128x32xf32>
    %24 = vector.shape_cast %23 : vector<128x32xf32> to vector<8x16x32xf32>
    %25 = vector.extract_strided_slice %14 {offsets = [0, 128], sizes = [128, 32], strides = [1, 1]} : vector<128x192xf32> to vector<128x32xf32>
    %26 = vector.shape_cast %25 : vector<128x32xf32> to vector<8x16x32xf32>
    %27 = vector.extract_strided_slice %14 {offsets = [0, 160], sizes = [128, 32], strides = [1, 1]} : vector<128x192xf32> to vector<128x32xf32>
    %c0_11 = arith.constant 0 : index
    %c0_12 = arith.constant 0 : index
    %28 = vector.load %arg6[%c0_11, %c0_12] : memref<1x32xf32, #tpu.memory_space<vmem>>, vector<1x32xf32>
    %29 = vector.broadcast %28 : vector<1x32xf32> to vector<128x32xf32>
    %30 = arith.addf %27, %29 : vector<128x32xf32>
    %31 = arith.negf %30 : vector<128x32xf32>
    %32 = math.exp %31 : vector<128x32xf32>
    %cst_13 = arith.constant 1.000000e+00 : f32
    %33 = vector.broadcast %cst_13 : f32 to vector<128x32xf32>
    %34 = arith.addf %33, %32 : vector<128x32xf32>
    %35 = arith.divf %33, %34 : vector<128x32xf32>
    %36 = vector.shape_cast %15 : vector<16x32xf32> to vector<1x16x32xf32>
    %37 = vector.broadcast %36 : vector<1x16x32xf32> to vector<8x16x32xf32>
    %38 = arith.mulf %18, %37 : vector<8x16x32xf32>
    %39 = vector.shape_cast %16 : vector<16x32xf32> to vector<1x16x32xf32>
    %40 = vector.broadcast %39 : vector<1x16x32xf32> to vector<8x16x32xf32>
    %41 = arith.mulf %24, %40 : vector<8x16x32xf32>
    %42 = arith.addf %38, %41 : vector<8x16x32xf32>
    %43 = vector.shape_cast %15 : vector<16x32xf32> to vector<1x16x32xf32>
    %44 = vector.broadcast %43 : vector<1x16x32xf32> to vector<8x16x32xf32>
    %45 = arith.mulf %20, %44 : vector<8x16x32xf32>
    %46 = vector.shape_cast %16 : vector<16x32xf32> to vector<1x16x32xf32>
    %47 = vector.broadcast %46 : vector<1x16x32xf32> to vector<8x16x32xf32>
    %48 = arith.mulf %26, %47 : vector<8x16x32xf32>
    %49 = arith.addf %45, %48 : vector<8x16x32xf32>
    %50 = vector.extract_strided_slice %42 {offsets = [0, 0, 0], sizes = [8, 16, 8], strides = [1, 1, 1]} : vector<8x16x32xf32> to vector<8x16x8xf32>
    %51 = arith.truncf %50 : vector<8x16x8xf32> to vector<8x16x8xbf16>
    %52 = vector.extract_strided_slice %49 {offsets = [0, 0, 0], sizes = [8, 16, 8], strides = [1, 1, 1]} : vector<8x16x32xf32> to vector<8x16x8xf32>
    %53 = arith.truncf %52 : vector<8x16x8xf32> to vector<8x16x8xbf16>
    "tpu.trace_start"() <{level = 10 : i32, message = "bnd,bmd->bnm"}> : () -> ()
    %cst_14 = arith.constant dense<0.000000e+00> : vector<8x16x16xf32>
    %54 = tpu.matmul %51, %53, %cst_14 {dimension_numbers = #tpu.dot_dimension_numbers<[2], [2], [1], [1], [0, 0, 0, 1, 1, 1], [0], [0]>} : vector<8x16x8xbf16>, vector<8x16x8xbf16>, vector<8x16x16xf32> -> vector<8x16x16xf32>
    "tpu.trace_stop"() : () -> ()
    %cst_15 = arith.constant dense<0xFF800000> : vector<8x16xf32>
    %55 = vector.multi_reduction <maximumf>, %54, %cst_15 [2] : vector<8x16x16xf32> to vector<8x16xf32>
    %56 = vector.shape_cast %55 : vector<8x16xf32> to vector<8x16x1xf32>
    %57 = vector.broadcast %56 : vector<8x16x1xf32> to vector<8x16x16xf32>
    %58 = arith.subf %54, %57 : vector<8x16x16xf32>
    %59 = math.exp %58 : vector<8x16x16xf32>
    %cst_16 = arith.constant dense<0.000000e+00> : vector<8x16xf32>
    %60 = vector.multi_reduction <add>, %59, %cst_16 [2] : vector<8x16x16xf32> to vector<8x16xf32>
    %61 = vector.shape_cast %60 : vector<8x16xf32> to vector<8x16x1xf32>
    %62 = vector.broadcast %61 : vector<8x16x1xf32> to vector<8x16x16xf32>
    %63 = arith.divf %59, %62 : vector<8x16x16xf32>
    %64 = arith.truncf %63 : vector<8x16x16xf32> to vector<8x16x16xbf16>
    %65 = vector.extract_strided_slice %22 {offsets = [0, 0, 0], sizes = [8, 16, 8], strides = [1, 1, 1]} : vector<8x16x32xf32> to vector<8x16x8xf32>
    %66 = arith.truncf %65 : vector<8x16x8xf32> to vector<8x16x8xbf16>
    "tpu.trace_start"() <{level = 10 : i32, message = "bnm,bmd->bnd"}> : () -> ()
    %cst_17 = arith.constant dense<0.000000e+00> : vector<8x16x8xf32>
    %67 = tpu.matmul %64, %66, %cst_17 {dimension_numbers = #tpu.dot_dimension_numbers<[2], [1], [1], [2], [0, 0, 0, 1, 1, 2], [0], [0]>} : vector<8x16x16xbf16>, vector<8x16x8xbf16>, vector<8x16x8xf32> -> vector<8x16x8xf32>
    "tpu.trace_stop"() : () -> ()
    %68 = vector.extract_strided_slice %42 {offsets = [0, 0, 8], sizes = [8, 16, 8], strides = [1, 1, 1]} : vector<8x16x32xf32> to vector<8x16x8xf32>
    %69 = arith.truncf %68 : vector<8x16x8xf32> to vector<8x16x8xbf16>
    %70 = vector.extract_strided_slice %49 {offsets = [0, 0, 8], sizes = [8, 16, 8], strides = [1, 1, 1]} : vector<8x16x32xf32> to vector<8x16x8xf32>
    %71 = arith.truncf %70 : vector<8x16x8xf32> to vector<8x16x8xbf16>
    "tpu.trace_start"() <{level = 10 : i32, message = "bnd,bmd->bnm"}> : () -> ()
    %cst_18 = arith.constant dense<0.000000e+00> : vector<8x16x16xf32>
    %72 = tpu.matmul %69, %71, %cst_18 {dimension_numbers = #tpu.dot_dimension_numbers<[2], [2], [1], [1], [0, 0, 0, 1, 1, 1], [0], [0]>} : vector<8x16x8xbf16>, vector<8x16x8xbf16>, vector<8x16x16xf32> -> vector<8x16x16xf32>
    "tpu.trace_stop"() : () -> ()
    %cst_19 = arith.constant dense<0xFF800000> : vector<8x16xf32>
    %73 = vector.multi_reduction <maximumf>, %72, %cst_19 [2] : vector<8x16x16xf32> to vector<8x16xf32>
    %74 = vector.shape_cast %73 : vector<8x16xf32> to vector<8x16x1xf32>
    %75 = vector.broadcast %74 : vector<8x16x1xf32> to vector<8x16x16xf32>
    %76 = arith.subf %72, %75 : vector<8x16x16xf32>
    %77 = math.exp %76 : vector<8x16x16xf32>
    %cst_20 = arith.constant dense<0.000000e+00> : vector<8x16xf32>
    %78 = vector.multi_reduction <add>, %77, %cst_20 [2] : vector<8x16x16xf32> to vector<8x16xf32>
    %79 = vector.shape_cast %78 : vector<8x16xf32> to vector<8x16x1xf32>
    %80 = vector.broadcast %79 : vector<8x16x1xf32> to vector<8x16x16xf32>
    %81 = arith.divf %77, %80 : vector<8x16x16xf32>
    %82 = arith.truncf %81 : vector<8x16x16xf32> to vector<8x16x16xbf16>
    %83 = vector.extract_strided_slice %22 {offsets = [0, 0, 8], sizes = [8, 16, 8], strides = [1, 1, 1]} : vector<8x16x32xf32> to vector<8x16x8xf32>
    %84 = arith.truncf %83 : vector<8x16x8xf32> to vector<8x16x8xbf16>
    "tpu.trace_start"() <{level = 10 : i32, message = "bnm,bmd->bnd"}> : () -> ()
    %cst_21 = arith.constant dense<0.000000e+00> : vector<8x16x8xf32>
    %85 = tpu.matmul %82, %84, %cst_21 {dimension_numbers = #tpu.dot_dimension_numbers<[2], [1], [1], [2], [0, 0, 0, 1, 1, 2], [0], [0]>} : vector<8x16x16xbf16>, vector<8x16x8xbf16>, vector<8x16x8xf32> -> vector<8x16x8xf32>
    "tpu.trace_stop"() : () -> ()
    %86 = vector.extract_strided_slice %42 {offsets = [0, 0, 16], sizes = [8, 16, 8], strides = [1, 1, 1]} : vector<8x16x32xf32> to vector<8x16x8xf32>
    %87 = arith.truncf %86 : vector<8x16x8xf32> to vector<8x16x8xbf16>
    %88 = vector.extract_strided_slice %49 {offsets = [0, 0, 16], sizes = [8, 16, 8], strides = [1, 1, 1]} : vector<8x16x32xf32> to vector<8x16x8xf32>
    %89 = arith.truncf %88 : vector<8x16x8xf32> to vector<8x16x8xbf16>
    "tpu.trace_start"() <{level = 10 : i32, message = "bnd,bmd->bnm"}> : () -> ()
    %cst_22 = arith.constant dense<0.000000e+00> : vector<8x16x16xf32>
    %90 = tpu.matmul %87, %89, %cst_22 {dimension_numbers = #tpu.dot_dimension_numbers<[2], [2], [1], [1], [0, 0, 0, 1, 1, 1], [0], [0]>} : vector<8x16x8xbf16>, vector<8x16x8xbf16>, vector<8x16x16xf32> -> vector<8x16x16xf32>
    "tpu.trace_stop"() : () -> ()
    %cst_23 = arith.constant dense<0xFF800000> : vector<8x16xf32>
    %91 = vector.multi_reduction <maximumf>, %90, %cst_23 [2] : vector<8x16x16xf32> to vector<8x16xf32>
    %92 = vector.shape_cast %91 : vector<8x16xf32> to vector<8x16x1xf32>
    %93 = vector.broadcast %92 : vector<8x16x1xf32> to vector<8x16x16xf32>
    %94 = arith.subf %90, %93 : vector<8x16x16xf32>
    %95 = math.exp %94 : vector<8x16x16xf32>
    %cst_24 = arith.constant dense<0.000000e+00> : vector<8x16xf32>
    %96 = vector.multi_reduction <add>, %95, %cst_24 [2] : vector<8x16x16xf32> to vector<8x16xf32>
    %97 = vector.shape_cast %96 : vector<8x16xf32> to vector<8x16x1xf32>
    %98 = vector.broadcast %97 : vector<8x16x1xf32> to vector<8x16x16xf32>
    %99 = arith.divf %95, %98 : vector<8x16x16xf32>
    %100 = arith.truncf %99 : vector<8x16x16xf32> to vector<8x16x16xbf16>
    %101 = vector.extract_strided_slice %22 {offsets = [0, 0, 16], sizes = [8, 16, 8], strides = [1, 1, 1]} : vector<8x16x32xf32> to vector<8x16x8xf32>
    %102 = arith.truncf %101 : vector<8x16x8xf32> to vector<8x16x8xbf16>
    "tpu.trace_start"() <{level = 10 : i32, message = "bnm,bmd->bnd"}> : () -> ()
    %cst_25 = arith.constant dense<0.000000e+00> : vector<8x16x8xf32>
    %103 = tpu.matmul %100, %102, %cst_25 {dimension_numbers = #tpu.dot_dimension_numbers<[2], [1], [1], [2], [0, 0, 0, 1, 1, 2], [0], [0]>} : vector<8x16x16xbf16>, vector<8x16x8xbf16>, vector<8x16x8xf32> -> vector<8x16x8xf32>
    "tpu.trace_stop"() : () -> ()
    %104 = vector.extract_strided_slice %42 {offsets = [0, 0, 24], sizes = [8, 16, 8], strides = [1, 1, 1]} : vector<8x16x32xf32> to vector<8x16x8xf32>
    %105 = arith.truncf %104 : vector<8x16x8xf32> to vector<8x16x8xbf16>
    %106 = vector.extract_strided_slice %49 {offsets = [0, 0, 24], sizes = [8, 16, 8], strides = [1, 1, 1]} : vector<8x16x32xf32> to vector<8x16x8xf32>
    %107 = arith.truncf %106 : vector<8x16x8xf32> to vector<8x16x8xbf16>
    "tpu.trace_start"() <{level = 10 : i32, message = "bnd,bmd->bnm"}> : () -> ()
    %cst_26 = arith.constant dense<0.000000e+00> : vector<8x16x16xf32>
    %108 = tpu.matmul %105, %107, %cst_26 {dimension_numbers = #tpu.dot_dimension_numbers<[2], [2], [1], [1], [0, 0, 0, 1, 1, 1], [0], [0]>} : vector<8x16x8xbf16>, vector<8x16x8xbf16>, vector<8x16x16xf32> -> vector<8x16x16xf32>
    "tpu.trace_stop"() : () -> ()
    %cst_27 = arith.constant dense<0xFF800000> : vector<8x16xf32>
    %109 = vector.multi_reduction <maximumf>, %108, %cst_27 [2] : vector<8x16x16xf32> to vector<8x16xf32>
    %110 = vector.shape_cast %109 : vector<8x16xf32> to vector<8x16x1xf32>
    %111 = vector.broadcast %110 : vector<8x16x1xf32> to vector<8x16x16xf32>
    %112 = arith.subf %108, %111 : vector<8x16x16xf32>
    %113 = math.exp %112 : vector<8x16x16xf32>
    %cst_28 = arith.constant dense<0.000000e+00> : vector<8x16xf32>
    %114 = vector.multi_reduction <add>, %113, %cst_28 [2] : vector<8x16x16xf32> to vector<8x16xf32>
    %115 = vector.shape_cast %114 : vector<8x16xf32> to vector<8x16x1xf32>
    %116 = vector.broadcast %115 : vector<8x16x1xf32> to vector<8x16x16xf32>
    %117 = arith.divf %113, %116 : vector<8x16x16xf32>
    %118 = arith.truncf %117 : vector<8x16x16xf32> to vector<8x16x16xbf16>
    %119 = vector.extract_strided_slice %22 {offsets = [0, 0, 24], sizes = [8, 16, 8], strides = [1, 1, 1]} : vector<8x16x32xf32> to vector<8x16x8xf32>
    %120 = arith.truncf %119 : vector<8x16x8xf32> to vector<8x16x8xbf16>
    "tpu.trace_start"() <{level = 10 : i32, message = "bnm,bmd->bnd"}> : () -> ()
    %cst_29 = arith.constant dense<0.000000e+00> : vector<8x16x8xf32>
    %121 = tpu.matmul %118, %120, %cst_29 {dimension_numbers = #tpu.dot_dimension_numbers<[2], [1], [1], [2], [0, 0, 0, 1, 1, 2], [0], [0]>} : vector<8x16x16xbf16>, vector<8x16x8xbf16>, vector<8x16x8xf32> -> vector<8x16x8xf32>
    "tpu.trace_stop"() : () -> ()
    %122 = tpu.concatenate %67, %85, %103, %121 in 2 : vector<8x16x8xf32>, vector<8x16x8xf32>, vector<8x16x8xf32>, vector<8x16x8xf32> -> vector<8x16x32xf32>
    %123 = vector.shape_cast %122 : vector<8x16x32xf32> to vector<128x32xf32>
    %124 = arith.mulf %123, %35 : vector<128x32xf32>
    %125 = arith.truncf %124 : vector<128x32xf32> to vector<128x32xbf16>
    %c0_30 = arith.constant 0 : index
    %c0_31 = arith.constant 0 : index
    %126 = vector.load %arg7[%c0_30, %c0_31] : memref<32x32xbf16, #tpu.memory_space<vmem>>, vector<32x32xbf16>
    %cst_32 = arith.constant dense<0.000000e+00> : vector<128x32xf32>
    %127 = tpu.matmul %125, %126, %cst_32 {dimension_numbers = #tpu.dot_dimension_numbers<[1], [0], [0], [1], [0, 0, 1, 1], [], []>} : vector<128x32xbf16>, vector<32x32xbf16>, vector<128x32xf32> -> vector<128x32xf32>
    %128 = arith.addf %0, %127 : vector<128x32xf32>
    %c0_33 = arith.constant 0 : index
    %c0_34 = arith.constant 0 : index
    %129 = vector.load %arg8[%c0_33, %c0_34] : memref<1x32xf32, #tpu.memory_space<vmem>>, vector<1x32xf32>
    %130 = arith.mulf %128, %128 : vector<128x32xf32>
    %cst_35 = arith.constant dense<0.000000e+00> : vector<128xf32>
    %131 = vector.multi_reduction <add>, %130, %cst_35 [1] : vector<128x32xf32> to vector<128xf32>
    %132 = vector.shape_cast %131 : vector<128xf32> to vector<128x1xf32>
    %cst_36 = arith.constant 1.000000e-24 : f32
    %133 = vector.broadcast %cst_36 : f32 to vector<128x1xf32>
    %134 = arith.maximumf %132, %133 : vector<128x1xf32>
    %135 = math.rsqrt %134 : vector<128x1xf32>
    %136 = vector.broadcast %135 : vector<128x1xf32> to vector<128x32xf32>
    %137 = arith.mulf %128, %136 : vector<128x32xf32>
    %138 = vector.broadcast %129 : vector<1x32xf32> to vector<128x32xf32>
    %139 = arith.mulf %137, %138 : vector<128x32xf32>
    %140 = arith.truncf %139 : vector<128x32xf32> to vector<128x32xbf16>
    %c0_37 = arith.constant 0 : index
    %c0_38 = arith.constant 0 : index
    %141 = vector.load %arg9[%c0_37, %c0_38] : memref<32x128xbf16, #tpu.memory_space<vmem>>, vector<32x128xbf16>
    %cst_39 = arith.constant dense<0.000000e+00> : vector<128x128xf32>
    %142 = tpu.matmul %140, %141, %cst_39 {dimension_numbers = #tpu.dot_dimension_numbers<[1], [0], [0], [1], [0, 0, 1, 1], [], []>} : vector<128x32xbf16>, vector<32x128xbf16>, vector<128x128xf32> -> vector<128x128xf32>
    %c0_40 = arith.constant 0 : index
    %c0_41 = arith.constant 0 : index
    %143 = vector.load %arg10[%c0_40, %c0_41] : memref<1x128xf32, #tpu.memory_space<vmem>>, vector<1x128xf32>
    %144 = vector.broadcast %143 : vector<1x128xf32> to vector<128x128xf32>
    %145 = arith.addf %142, %144 : vector<128x128xf32>
    %cst_42 = arith.constant 5.000000e-01 : f32
    %146 = vector.broadcast %cst_42 : f32 to vector<128x128xf32>
    %147 = arith.mulf %146, %145 : vector<128x128xf32>
    %cst_43 = arith.constant 0.707106769 : f32
    %148 = vector.broadcast %cst_43 : f32 to vector<128x128xf32>
    %149 = arith.mulf %145, %148 : vector<128x128xf32>
    %150 = math.absf %149 : vector<128x128xf32>
    %cst_44 = arith.constant 0.327591091 : f32
    %151 = vector.broadcast %cst_44 : f32 to vector<128x128xf32>
    %152 = arith.mulf %151, %150 : vector<128x128xf32>
    %cst_45 = arith.constant 1.000000e+00 : f32
    %153 = vector.broadcast %cst_45 : f32 to vector<128x128xf32>
    %154 = arith.addf %153, %152 : vector<128x128xf32>
    %cst_46 = arith.constant 1.000000e+00 : f32
    %155 = vector.broadcast %cst_46 : f32 to vector<128x128xf32>
    %156 = arith.divf %155, %154 : vector<128x128xf32>
    %cst_47 = arith.constant 1.06140542 : f32
    %157 = vector.broadcast %cst_47 : f32 to vector<128x128xf32>
    %158 = arith.mulf %157, %156 : vector<128x128xf32>
    %cst_48 = arith.constant -1.45315206 : f32
    %159 = vector.broadcast %cst_48 : f32 to vector<128x128xf32>
    %160 = arith.addf %158, %159 : vector<128x128xf32>
    %161 = arith.mulf %160, %156 : vector<128x128xf32>
    %cst_49 = arith.constant 1.42141378 : f32
    %162 = vector.broadcast %cst_49 : f32 to vector<128x128xf32>
    %163 = arith.addf %161, %162 : vector<128x128xf32>
    %164 = arith.mulf %163, %156 : vector<128x128xf32>
    %cst_50 = arith.constant -0.284496725 : f32
    %165 = vector.broadcast %cst_50 : f32 to vector<128x128xf32>
    %166 = arith.addf %164, %165 : vector<128x128xf32>
    %167 = arith.mulf %166, %156 : vector<128x128xf32>
    %cst_51 = arith.constant 0.254829586 : f32
    %168 = vector.broadcast %cst_51 : f32 to vector<128x128xf32>
    %169 = arith.addf %167, %168 : vector<128x128xf32>
    %170 = arith.mulf %169, %156 : vector<128x128xf32>
    %cst_52 = arith.constant 0.000000e+00 : f32
    %171 = vector.broadcast %cst_52 : f32 to vector<128x128xf32>
    %172 = arith.subf %171, %150 : vector<128x128xf32>
    %173 = arith.mulf %172, %150 : vector<128x128xf32>
    %174 = math.exp %173 : vector<128x128xf32>
    %175 = arith.mulf %170, %174 : vector<128x128xf32>
    %cst_53 = arith.constant 1.000000e+00 : f32
    %176 = vector.broadcast %cst_53 : f32 to vector<128x128xf32>
    %177 = arith.subf %176, %175 : vector<128x128xf32>
    %cst_54 = arith.constant 0.000000e+00 : f32
    %178 = vector.broadcast %cst_54 : f32 to vector<128x128xf32>
    %179 = arith.cmpf oge, %149, %178 : vector<128x128xf32>
    %cst_55 = arith.constant 0.000000e+00 : f32
    %180 = vector.broadcast %cst_55 : f32 to vector<128x128xf32>
    %181 = arith.subf %180, %177 : vector<128x128xf32>
    %182 = arith.select %179, %177, %181 : vector<128x128xi1>, vector<128x128xf32>
    %cst_56 = arith.constant 1.000000e+00 : f32
    %183 = vector.broadcast %cst_56 : f32 to vector<128x128xf32>
    %184 = arith.addf %183, %182 : vector<128x128xf32>
    %185 = arith.mulf %147, %184 : vector<128x128xf32>
    %186 = arith.truncf %185 : vector<128x128xf32> to vector<128x128xbf16>
    %c0_57 = arith.constant 0 : index
    %c0_58 = arith.constant 0 : index
    %187 = vector.load %arg11[%c0_57, %c0_58] : memref<128x32xbf16, #tpu.memory_space<vmem>>, vector<128x32xbf16>
    %cst_59 = arith.constant dense<0.000000e+00> : vector<128x32xf32>
    %188 = tpu.matmul %186, %187, %cst_59 {dimension_numbers = #tpu.dot_dimension_numbers<[1], [0], [0], [1], [0, 0, 1, 1], [], []>} : vector<128x128xbf16>, vector<128x32xbf16>, vector<128x32xf32> -> vector<128x32xf32>
    %c0_60 = arith.constant 0 : index
    %c0_61 = arith.constant 0 : index
    %189 = vector.load %arg12[%c0_60, %c0_61] : memref<1x32xf32, #tpu.memory_space<vmem>>, vector<1x32xf32>
    %190 = vector.broadcast %189 : vector<1x32xf32> to vector<128x32xf32>
    %191 = arith.addf %188, %190 : vector<128x32xf32>
    %192 = arith.addf %128, %191 : vector<128x32xf32>
    %c0_62 = arith.constant 0 : index
    %c0_63 = arith.constant 0 : index
    %193 = vector.load %arg13[%c0_62, %c0_63] : memref<128x32xf32, #tpu.memory_space<vmem>>, vector<128x32xf32>
    tpu.vector_store %arg13[%c0_62, %c0_63], %192 {strides = array<i32>} : memref<128x32xf32, #tpu.memory_space<vmem>>, vector<128x32xf32>,
    return
  }
  func.func @transform_0(%arg0: i32) -> (i32, i32) {
    %c0_i32 = arith.constant 0 : i32
    %c0_i32_0 = arith.constant 0 : i32
    return %arg0, %c0_i32 : i32, i32
  }
  func.func @transform_1(%arg0: i32) -> (i32, i32) {
    %c0_i32 = arith.constant 0 : i32
    %c0_i32_0 = arith.constant 0 : i32
    %c0_i32_1 = arith.constant 0 : i32
    return %c0_i32, %c0_i32_0 : i32, i32
  }
  func.func @transform_2(%arg0: i32) -> (i32, i32) {
    %c0_i32 = arith.constant 0 : i32
    %c0_i32_0 = arith.constant 0 : i32
    %c0_i32_1 = arith.constant 0 : i32
    return %c0_i32, %c0_i32_0 : i32, i32
  }
  func.func @transform_3(%arg0: i32) -> (i32, i32) {
    %c0_i32 = arith.constant 0 : i32
    %c0_i32_0 = arith.constant 0 : i32
    %c0_i32_1 = arith.constant 0 : i32
    return %c0_i32, %c0_i32_0 : i32, i32
  }
  func.func @transform_4(%arg0: i32) -> (i32, i32) {
    %c0_i32 = arith.constant 0 : i32
    %c0_i32_0 = arith.constant 0 : i32
    %c0_i32_1 = arith.constant 0 : i32
    return %c0_i32, %c0_i32_0 : i32, i32
  }
  func.func @transform_5(%arg0: i32) -> (i32, i32) {
    %c0_i32 = arith.constant 0 : i32
    %c0_i32_0 = arith.constant 0 : i32
    %c0_i32_1 = arith.constant 0 : i32
    return %c0_i32, %c0_i32_0 : i32, i32
  }
  func.func @transform_6(%arg0: i32) -> (i32, i32) {
    %c0_i32 = arith.constant 0 : i32
    %c0_i32_0 = arith.constant 0 : i32
    %c0_i32_1 = arith.constant 0 : i32
    return %c0_i32, %c0_i32_0 : i32, i32
  }
  func.func @transform_7(%arg0: i32) -> (i32, i32) {
    %c0_i32 = arith.constant 0 : i32
    %c0_i32_0 = arith.constant 0 : i32
    %c0_i32_1 = arith.constant 0 : i32
    return %c0_i32, %c0_i32_0 : i32, i32
  }
  func.func @transform_8(%arg0: i32) -> (i32, i32) {
    %c0_i32 = arith.constant 0 : i32
    %c0_i32_0 = arith.constant 0 : i32
    %c0_i32_1 = arith.constant 0 : i32
    return %c0_i32, %c0_i32_0 : i32, i32
  }
  func.func @transform_9(%arg0: i32) -> (i32, i32) {
    %c0_i32 = arith.constant 0 : i32
    %c0_i32_0 = arith.constant 0 : i32
    %c0_i32_1 = arith.constant 0 : i32
    return %c0_i32, %c0_i32_0 : i32, i32
  }
  func.func @transform_10(%arg0: i32) -> (i32, i32) {
    %c0_i32 = arith.constant 0 : i32
    %c0_i32_0 = arith.constant 0 : i32
    %c0_i32_1 = arith.constant 0 : i32
    return %c0_i32, %c0_i32_0 : i32, i32
  }
  func.func @transform_11(%arg0: i32) -> (i32, i32) {
    %c0_i32 = arith.constant 0 : i32
    %c0_i32_0 = arith.constant 0 : i32
    %c0_i32_1 = arith.constant 0 : i32
    return %c0_i32, %c0_i32_0 : i32, i32
  }
  func.func @transform_12(%arg0: i32) -> (i32, i32) {
    %c0_i32 = arith.constant 0 : i32
    %c0_i32_0 = arith.constant 0 : i32
    return %arg0, %c0_i32 : i32, i32
  }
}

</mosaic_0001>

<llo_original>
// kernel: tpu_custom_call.1
$region0: #{tpu_custom_call.1}
  #allocation0 [shape = 'u32[]', space=smem, size = 0x4, offset = 0x4, fixed_abs, tag = 'smem constant byte address 0x4 - core index']
  #allocation1 [shape = 'u32[72,128]{1,0:T(1,128)}', space=vmem, size = 0x9000, scoped, tag = 'internal scratch']
  %s0 = inlined_call_operand.vmem [shape: f32[256,32], index: 0, kind: input, shape index: {}]
  %s1 = inlined_call_operand.vmem [shape: f32[16,32], index: 1, kind: input, shape index: {}]
  %s2 = inlined_call_operand.vmem [shape: f32[16,32], index: 2, kind: input, shape index: {}]
  %s3 = inlined_call_operand.vmem [shape: f32[1,32], index: 3, kind: input, shape index: {}]
  %s4 = inlined_call_operand.vmem [shape: bf16[32,192], index: 4, kind: input, shape index: {}]
  %s5 = inlined_call_operand.vmem [shape: f32[1,32], index: 5, kind: input, shape index: {}]
  %s6 = inlined_call_operand.vmem [shape: bf16[32,32], index: 6, kind: input, shape index: {}]
  %s7 = inlined_call_operand.vmem [shape: f32[1,32], index: 7, kind: input, shape index: {}]
  %s8 = inlined_call_operand.vmem [shape: bf16[32,128], index: 8, kind: input, shape index: {}]
  %s9 = inlined_call_operand.vmem [shape: f32[1,128], index: 9, kind: input, shape index: {}]
  %s10 = inlined_call_operand.vmem [shape: bf16[128,32], index: 10, kind: input, shape index: {}]
  %s11 = inlined_call_operand.vmem [shape: f32[1,32], index: 11, kind: input, shape index: {}]
  %s12 = inlined_call_operand.vmem [shape: f32[256,32], index: 12, kind: output, shape index: {}]
  %s13 = sld [smem:[#allocation0]]
  $region81: #{tpu_custom_call.1} parent=0
    _
  %s15 = ssub.s32 1, %s13
  %s16 = scalar_select 0, %s15, %s13
  loop: start=0, step=1, limit=4
  $region2: #{tpu_custom_call.1} parent=0 // loop_pre_header
    _
  $region3: #{tpu_custom_call.1} parent=0 // loop_header
    %s18 = sphi 0, %s22
    %p19 = scmp.ge.s32.totalorder %s18, 4
    %s28 = sphi 0, %s30
    %s31 = sphi 0, %s28
    %s32 = sphi 0, %s31
    %s48 = sphi 0, %s32
    %s52 = sphi 0, %s52
    %s54 = sphi 0, %s52
    %s55 = sphi 0, %s54
    %s69 = sphi 0, %s55
    %s73 = sphi 0, %s73
    %s75 = sphi 0, %s73
    %s76 = sphi 0, %s75
    %s90 = sphi 0, %s76
    %s94 = sphi 0, %s94
    %s96 = sphi 0, %s94
    %s97 = sphi 0, %s96
    %s111 = sphi 0, %s97
    %s115 = sphi 0, %s115
    %s117 = sphi 0, %s115
    %s118 = sphi 0, %s117
    %s132 = sphi 0, %s118
    %s136 = sphi 0, %s136
    %s138 = sphi 0, %s136
    %s139 = sphi 0, %s138
    %s153 = sphi 0, %s139
    %s157 = sphi 0, %s157
    %s159 = sphi 0, %s157
    %s160 = sphi 0, %s159
    %s174 = sphi 0, %s160
    %s178 = sphi 0, %s178
    %s180 = sphi 0, %s178
    %s181 = sphi 0, %s180
    %s195 = sphi 0, %s181
    %s199 = sphi 0, %s199
    %s201 = sphi 0, %s199
    %s202 = sphi 0, %s201
    %s216 = sphi 0, %s202
    %s220 = sphi 0, %s220
    %s222 = sphi 0, %s220
    %s223 = sphi 0, %s222
    %s237 = sphi 0, %s223
    %s241 = sphi 0, %s241
    %s243 = sphi 0, %s241
    %s244 = sphi 0, %s243
    %s258 = sphi 0, %s244
    %s262 = sphi 0, %s262
    %s264 = sphi 0, %s262
    %s265 = sphi 0, %s264
    %s279 = sphi 0, %s265
    %s285 = sphi 0, %s287
    %s288 = sphi 0, %s285
    %s289 = sphi 0, %s288
    %s305 = sphi 0, %s289
  $region4: #{tpu_custom_call.1} parent=0 // loop_header_branch
    %21 = sbr.rel (%p19) target = $region8
  $region5: #{tpu_custom_call.1} parent=0 // loop_body
    %s23 = ssub.s32 %s18, 1
    %s24 = ssub.s32 %s18, 2
    %s25 = sadd.s32 %s18, 1
    %s26 = ssub.s32 %s18, %s25
    %p27 = scmp.eq.s32.totalorder %s26, 0
    %s29 = sadd.s32 %s28, 1
    %s30 = scalar_select %p27, %s28, %s29
    %p33 = pneg %p27
    %p34 = scmp.eq.s32.totalorder %s18, 1
    %p35 = por %p33, %p34
    %p36 = scmp.ne.s32.totalorder %s28, %s31
    %p37 = scmp.eq.s32.totalorder %s18, 0
    %p38 = por %p36, %p37
    %p39 = scmp.ne.s32.totalorder %s28, %s31
    %p40 = scmp.eq.s32.totalorder %s23, 1
    %p41 = por %p39, %p40
    %p42 = scmp.ne.s32.totalorder %s31, %s32
    %p43 = scmp.eq.s32.totalorder %s23, 0
    %p44 = por %p42, %p43
    %p45 = scmp.ne.s32.totalorder %s31, %s32
    %p46 = scmp.eq.s32.totalorder %s24, 1
    %p47 = por %p45, %p46
    %p49 = scmp.ne.s32.totalorder %s32, %s48
    %p50 = scmp.eq.s32.totalorder %s24, 0
    %p51 = por %p49, %p50
    %s53 = sadd.s32 %s52, 1
    %p56 = scmp.eq.s32.totalorder %s18, 1
    %p57 = scmp.ne.s32.totalorder %s52, %s54
    %p58 = scmp.eq.s32.totalorder %s18, 0
    %p59 = por %p57, %p58
    %p60 = scmp.ne.s32.totalorder %s52, %s54
    %p61 = scmp.eq.s32.totalorder %s23, 1
    %p62 = por %p60, %p61
    %p63 = scmp.ne.s32.totalorder %s54, %s55
    %p64 = scmp.eq.s32.totalorder %s23, 0
    %p65 = por %p63, %p64
    %p66 = scmp.ne.s32.totalorder %s54, %s55
    %p67 = scmp.eq.s32.totalorder %s24, 1
    %p68 = por %p66, %p67
    %p70 = scmp.ne.s32.totalorder %s55, %s69
    %p71 = scmp.eq.s32.totalorder %s24, 0
    %p72 = por %p70, %p71
    %s74 = sadd.s32 %s73, 1
    %p77 = scmp.eq.s32.totalorder %s18, 1
    %p78 = scmp.ne.s32.totalorder %s73, %s75
    %p79 = scmp.eq.s32.totalorder %s18, 0
    %p80 = por %p78, %p79
    %p81 = scmp.ne.s32.totalorder %s73, %s75
    %p82 = scmp.eq.s32.totalorder %s23, 1
    %p83 = por %p81, %p82
    %p84 = scmp.ne.s32.totalorder %s75, %s76
    %p85 = scmp.eq.s32.totalorder %s23, 0
    %p86 = por %p84, %p85
    %p87 = scmp.ne.s32.totalorder %s75, %s76
    %p88 = scmp.eq.s32.totalorder %s24, 1
    %p89 = por %p87, %p88
    %p91 = scmp.ne.s32.totalorder %s76, %s90
    %p92 = scmp.eq.s32.totalorder %s24, 0
    %p93 = por %p91, %p92
    %s95 = sadd.s32 %s94, 1
    %p98 = scmp.eq.s32.totalorder %s18, 1
    %p99 = scmp.ne.s32.totalorder %s94, %s96
    %p100 = scmp.eq.s32.totalorder %s18, 0
    %p101 = por %p99, %p100
    %p102 = scmp.ne.s32.totalorder %s94, %s96
    %p103 = scmp.eq.s32.totalorder %s23, 1
    %p104 = por %p102, %p103
    %p105 = scmp.ne.s32.totalorder %s96, %s97
    %p106 = scmp.eq.s32.totalorder %s23, 0
    %p107 = por %p105, %p106
    %p108 = scmp.ne.s32.totalorder %s96, %s97
    %p109 = scmp.eq.s32.totalorder %s24, 1
    %p110 = por %p108, %p109
    %p112 = scmp.ne.s32.totalorder %s97, %s111
    %p113 = scmp.eq.s32.totalorder %s24, 0
    %p114 = por %p112, %p113
    %s116 = sadd.s32 %s115, 1
    %p119 = scmp.eq.s32.totalorder %s18, 1
    %p120 = scmp.ne.s32.totalorder %s115, %s117
    %p121 = scmp.eq.s32.totalorder %s18, 0
    %p122 = por %p120, %p121
    %p123 = scmp.ne.s32.totalorder %s115, %s117
    %p124 = scmp.eq.s32.totalorder %s23, 1
    %p125 = por %p123, %p124
    %p126 = scmp.ne.s32.totalorder %s117, %s118
    %p127 = scmp.eq.s32.totalorder %s23, 0
    %p128 = por %p126, %p127
    %p129 = scmp.ne.s32.totalorder %s117, %s118
    %p130 = scmp.eq.s32.totalorder %s24, 1
    %p131 = por %p129, %p130
    %p133 = scmp.ne.s32.totalorder %s118, %s132
    %p134 = scmp.eq.s32.totalorder %s24, 0
    %p135 = por %p133, %p134
    %s137 = sadd.s32 %s136, 1
    %p140 = scmp.eq.s32.totalorder %s18, 1
    %p141 = scmp.ne.s32.totalorder %s136, %s138
    %p142 = scmp.eq.s32.totalorder %s18, 0
    %p143 = por %p141, %p142
    %p144 = scmp.ne.s32.totalorder %s136, %s138
    %p145 = scmp.eq.s32.totalorder %s23, 1
    %p146 = por %p144, %p145
    %p147 = scmp.ne.s32.totalorder %s138, %s139
    %p148 = scmp.eq.s32.totalorder %s23, 0
    %p149 = por %p147, %p148
    %p150 = scmp.ne.s32.totalorder %s138, %s139
    %p151 = scmp.eq.s32.totalorder %s24, 1
    %p152 = por %p150, %p151
    %p154 = scmp.ne.s32.totalorder %s139, %s153
    %p155 = scmp.eq.s32.totalorder %s24, 0
    %p156 = por %p154, %p155
    %s158 = sadd.s32 %s157, 1
    %p161 = scmp.eq.s32.totalorder %s18, 1
    %p162 = scmp.ne.s32.totalorder %s157, %s159
    %p163 = scmp.eq.s32.totalorder %s18, 0
    %p164 = por %p162, %p163
    %p165 = scmp.ne.s32.totalorder %s157, %s159
    %p166 = scmp.eq.s32.totalorder %s23, 1
    %p167 = por %p165, %p166
    %p168 = scmp.ne.s32.totalorder %s159, %s160
    %p169 = scmp.eq.s32.totalorder %s23, 0
    %p170 = por %p168, %p169
    %p171 = scmp.ne.s32.totalorder %s159, %s160
    %p172 = scmp.eq.s32.totalorder %s24, 1
    %p173 = por %p171, %p172
    %p175 = scmp.ne.s32.totalorder %s160, %s174
    %p176 = scmp.eq.s32.totalorder %s24, 0
    %p177 = por %p175, %p176
    %s179 = sadd.s32 %s178, 1
    %p182 = scmp.eq.s32.totalorder %s18, 1
    %p183 = scmp.ne.s32.totalorder %s178, %s180
    %p184 = scmp.eq.s32.totalorder %s18, 0
    %p185 = por %p183, %p184
    %p186 = scmp.ne.s32.totalorder %s178, %s180
    %p187 = scmp.eq.s32.totalorder %s23, 1
    %p188 = por %p186, %p187
    %p189 = scmp.ne.s32.totalorder %s180, %s181
    %p190 = scmp.eq.s32.totalorder %s23, 0
    %p191 = por %p189, %p190
    %p192 = scmp.ne.s32.totalorder %s180, %s181
    %p193 = scmp.eq.s32.totalorder %s24, 1
    %p194 = por %p192, %p193
    %p196 = scmp.ne.s32.totalorder %s181, %s195
    %p197 = scmp.eq.s32.totalorder %s24, 0
    %p198 = por %p196, %p197
    %s200 = sadd.s32 %s199, 1
    %p203 = scmp.eq.s32.totalorder %s18, 1
    %p204 = scmp.ne.s32.totalorder %s199, %s201
    %p205 = scmp.eq.s32.totalorder %s18, 0
    %p206 = por %p204, %p205
    %p207 = scmp.ne.s32.totalorder %s199, %s201
    %p208 = scmp.eq.s32.totalorder %s23, 1
    %p209 = por %p207, %p208
    %p210 = scmp.ne.s32.totalorder %s201, %s202
    %p211 = scmp.eq.s32.totalorder %s23, 0
    %p212 = por %p210, %p211
    %p213 = scmp.ne.s32.totalorder %s201, %s202
    %p214 = scmp.eq.s32.totalorder %s24, 1
    %p215 = por %p213, %p214
    %p217 = scmp.ne.s32.totalorder %s202, %s216
    %p218 = scmp.eq.s32.totalorder %s24, 0
    %p219 = por %p217, %p218
    %s221 = sadd.s32 %s220, 1
    %p224 = scmp.eq.s32.totalorder %s18, 1
    %p225 = scmp.ne.s32.totalorder %s220, %s222
    %p226 = scmp.eq.s32.totalorder %s18, 0
    %p227 = por %p225, %p226
    %p228 = scmp.ne.s32.totalorder %s220, %s222
    %p229 = scmp.eq.s32.totalorder %s23, 1
    %p230 = por %p228, %p229
    %p231 = scmp.ne.s32.totalorder %s222, %s223
    %p232 = scmp.eq.s32.totalorder %s23, 0
    %p233 = por %p231, %p232
    %p234 = scmp.ne.s32.totalorder %s222, %s223
    %p235 = scmp.eq.s32.totalorder %s24, 1
    %p236 = por %p234, %p235
    %p238 = scmp.ne.s32.totalorder %s223, %s237
    %p239 = scmp.eq.s32.totalorder %s24, 0
    %p240 = por %p238, %p239
    %s242 = sadd.s32 %s241, 1
    %p245 = scmp.eq.s32.totalorder %s18, 1
    %p246 = scmp.ne.s32.totalorder %s241, %s243
    %p247 = scmp.eq.s32.totalorder %s18, 0
    %p248 = por %p246, %p247
    %p249 = scmp.ne.s32.totalorder %s241, %s243
    %p250 = scmp.eq.s32.totalorder %s23, 1
    %p251 = por %p249, %p250
    %p252 = scmp.ne.s32.totalorder %s243, %s244
    %p253 = scmp.eq.s32.totalorder %s23, 0
    %p254 = por %p252, %p253
    %p255 = scmp.ne.s32.totalorder %s243, %s244
    %p256 = scmp.eq.s32.totalorder %s24, 1
    %p257 = por %p255, %p256
    %p259 = scmp.ne.s32.totalorder %s244, %s258
    %p260 = scmp.eq.s32.totalorder %s24, 0
    %p261 = por %p259, %p260
    %s263 = sadd.s32 %s262, 1
    %p266 = scmp.eq.s32.totalorder %s18, 1
    %p267 = scmp.ne.s32.totalorder %s262, %s264
    %p268 = scmp.eq.s32.totalorder %s18, 0
    %p269 = por %p267, %p268
    %p270 = scmp.ne.s32.totalorder %s262, %s264
    %p271 = scmp.eq.s32.totalorder %s23, 1
    %p272 = por %p270, %p271
    %p273 = scmp.ne.s32.totalorder %s264, %s265
    %p274 = scmp.eq.s32.totalorder %s23, 0
    %p275 = por %p273, %p274
    %p276 = scmp.ne.s32.totalorder %s264, %s265
    %p277 = scmp.eq.s32.totalorder %s24, 1
    %p278 = por %p276, %p277
    %p280 = scmp.ne.s32.totalorder %s265, %s279
    %p281 = scmp.eq.s32.totalorder %s24, 0
    %p282 = por %p280, %p281
    %s283 = ssub.s32 %s18, %s25
    %p284 = scmp.eq.s32.totalorder %s283, 0
    %s286 = sadd.s32 %s285, 1
    %s287 = scalar_select %p284, %s285, %s286
    %p290 = pneg %p284
    %p291 = scmp.eq.s32.totalorder %s18, 1
    %p292 = por %p290, %p291
    %p293 = scmp.ne.s32.totalorder %s285, %s288
    %p294 = scmp.eq.s32.totalorder %s18, 0
    %p295 = por %p293, %p294
    %p296 = scmp.ne.s32.totalorder %s285, %s288
    %p297 = scmp.eq.s32.totalorder %s23, 1
    %p298 = por %p296, %p297
    %p299 = scmp.ne.s32.totalorder %s288, %s289
    %p300 = scmp.eq.s32.totalorder %s23, 0
    %p301 = por %p299, %p300
    %p302 = scmp.ne.s32.totalorder %s288, %s289
    %p303 = scmp.eq.s32.totalorder %s24, 1
    %p304 = por %p302, %p303
    %p306 = scmp.ne.s32.totalorder %s289, %s305
    %p307 = scmp.eq.s32.totalorder %s24, 0
    %p308 = por %p306, %p307
    %p309 = scmp.le.s32.totalorder 1, %s18
    %p310 = scmp.lt.s32.totalorder %s18, 3
    %p311 = pnand %p309, %p310
    %p312 = pneg %p311
    // Predicated region
    $region9: #{tpu_custom_call.1} parent=5 // pred_check
      _
    $region10: #{tpu_custom_call.1} parent=5 // pred_check_branch
      %314 = sbr.rel (%p311) target = $region12
    $region11: #{tpu_custom_call.1} parent=5 // pred_region
      %s315 = ssub.s32 %s18, 1
      // Predicated region
      $region13: #{tpu_custom_call.1} parent=11 // pred_check
        %p316 = pneg %p65
      $region14: #{tpu_custom_call.1} parent=11 // pred_check_branch
        %318 = sbr.rel (%p316) target = $region16
      $region15: #{tpu_custom_call.1} parent=11 // pred_region
        _
      $region16: #{tpu_custom_call.1} parent=11 // pred_fallthru
        _
      // Predicated region
      $region17: #{tpu_custom_call.1} parent=11 // pred_check
        %p319 = pneg %p86
      $region18: #{tpu_custom_call.1} parent=11 // pred_check_branch
        %321 = sbr.rel (%p319) target = $region20
      $region19: #{tpu_custom_call.1} parent=11 // pred_region
        _
      $region20: #{tpu_custom_call.1} parent=11 // pred_fallthru
        _
      // Predicated region
      $region21: #{tpu_custom_call.1} parent=11 // pred_check
        %p322 = pneg %p107
      $region22: #{tpu_custom_call.1} parent=11 // pred_check_branch
        %324 = sbr.rel (%p322) target = $region24
      $region23: #{tpu_custom_call.1} parent=11 // pred_region
        _
      $region24: #{tpu_custom_call.1} parent=11 // pred_fallthru
        _
      // Predicated region
      $region25: #{tpu_custom_call.1} parent=11 // pred_check
        %p325 = pneg %p128
      $region26: #{tpu_custom_call.1} parent=11 // pred_check_branch
        %327 = sbr.rel (%p325) target = $region28
      $region27: #{tpu_custom_call.1} parent=11 // pred_region
        _
      $region28: #{tpu_custom_call.1} parent=11 // pred_fallthru
        _
      // Predicated region
      $region29: #{tpu_custom_call.1} parent=11 // pred_check
        %p328 = pneg %p149
      $region30: #{tpu_custom_call.1} parent=11 // pred_check_branch
        %330 = sbr.rel (%p328) target = $region32
      $region31: #{tpu_custom_call.1} parent=11 // pred_region
        _
      $region32: #{tpu_custom_call.1} parent=11 // pred_fallthru
        _
      // Predicated region
      $region33: #{tpu_custom_call.1} parent=11 // pred_check
        %p331 = pneg %p170
      $region34: #{tpu_custom_call.1} parent=11 // pred_check_branch
        %333 = sbr.rel (%p331) target = $region36
      $region35: #{tpu_custom_call.1} parent=11 // pred_region
        _
      $region36: #{tpu_custom_call.1} parent=11 // pred_fallthru
        _
      // Predicated region
      $region37: #{tpu_custom_call.1} parent=11 // pred_check
        %p334 = pneg %p191
      $region38: #{tpu_custom_call.1} parent=11 // pred_check_branch
        %336 = sbr.rel (%p334) target = $region40
      $region39: #{tpu_custom_call.1} parent=11 // pred_region
        _
      $region40: #{tpu_custom_call.1} parent=11 // pred_fallthru
        _
      // Predicated region
      $region41: #{tpu_custom_call.1} parent=11 // pred_check
        %p337 = pneg %p212
      $region42: #{tpu_custom_call.1} parent=11 // pred_check_branch
        %339 = sbr.rel (%p337) target = $region44
      $region43: #{tpu_custom_call.1} parent=11 // pred_region
        _
      $region44: #{tpu_custom_call.1} parent=11 // pred_fallthru
        _
      // Predicated region
      $region45: #{tpu_custom_call.1} parent=11 // pred_check
        %p340 = pneg %p233
      $region46: #{tpu_custom_call.1} parent=11 // pred_check_branch
        %342 = sbr.rel (%p340) target = $region48
      $region47: #{tpu_custom_call.1} parent=11 // pred_region
        _
      $region48: #{tpu_custom_call.1} parent=11 // pred_fallthru
        _
      // Predicated region
      $region49: #{tpu_custom_call.1} parent=11 // pred_check
        %p343 = pneg %p254
      $region50: #{tpu_custom_call.1} parent=11 // pred_check_branch
        %345 = sbr.rel (%p343) target = $region52
      $region51: #{tpu_custom_call.1} parent=11 // pred_region
        _
      $region52: #{tpu_custom_call.1} parent=11 // pred_fallthru
        _
      // Predicated region
      $region53: #{tpu_custom_call.1} parent=11 // pred_check
        %p346 = pneg %p275
      $region54: #{tpu_custom_call.1} parent=11 // pred_check_branch
        %348 = sbr.rel (%p346) target = $region56
      $region55: #{tpu_custom_call.1} parent=11 // pred_region
        _
      $region56: #{tpu_custom_call.1} parent=11 // pred_fallthru
        _
    $region12: #{tpu_custom_call.1} parent=5 // pred_fallthru
      _
    %p349 = scmp.lt.s32.totalorder %s18, 2
    // Predicated region
    $region57: #{tpu_custom_call.1} parent=5 // pred_check
      %p350 = pneg %p349
    $region58: #{tpu_custom_call.1} parent=5 // pred_check_branch
      %352 = sbr.rel (%p350) target = $region60
    $region59: #{tpu_custom_call.1} parent=5 // pred_region
      // Predicated region
      $region61: #{tpu_custom_call.1} parent=59 // pred_check
        %p353 = pneg %p38
      $region62: #{tpu_custom_call.1} parent=59 // pred_check_branch
        %355 = sbr.rel (%p353) target = $region64
      $region63: #{tpu_custom_call.1} parent=59 // pred_region
        %s356 = smul.u32 16, %s18
        %p357 = scmp.lt.s32.totalorder %s356, 31
        %s358 = scalar_select %p357, %s356, 31
        %s359 = smul.addr %s358, 8
        %s360 = scalar_lea.vmem %s0, %s359
        %s361 = smul.u32 16, %s18
      $region64: #{tpu_custom_call.1} parent=59 // pred_fallthru
        _
    $region60: #{tpu_custom_call.1} parent=5 // pred_fallthru
      _
    %p362 = scmp.le.s32.totalorder 1, %s18
    %p363 = scmp.lt.s32.totalorder %s18, 3
    %p364 = pnand %p362, %p363
    %p365 = pneg %p364
    // Predicated region
    $region65: #{tpu_custom_call.1} parent=5 // pred_check
      _
    $region66: #{tpu_custom_call.1} parent=5 // pred_check_branch
      %367 = sbr.rel (%p364) target = $region68
    $region67: #{tpu_custom_call.1} parent=5 // pred_region
      %s368 = ssub.s32 %s18, 1
      %s369 = smul.u32 16, %s23
      %p370 = scmp.lt.s32.totalorder %s369, 31
      %s371 = scalar_select %p370, %s369, 31
      %s372 = smul.addr %s371, 8
      %s373 = scalar_lea.vmem %s0, %s372
      %p374 = pneg %p44
      %p375 = pneg %p41
      %p376 = pneg %p65
      %p377 = pneg %p62
      %p378 = pneg %p86
      %p379 = pneg %p83
      %p380 = pneg %p107
      %p381 = pneg %p104
      %p382 = pneg %p128
      %p383 = pneg %p125
      %p384 = pneg %p149
      %p385 = pneg %p146
      %p386 = pneg %p170
      %p387 = pneg %p167
      %p388 = pneg %p191
      %p389 = pneg %p188
      %p390 = pneg %p212
      %p391 = pneg %p209
      %p392 = pneg %p233
      %p393 = pneg %p230
      %p394 = pneg %p254
      %p395 = pneg %p251
      %p396 = pneg %p275
      %p397 = pneg %p272
      %p398 = pneg %p301
      %p399 = pneg %p298
      %s400 = smul.u32 16, %s23
      %p401 = scmp.lt.s32.totalorder %s400, 31
      %s402 = scalar_select %p401, %s400, 31
      %s403 = smul.addr %s402, 8
      %s404 = scalar_lea.vmem %s12, %s403
      %s405 = smul.u32 16, %s23
      %p406 = scmp.lt.s32.totalorder %s405, 31
      %s407 = scalar_select %p406, %s405, 31
      %s408 = smul.addr %s407, 8
      %s409 = scalar_lea.vmem %s0, %s408
      %s410 = smul.u32 16, %s23
      %s411 = smul.u32 16, %s23
      %p412 = scmp.lt.s32.totalorder %s411, 31
      %s413 = scalar_select %p412, %s411, 31
      %s414 = smul.addr %s413, 8
      %s415 = scalar_lea.vmem %s12, %s414
      %s416 = smul.u32 16, %s23
      %v418 = vld [vmem:[%s409] sm:$0xff]
      %v419 = vld [vmem:[%s409 + $0x8] sm:$0xff]
      %v420 = vld [vmem:[%s409 + $0x10] sm:$0xff]
      %v421 = vld [vmem:[%s409 + $0x18] sm:$0xff]
      %v422 = vld [vmem:[%s409 + $0x20] sm:$0xff]
      %v423 = vld [vmem:[%s409 + $0x28] sm:$0xff]
      %v424 = vld [vmem:[%s409 + $0x30] sm:$0xff]
      %v425 = vld [vmem:[%s409 + $0x38] sm:$0xff]
      %v426 = vld [vmem:[%s409 + $0x40] sm:$0xff]
      %v427 = vld [vmem:[%s409 + $0x48] sm:$0xff]
      %v428 = vld [vmem:[%s409 + $0x50] sm:$0xff]
      %v429 = vld [vmem:[%s409 + $0x58] sm:$0xff]
      %v430 = vld [vmem:[%s409 + $0x60] sm:$0xff]
      %v431 = vld [vmem:[%s409 + $0x68] sm:$0xff]
      %v432 = vld [vmem:[%s409 + $0x70] sm:$0xff]
      %v433 = vld [vmem:[%s409 + $0x78] sm:$0xff]
      %v434 = vld [vmem:[%s3] sm:$0x1]
      %v435 = vmul.f32 %v418, %v418
      %v436 = vmul.f32 %v419, %v419
      %v437 = vmul.f32 %v420, %v420
      %v438 = vmul.f32 %v421, %v421
      %v439 = vmul.f32 %v422, %v422
      %v440 = vmul.f32 %v423, %v423
      %v441 = vmul.f32 %v424, %v424
      %v442 = vmul.f32 %v425, %v425
      %v443 = vmul.f32 %v426, %v426
      %v444 = vmul.f32 %v427, %v427
      %v445 = vmul.f32 %v428, %v428
      %v446 = vmul.f32 %v429, %v429
      %v447 = vmul.f32 %v430, %v430
      %v448 = vmul.f32 %v431, %v431
      %v449 = vmul.f32 %v432, %v432
      %v450 = vmul.f32 %v433, %v433
      %vm451 = vcmask 261120
      %v452 = vsel %vm451, %v435, 0.0
      %453 = vadd.xlane.f32.xlu0 %v452
      %v454 = vpop.xlane.xlu0 %453
      %v455 = vsel %vm451, %v436, 0.0
      %456 = vadd.xlane.f32.xlu0 %v455
      %v457 = vpop.xlane.xlu0 %456
      %v458 = vsel %vm451, %v437, 0.0
      %459 = vadd.xlane.f32.xlu0 %v458
      %v460 = vpop.xlane.xlu0 %459
      %v461 = vsel %vm451, %v438, 0.0
      %462 = vadd.xlane.f32.xlu0 %v461
      %v463 = vpop.xlane.xlu0 %462
      %v464 = vsel %vm451, %v439, 0.0
      %465 = vadd.xlane.f32.xlu0 %v464
      %v466 = vpop.xlane.xlu0 %465
      %v467 = vsel %vm451, %v440, 0.0
      %468 = vadd.xlane.f32.xlu0 %v467
      %v469 = vpop.xlane.xlu0 %468
      %v470 = vsel %vm451, %v441, 0.0
      %471 = vadd.xlane.f32.xlu0 %v470
      %v472 = vpop.xlane.xlu0 %471
      %v473 = vsel %vm451, %v442, 0.0
      %474 = vadd.xlane.f32.xlu0 %v473
      %v475 = vpop.xlane.xlu0 %474
      %v476 = vsel %vm451, %v443, 0.0
      %477 = vadd.xlane.f32.xlu0 %v476
      %v478 = vpop.xlane.xlu0 %477
      %v479 = vsel %vm451, %v444, 0.0
      %480 = vadd.xlane.f32.xlu0 %v479
      %v481 = vpop.xlane.xlu0 %480
      %v482 = vsel %vm451, %v445, 0.0
      %483 = vadd.xlane.f32.xlu0 %v482
      %v484 = vpop.xlane.xlu0 %483
      %v485 = vsel %vm451, %v446, 0.0
      %486 = vadd.xlane.f32.xlu0 %v485
      %v487 = vpop.xlane.xlu0 %486
      %v488 = vsel %vm451, %v447, 0.0
      %489 = vadd.xlane.f32.xlu0 %v488
      %v490 = vpop.xlane.xlu0 %489
      %v491 = vsel %vm451, %v448, 0.0
      %492 = vadd.xlane.f32.xlu0 %v491
      %v493 = vpop.xlane.xlu0 %492
      %v494 = vsel %vm451, %v449, 0.0
      %495 = vadd.xlane.f32.xlu0 %v494
      %v496 = vpop.xlane.xlu0 %495
      %v497 = vsel %vm451, %v450, 0.0
      %498 = vadd.xlane.f32.xlu0 %v497
      %v499 = vpop.xlane.xlu0 %498
      %v500 = vmax.f32 %v454, 1e-24
      %v501 = vmax.f32 %v457, 1e-24
      %v502 = vmax.f32 %v460, 1e-24
      %v503 = vmax.f32 %v463, 1e-24
      %v504 = vmax.f32 %v466, 1e-24
      %v505 = vmax.f32 %v469, 1e-24
      %v506 = vmax.f32 %v472, 1e-24
      %v507 = vmax.f32 %v475, 1e-24
      %v508 = vmax.f32 %v478, 1e-24
      %v509 = vmax.f32 %v481, 1e-24
      %v510 = vmax.f32 %v484, 1e-24
      %v511 = vmax.f32 %v487, 1e-24
      %v512 = vmax.f32 %v490, 1e-24
      %v513 = vmax.f32 %v493, 1e-24
      %v514 = vmax.f32 %v496, 1e-24
      %v515 = vmax.f32 %v499, 1e-24
      %v516 = vrsqrt.pop %v500
      %v517 = vmul.f32 %v516, %v500
      %v518 = vmul.f32 %v517, %v516
      %v519 = vmul.f32 0.5, %v518
      %v520 = vsub.f32 1.5, %v519
      %v521 = vmul.f32 %v516, %v520
      %vm522 = vweird.f32 %v500
      %vm523 = vweird.f32 %v516
      %vm524 = vmor %vm522, %vm523
      %v525 = vsel %vm524, %v516, %v521
      %v526 = vrsqrt.pop %v501
      %v527 = vmul.f32 %v526, %v501
      %v528 = vmul.f32 %v527, %v526
      %v529 = vmul.f32 0.5, %v528
      %v530 = vsub.f32 1.5, %v529
      %v531 = vmul.f32 %v526, %v530
      %vm532 = vweird.f32 %v501
      %vm533 = vweird.f32 %v526
      %vm534 = vmor %vm532, %vm533
      %v535 = vsel %vm534, %v526, %v531
      %v536 = vrsqrt.pop %v502
      %v537 = vmul.f32 %v536, %v502
      %v538 = vmul.f32 %v537, %v536
      %v539 = vmul.f32 0.5, %v538
      %v540 = vsub.f32 1.5, %v539
      %v541 = vmul.f32 %v536, %v540
      %vm542 = vweird.f32 %v502
      %vm543 = vweird.f32 %v536
      %vm544 = vmor %vm542, %vm543
      %v545 = vsel %vm544, %v536, %v541
      %v546 = vrsqrt.pop %v503
      %v547 = vmul.f32 %v546, %v503
      %v548 = vmul.f32 %v547, %v546
      %v549 = vmul.f32 0.5, %v548
      %v550 = vsub.f32 1.5, %v549
      %v551 = vmul.f32 %v546, %v550
      %vm552 = vweird.f32 %v503
      %vm553 = vweird.f32 %v546
      %vm554 = vmor %vm552, %vm553
      %v555 = vsel %vm554, %v546, %v551
      %v556 = vrsqrt.pop %v504
      %v557 = vmul.f32 %v556, %v504
      %v558 = vmul.f32 %v557, %v556
      %v559 = vmul.f32 0.5, %v558
      %v560 = vsub.f32 1.5, %v559
      %v561 = vmul.f32 %v556, %v560
      %vm562 = vweird.f32 %v504
      %vm563 = vweird.f32 %v556
      %vm564 = vmor %vm562, %vm563
      %v565 = vsel %vm564, %v556, %v561
      %v566 = vrsqrt.pop %v505
      %v567 = vmul.f32 %v566, %v505
      %v568 = vmul.f32 %v567, %v566
      %v569 = vmul.f32 0.5, %v568
      %v570 = vsub.f32 1.5, %v569
      %v571 = vmul.f32 %v566, %v570
      %vm572 = vweird.f32 %v505
      %vm573 = vweird.f32 %v566
      %vm574 = vmor %vm572, %vm573
      %v575 = vsel %vm574, %v566, %v571
      %v576 = vrsqrt.pop %v506
      %v577 = vmul.f32 %v576, %v506
      %v578 = vmul.f32 %v577, %v576
      %v579 = vmul.f32 0.5, %v578
      %v580 = vsub.f32 1.5, %v579
      %v581 = vmul.f32 %v576, %v580
      %vm582 = vweird.f32 %v506
      %vm583 = vweird.f32 %v576
      %vm584 = vmor %vm582, %vm583
      %v585 = vsel %vm584, %v576, %v581
      %v586 = vrsqrt.pop %v507
      %v587 = vmul.f32 %v586, %v507
      %v588 = vmul.f32 %v587, %v586
      %v589 = vmul.f32 0.5, %v588
      %v590 = vsub.f32 1.5, %v589
      %v591 = vmul.f32 %v586, %v590
      %vm592 = vweird.f32 %v507
      %vm593 = vweird.f32 %v586
      %vm594 = vmor %vm592, %vm593
      %v595 = vsel %vm594, %v586, %v591
      %v596 = vrsqrt.pop %v508
      %v597 = vmul.f32 %v596, %v508
      %v598 = vmul.f32 %v597, %v596
      %v599 = vmul.f32 0.5, %v598
      %v600 = vsub.f32 1.5, %v599
      %v601 = vmul.f32 %v596, %v600
      %vm602 = vweird.f32 %v508
      %vm603 = vweird.f32 %v596
      %vm604 = vmor %vm602, %vm603
      %v605 = vsel %vm604, %v596, %v601
      %v606 = vrsqrt.pop %v509
      %v607 = vmul.f32 %v606, %v509
      %v608 = vmul.f32 %v607, %v606
      %v609 = vmul.f32 0.5, %v608
      %v610 = vsub.f32 1.5, %v609
      %v611 = vmul.f32 %v606, %v610
      %vm612 = vweird.f32 %v509
      %vm613 = vweird.f32 %v606
      %vm614 = vmor %vm612, %vm613
      %v615 = vsel %vm614, %v606, %v611
      %v616 = vrsqrt.pop %v510
      %v617 = vmul.f32 %v616, %v510
      %v618 = vmul.f32 %v617, %v616
      %v619 = vmul.f32 0.5, %v618
      %v620 = vsub.f32 1.5, %v619
      %v621 = vmul.f32 %v616, %v620
      %vm622 = vweird.f32 %v510
      %vm623 = vweird.f32 %v616
      %vm624 = vmor %vm622, %vm623
      %v625 = vsel %vm624, %v616, %v621
      %v626 = vrsqrt.pop %v511
      %v627 = vmul.f32 %v626, %v511
      %v628 = vmul.f32 %v627, %v626
      %v629 = vmul.f32 0.5, %v628
      %v630 = vsub.f32 1.5, %v629
      %v631 = vmul.f32 %v626, %v630
      %vm632 = vweird.f32 %v511
      %vm633 = vweird.f32 %v626
      %vm634 = vmor %vm632, %vm633
      %v635 = vsel %vm634, %v626, %v631
      %v636 = vrsqrt.pop %v512
      %v637 = vmul.f32 %v636, %v512
      %v638 = vmul.f32 %v637, %v636
      %v639 = vmul.f32 0.5, %v638
      %v640 = vsub.f32 1.5, %v639
      %v641 = vmul.f32 %v636, %v640
      %vm642 = vweird.f32 %v512
      %vm643 = vweird.f32 %v636
      %vm644 = vmor %vm642, %vm643
      %v645 = vsel %vm644, %v636, %v641
      %v646 = vrsqrt.pop %v513
      %v647 = vmul.f32 %v646, %v513
      %v648 = vmul.f32 %v647, %v646
      %v649 = vmul.f32 0.5, %v648
      %v650 = vsub.f32 1.5, %v649
      %v651 = vmul.f32 %v646, %v650
      %vm652 = vweird.f32 %v513
      %vm653 = vweird.f32 %v646
      %vm654 = vmor %vm652, %vm653
      %v655 = vsel %vm654, %v646, %v651
      %v656 = vrsqrt.pop %v514
      %v657 = vmul.f32 %v656, %v514
      %v658 = vmul.f32 %v657, %v656
      %v659 = vmul.f32 0.5, %v658
      %v660 = vsub.f32 1.5, %v659
      %v661 = vmul.f32 %v656, %v660
      %vm662 = vweird.f32 %v514
      %vm663 = vweird.f32 %v656
      %vm664 = vmor %vm662, %vm663
      %v665 = vsel %vm664, %v656, %v661
      %v666 = vrsqrt.pop %v515
      %v667 = vmul.f32 %v666, %v515
      %v668 = vmul.f32 %v667, %v666
      %v669 = vmul.f32 0.5, %v668
      %v670 = vsub.f32 1.5, %v669
      %v671 = vmul.f32 %v666, %v670
      %vm672 = vweird.f32 %v515
      %vm673 = vweird.f32 %v666
      %vm674 = vmor %vm672, %vm673
      %v675 = vsel %vm674, %v666, %v671
      %v676 = vmul.f32 %v418, %v525
      %v677 = vmul.f32 %v419, %v535
      %v678 = vmul.f32 %v420, %v545
      %v679 = vmul.f32 %v421, %v555
      %v680 = vmul.f32 %v422, %v565
      %v681 = vmul.f32 %v423, %v575
      %v682 = vmul.f32 %v424, %v585
      %v683 = vmul.f32 %v425, %v595
      %v684 = vmul.f32 %v426, %v605
      %v685 = vmul.f32 %v427, %v615
      %v686 = vmul.f32 %v428, %v625
      %v687 = vmul.f32 %v429, %v635
      %v688 = vmul.f32 %v430, %v645
      %v689 = vmul.f32 %v431, %v655
      %v690 = vmul.f32 %v432, %v665
      %v691 = vmul.f32 %v433, %v675
      %v693 = vperm.slane %v434, 0
      %v695 = vmul.f32 %v676, %v693
      %v696 = vmul.f32 %v677, %v693
      %v697 = vmul.f32 %v678, %v693
      %v698 = vmul.f32 %v679, %v693
      %v699 = vmul.f32 %v680, %v693
      %v700 = vmul.f32 %v681, %v693
      %v701 = vmul.f32 %v682, %v693
      %v702 = vmul.f32 %v683, %v693
      %v703 = vmul.f32 %v684, %v693
      %v704 = vmul.f32 %v685, %v693
      %v705 = vmul.f32 %v686, %v693
      %v706 = vmul.f32 %v687, %v693
      %v707 = vmul.f32 %v688, %v693
      %v708 = vmul.f32 %v689, %v693
      %v709 = vmul.f32 %v690, %v693
      %v710 = vmul.f32 %v691, %v693
      %v711 = vpack.c.bf16 %v696, %v695
      %v712 = vpack.c.bf16 %v698, %v697
      %v713 = vpack.c.bf16 %v700, %v699
      %v714 = vpack.c.bf16 %v702, %v701
      %v715 = vpack.c.bf16 %v704, %v703
      %v716 = vpack.c.bf16 %v706, %v705
      %v717 = vpack.c.bf16 %v708, %v707
      %v718 = vpack.c.bf16 %v710, %v709
      %v719 = vld [vmem:[%s4] sm:$0xff]
      %v720 = vld [vmem:[%s4 + $0x8] sm:$0xff]
      %v721 = vld [vmem:[%s4 + $0x10] sm:$0xff]
      %v722 = vld [vmem:[%s4 + $0x18] sm:$0xff]
      %v727 = vunpack.c.l.b16 %v719
      %v728 = vunpack.c.h.b16 %v719
      %v729 = vunpack.c.l.b16 %v720
      %v730 = vunpack.c.h.b16 %v720
      %v731 = vunpack.c.l.b16 %v721
      %v732 = vunpack.c.h.b16 %v721
      %v733 = vunpack.c.l.b16 %v722
      %v734 = vunpack.c.h.b16 %v722
      %v735 = vpack.c.b16 %v729, %v727
      %v736 = vpack.c.b16 %v730, %v728
      %v737 = vpack.c.b16 %v733, %v731
      %v738 = vpack.c.b16 %v734, %v732
      %v744 = vsel %vm451, %v711, 0
      %v747 = vsel %vm451, %v712, 0
      %v750 = vsel %vm451, %v713, 0
      %v753 = vsel %vm451, %v714, 0
      %v756 = vsel %vm451, %v715, 0
      %v759 = vsel %vm451, %v716, 0
      %v762 = vsel %vm451, %v717, 0
      %v765 = vsel %vm451, %v718, 0
      %767 = vmatpush.bf16.msra.mxu0 0
      %768 = vmatpush.bf16.msra.mxu0 0
      %769 = vmatpush.bf16.msra.mxu0 0
      %770 = vmatpush.bf16.msra.mxu0 0
      %771 = vmatpush.bf16.msra.mxu0 0
      %772 = vmatpush.bf16.msra.mxu0 0
      %773 = vmatpush.bf16.msra.mxu0 %v737
      %774 = vmatpush.bf16.msra.mxu0 %v735
      %775 = vmatmul.bf16.gmra.mxu0 %v744
      %v776 = vpop.f32.mrf.mxu0
      %v777 = vadd.f32 0.0, %v776
      %v778 = vpop.f32.mrf.mxu0
      %v779 = vadd.f32 0.0, %v778
      %780 = vmatmul.bf16.gmra.mxu0 %v747
      %v781 = vpop.f32.mrf.mxu0
      %v782 = vadd.f32 0.0, %v781
      %v783 = vpop.f32.mrf.mxu0
      %v784 = vadd.f32 0.0, %v783
      %785 = vmatmul.bf16.gmra.mxu0 %v750
      %v786 = vpop.f32.mrf.mxu0
      %v787 = vadd.f32 0.0, %v786
      %v788 = vpop.f32.mrf.mxu0
      %v789 = vadd.f32 0.0, %v788
      %790 = vmatmul.bf16.gmra.mxu0 %v753
      %v791 = vpop.f32.mrf.mxu0
      %v792 = vadd.f32 0.0, %v791
      %v793 = vpop.f32.mrf.mxu0
      %v794 = vadd.f32 0.0, %v793
      %795 = vmatmul.bf16.gmra.mxu0 %v756
      %v796 = vpop.f32.mrf.mxu0
      %v797 = vadd.f32 0.0, %v796
      %v798 = vpop.f32.mrf.mxu0
      %v799 = vadd.f32 0.0, %v798
      %800 = vmatmul.bf16.gmra.mxu0 %v759
      %v801 = vpop.f32.mrf.mxu0
      %v802 = vadd.f32 0.0, %v801
      %v803 = vpop.f32.mrf.mxu0
      %v804 = vadd.f32 0.0, %v803
      %805 = vmatmul.bf16.gmra.mxu0 %v762
      %v806 = vpop.f32.mrf.mxu0
      %v807 = vadd.f32 0.0, %v806
      %v808 = vpop.f32.mrf.mxu0
      %v809 = vadd.f32 0.0, %v808
      %810 = vmatmul.bf16.gmra.mxu0 %v765
      %v811 = vpop.f32.mrf.mxu0
      %v812 = vadd.f32 0.0, %v811
      %v813 = vpop.f32.mrf.mxu0
      %v814 = vadd.f32 0.0, %v813
      %815 = vdwg.mxu0
      %816 = vmatpush.bf16.msra.mxu0 0
      %817 = vmatpush.bf16.msra.mxu0 0
      %818 = vmatpush.bf16.msra.mxu0 0
      %819 = vmatpush.bf16.msra.mxu0 0
      %820 = vmatpush.bf16.msra.mxu0 0
      %821 = vmatpush.bf16.msra.mxu0 0
      %822 = vmatpush.bf16.msra.mxu0 %v738
      %823 = vmatpush.bf16.msra.mxu0 %v736
      %824 = vmatmul.bf16.gmra.mxu0 %v744
      %v825 = vpop.f32.mrf.mxu0
      %v826 = vadd.f32 0.0, %v825
      %v827 = vpop.f32.mrf.mxu0
      %v828 = vadd.f32 0.0, %v827
      %829 = vmatmul.bf16.gmra.mxu0 %v747
      %v830 = vpop.f32.mrf.mxu0
      %v831 = vadd.f32 0.0, %v830
      %v832 = vpop.f32.mrf.mxu0
      %v833 = vadd.f32 0.0, %v832
      %834 = vmatmul.bf16.gmra.mxu0 %v750
      %v835 = vpop.f32.mrf.mxu0
      %v836 = vadd.f32 0.0, %v835
      %v837 = vpop.f32.mrf.mxu0
      %v838 = vadd.f32 0.0, %v837
      %839 = vmatmul.bf16.gmra.mxu0 %v753
      %v840 = vpop.f32.mrf.mxu0
      %v841 = vadd.f32 0.0, %v840
      %v842 = vpop.f32.mrf.mxu0
      %v843 = vadd.f32 0.0, %v842
      %844 = vmatmul.bf16.gmra.mxu0 %v756
      %v845 = vpop.f32.mrf.mxu0
      %v846 = vadd.f32 0.0, %v845
      %v847 = vpop.f32.mrf.mxu0
      %v848 = vadd.f32 0.0, %v847
      %849 = vmatmul.bf16.gmra.mxu0 %v759
      %v850 = vpop.f32.mrf.mxu0
      %v851 = vadd.f32 0.0, %v850
      %v852 = vpop.f32.mrf.mxu0
      %v853 = vadd.f32 0.0, %v852
      %854 = vmatmul.bf16.gmra.mxu0 %v762
      %v855 = vpop.f32.mrf.mxu0
      %v856 = vadd.f32 0.0, %v855
      %v857 = vpop.f32.mrf.mxu0
      %v858 = vadd.f32 0.0, %v857
      %859 = vmatmul.bf16.gmra.mxu0 %v765
      %v860 = vpop.f32.mrf.mxu0
      %v861 = vadd.f32 0.0, %v860
      %v862 = vpop.f32.mrf.mxu0
      %v863 = vadd.f32 0.0, %v862
      %864 = vdwg.mxu0
      %v865 = vld [vmem:[%s1] sm:$0xff]
      %v866 = vld [vmem:[%s1 + $0x8] sm:$0xff]
      %v867 = vld [vmem:[%s2] sm:$0xff]
      %v868 = vld [vmem:[%s2 + $0x8] sm:$0xff]
      %v869 = vld [vmem:[%s5] sm:$0x1]
      %v871 = vperm.slane %v869, 0
      %872 = vrot.lane.b32.xlu0 %v871, 32
      %v873 = vpop.permute.xlu0 %872
      %v875 = vadd.f32 %v826, %v873
      %v876 = vadd.f32 %v828, %v873
      %v877 = vadd.f32 %v831, %v873
      %v878 = vadd.f32 %v833, %v873
      %v879 = vadd.f32 %v836, %v873
      %v880 = vadd.f32 %v838, %v873
      %v881 = vadd.f32 %v841, %v873
      %v882 = vadd.f32 %v843, %v873
      %v883 = vadd.f32 %v846, %v873
      %v884 = vadd.f32 %v848, %v873
      %v885 = vadd.f32 %v851, %v873
      %v886 = vadd.f32 %v853, %v873
      %v887 = vadd.f32 %v856, %v873
      %v888 = vadd.f32 %v858, %v873
      %v889 = vadd.f32 %v861, %v873
      %v890 = vadd.f32 %v863, %v873
      %v891 = vxor.u32 %v875, 2147483648
      %v892 = vxor.u32 %v876, 2147483648
      %v893 = vxor.u32 %v877, 2147483648
      %v894 = vxor.u32 %v878, 2147483648
      %v895 = vxor.u32 %v879, 2147483648
      %v896 = vxor.u32 %v880, 2147483648
      %v897 = vxor.u32 %v881, 2147483648
      %v898 = vxor.u32 %v882, 2147483648
      %v899 = vxor.u32 %v883, 2147483648
      %v900 = vxor.u32 %v884, 2147483648
      %v901 = vxor.u32 %v885, 2147483648
      %v902 = vxor.u32 %v886, 2147483648
      %v903 = vxor.u32 %v887, 2147483648
      %v904 = vxor.u32 %v888, 2147483648
      %v905 = vxor.u32 %v889, 2147483648
      %v906 = vxor.u32 %v890, 2147483648
      %v907 = vmul.f32 %v891, 1.442695
      %v908 = vpow.pop %v907
      %v909 = vmul.f32 %v892, 1.442695
      %v910 = vpow.pop %v909
      %v911 = vmul.f32 %v893, 1.442695
      %v912 = vpow.pop %v911
      %v913 = vmul.f32 %v894, 1.442695
      %v914 = vpow.pop %v913
      %v915 = vmul.f32 %v895, 1.442695
      %v916 = vpow.pop %v915
      %v917 = vmul.f32 %v896, 1.442695
      %v918 = vpow.pop %v917
      %v919 = vmul.f32 %v897, 1.442695
      %v920 = vpow.pop %v919
      %v921 = vmul.f32 %v898, 1.442695
      %v922 = vpow.pop %v921
      %v923 = vmul.f32 %v899, 1.442695
      %v924 = vpow.pop %v923
      %v925 = vmul.f32 %v900, 1.442695
      %v926 = vpow.pop %v925
      %v927 = vmul.f32 %v901, 1.442695
      %v928 = vpow.pop %v927
      %v929 = vmul.f32 %v902, 1.442695
      %v930 = vpow.pop %v929
      %v931 = vmul.f32 %v903, 1.442695
      %v932 = vpow.pop %v931
      %v933 = vmul.f32 %v904, 1.442695
      %v934 = vpow.pop %v933
      %v935 = vmul.f32 %v905, 1.442695
      %v936 = vpow.pop %v935
      %v937 = vmul.f32 %v906, 1.442695
      %v938 = vpow.pop %v937
      %v939 = vadd.f32 %v908, 1.0
      %v940 = vadd.f32 %v910, 1.0
      %v941 = vadd.f32 %v912, 1.0
      %v942 = vadd.f32 %v914, 1.0
      %v943 = vadd.f32 %v916, 1.0
      %v944 = vadd.f32 %v918, 1.0
      %v945 = vadd.f32 %v920, 1.0
      %v946 = vadd.f32 %v922, 1.0
      %v947 = vadd.f32 %v924, 1.0
      %v948 = vadd.f32 %v926, 1.0
      %v949 = vadd.f32 %v928, 1.0
      %v950 = vadd.f32 %v930, 1.0
      %v951 = vadd.f32 %v932, 1.0
      %v952 = vadd.f32 %v934, 1.0
      %v953 = vadd.f32 %v936, 1.0
      %v954 = vadd.f32 %v938, 1.0
      %v955 = vrcp.pop %v939
      %v956 = vmul.f32 %v939, %v955
      %v957 = vsub.f32 1.0, %v956
      %v958 = vmul.f32 %v955, %v957
      %v959 = vadd.f32 %v955, %v958
      %vm960 = vweird.f32 %v939
      %vm961 = vweird.f32 %v955
      %vm962 = vmor %vm960, %vm961
      %v963 = vsel %vm962, %v955, %v959
      %v964 = vand.u32 2147483647, %v939
      %vm965 = vcmp.eq.f32.partialorder %v964, 8.507059e+37
      %v966 = vand.u32 %v939, 2147483648
      %v967 = vor.u32 1.1754944e-38, %v966
      %v968 = vsel %vm965, %v967, %v963
      %v969 = vmul.f32 1.0, %v968
      %v970 = vrcp.pop %v940
      %v971 = vmul.f32 %v940, %v970
      %v972 = vsub.f32 1.0, %v971
      %v973 = vmul.f32 %v970, %v972
      %v974 = vadd.f32 %v970, %v973
      %vm975 = vweird.f32 %v940
      %vm976 = vweird.f32 %v970
      %vm977 = vmor %vm975, %vm976
      %v978 = vsel %vm977, %v970, %v974
      %v979 = vand.u32 2147483647, %v940
      %vm980 = vcmp.eq.f32.partialorder %v979, 8.507059e+37
      %v981 = vand.u32 %v940, 2147483648
      %v982 = vor.u32 1.1754944e-38, %v981
      %v983 = vsel %vm980, %v982, %v978
      %v984 = vmul.f32 1.0, %v983
      %v985 = vrcp.pop %v941
      %v986 = vmul.f32 %v941, %v985
      %v987 = vsub.f32 1.0, %v986
      %v988 = vmul.f32 %v985, %v987
      %v989 = vadd.f32 %v985, %v988
      %vm990 = vweird.f32 %v941
      %vm991 = vweird.f32 %v985
      %vm992 = vmor %vm990, %vm991
      %v993 = vsel %vm992, %v985, %v989
      %v994 = vand.u32 2147483647, %v941
      %vm995 = vcmp.eq.f32.partialorder %v994, 8.507059e+37
      %v996 = vand.u32 %v941, 2147483648
      %v997 = vor.u32 1.1754944e-38, %v996
      %v998 = vsel %vm995, %v997, %v993
      %v999 = vmul.f32 1.0, %v998
      %v1000 = vrcp.pop %v942
      %v1001 = vmul.f32 %v942, %v1000
      %v1002 = vsub.f32 1.0, %v1001
      %v1003 = vmul.f32 %v1000, %v1002
      %v1004 = vadd.f32 %v1000, %v1003
      %vm1005 = vweird.f32 %v942
      %vm1006 = vweird.f32 %v1000
      %vm1007 = vmor %vm1005, %vm1006
      %v1008 = vsel %vm1007, %v1000, %v1004
      %v1009 = vand.u32 2147483647, %v942
      %vm1010 = vcmp.eq.f32.partialorder %v1009, 8.507059e+37
      %v1011 = vand.u32 %v942, 2147483648
      %v1012 = vor.u32 1.1754944e-38, %v1011
      %v1013 = vsel %vm1010, %v1012, %v1008
      %v1014 = vmul.f32 1.0, %v1013
      %v1015 = vrcp.pop %v943
      %v1016 = vmul.f32 %v943, %v1015
      %v1017 = vsub.f32 1.0, %v1016
      %v1018 = vmul.f32 %v1015, %v1017
      %v1019 = vadd.f32 %v1015, %v1018
      %vm1020 = vweird.f32 %v943
      %vm1021 = vweird.f32 %v1015
      %vm1022 = vmor %vm1020, %vm1021
      %v1023 = vsel %vm1022, %v1015, %v1019
      %v1024 = vand.u32 2147483647, %v943
      %vm1025 = vcmp.eq.f32.partialorder %v1024, 8.507059e+37
      %v1026 = vand.u32 %v943, 2147483648
      %v1027 = vor.u32 1.1754944e-38, %v1026
      %v1028 = vsel %vm1025, %v1027, %v1023
      %v1029 = vmul.f32 1.0, %v1028
      %v1030 = vrcp.pop %v944
      %v1031 = vmul.f32 %v944, %v1030
      %v1032 = vsub.f32 1.0, %v1031
      %v1033 = vmul.f32 %v1030, %v1032
      %v1034 = vadd.f32 %v1030, %v1033
      %vm1035 = vweird.f32 %v944
      %vm1036 = vweird.f32 %v1030
      %vm1037 = vmor %vm1035, %vm1036
      %v1038 = vsel %vm1037, %v1030, %v1034
      %v1039 = vand.u32 2147483647, %v944
      %vm1040 = vcmp.eq.f32.partialorder %v1039, 8.507059e+37
      %v1041 = vand.u32 %v944, 2147483648
      %v1042 = vor.u32 1.1754944e-38, %v1041
      %v1043 = vsel %vm1040, %v1042, %v1038
      %v1044 = vmul.f32 1.0, %v1043
      %v1045 = vrcp.pop %v945
      %v1046 = vmul.f32 %v945, %v1045
      %v1047 = vsub.f32 1.0, %v1046
      %v1048 = vmul.f32 %v1045, %v1047
      %v1049 = vadd.f32 %v1045, %v1048
      %vm1050 = vweird.f32 %v945
      %vm1051 = vweird.f32 %v1045
      %vm1052 = vmor %vm1050, %vm1051
      %v1053 = vsel %vm1052, %v1045, %v1049
      %v1054 = vand.u32 2147483647, %v945
      %vm1055 = vcmp.eq.f32.partialorder %v1054, 8.507059e+37
      %v1056 = vand.u32 %v945, 2147483648
      %v1057 = vor.u32 1.1754944e-38, %v1056
      %v1058 = vsel %vm1055, %v1057, %v1053
      %v1059 = vmul.f32 1.0, %v1058
      %v1060 = vrcp.pop %v946
      %v1061 = vmul.f32 %v946, %v1060
      %v1062 = vsub.f32 1.0, %v1061
      %v1063 = vmul.f32 %v1060, %v1062
      %v1064 = vadd.f32 %v1060, %v1063
      %vm1065 = vweird.f32 %v946
      %vm1066 = vweird.f32 %v1060
      %vm1067 = vmor %vm1065, %vm1066
      %v1068 = vsel %vm1067, %v1060, %v1064
      %v1069 = vand.u32 2147483647, %v946
      %vm1070 = vcmp.eq.f32.partialorder %v1069, 8.507059e+37
      %v1071 = vand.u32 %v946, 2147483648
      %v1072 = vor.u32 1.1754944e-38, %v1071
      %v1073 = vsel %vm1070, %v1072, %v1068
      %v1074 = vmul.f32 1.0, %v1073
      %v1075 = vrcp.pop %v947
      %v1076 = vmul.f32 %v947, %v1075
      %v1077 = vsub.f32 1.0, %v1076
      %v1078 = vmul.f32 %v1075, %v1077
      %v1079 = vadd.f32 %v1075, %v1078
      %vm1080 = vweird.f32 %v947
      %vm1081 = vweird.f32 %v1075
      %vm1082 = vmor %vm1080, %vm1081
      %v1083 = vsel %vm1082, %v1075, %v1079
      %v1084 = vand.u32 2147483647, %v947
      %vm1085 = vcmp.eq.f32.partialorder %v1084, 8.507059e+37
      %v1086 = vand.u32 %v947, 2147483648
      %v1087 = vor.u32 1.1754944e-38, %v1086
      %v1088 = vsel %vm1085, %v1087, %v1083
      %v1089 = vmul.f32 1.0, %v1088
      %v1090 = vrcp.pop %v948
      %v1091 = vmul.f32 %v948, %v1090
      %v1092 = vsub.f32 1.0, %v1091
      %v1093 = vmul.f32 %v1090, %v1092
      %v1094 = vadd.f32 %v1090, %v1093
      %vm1095 = vweird.f32 %v948
      %vm1096 = vweird.f32 %v1090
      %vm1097 = vmor %vm1095, %vm1096
      %v1098 = vsel %vm1097, %v1090, %v1094
      %v1099 = vand.u32 2147483647, %v948
      %vm1100 = vcmp.eq.f32.partialorder %v1099, 8.507059e+37
      %v1101 = vand.u32 %v948, 2147483648
      %v1102 = vor.u32 1.1754944e-38, %v1101
      %v1103 = vsel %vm1100, %v1102, %v1098
      %v1104 = vmul.f32 1.0, %v1103
      %v1105 = vrcp.pop %v949
      %v1106 = vmul.f32 %v949, %v1105
      %v1107 = vsub.f32 1.0, %v1106
      %v1108 = vmul.f32 %v1105, %v1107
      %v1109 = vadd.f32 %v1105, %v1108
      %vm1110 = vweird.f32 %v949
      %vm1111 = vweird.f32 %v1105
      %vm1112 = vmor %vm1110, %vm1111
      %v1113 = vsel %vm1112, %v1105, %v1109
      %v1114 = vand.u32 2147483647, %v949
      %vm1115 = vcmp.eq.f32.partialorder %v1114, 8.507059e+37
      %v1116 = vand.u32 %v949, 2147483648
      %v1117 = vor.u32 1.1754944e-38, %v1116
      %v1118 = vsel %vm1115, %v1117, %v1113
      %v1119 = vmul.f32 1.0, %v1118
      %v1120 = vrcp.pop %v950
      %v1121 = vmul.f32 %v950, %v1120
      %v1122 = vsub.f32 1.0, %v1121
      %v1123 = vmul.f32 %v1120, %v1122
      %v1124 = vadd.f32 %v1120, %v1123
      %vm1125 = vweird.f32 %v950
      %vm1126 = vweird.f32 %v1120
      %vm1127 = vmor %vm1125, %vm1126
      %v1128 = vsel %vm1127, %v1120, %v1124
      %v1129 = vand.u32 2147483647, %v950
      %vm1130 = vcmp.eq.f32.partialorder %v1129, 8.507059e+37
      %v1131 = vand.u32 %v950, 2147483648
      %v1132 = vor.u32 1.1754944e-38, %v1131
      %v1133 = vsel %vm1130, %v1132, %v1128
      %v1134 = vmul.f32 1.0, %v1133
      %v1135 = vrcp.pop %v951
      %v1136 = vmul.f32 %v951, %v1135
      %v1137 = vsub.f32 1.0, %v1136
      %v1138 = vmul.f32 %v1135, %v1137
      %v1139 = vadd.f32 %v1135, %v1138
      %vm1140 = vweird.f32 %v951
      %vm1141 = vweird.f32 %v1135
      %vm1142 = vmor %vm1140, %vm1141
      %v1143 = vsel %vm1142, %v1135, %v1139
      %v1144 = vand.u32 2147483647, %v951
      %vm1145 = vcmp.eq.f32.partialorder %v1144, 8.507059e+37
      %v1146 = vand.u32 %v951, 2147483648
      %v1147 = vor.u32 1.1754944e-38, %v1146
      %v1148 = vsel %vm1145, %v1147, %v1143
      %v1149 = vmul.f32 1.0, %v1148
      %v1150 = vrcp.pop %v952
      %v1151 = vmul.f32 %v952, %v1150
      %v1152 = vsub.f32 1.0, %v1151
      %v1153 = vmul.f32 %v1150, %v1152
      %v1154 = vadd.f32 %v1150, %v1153
      %vm1155 = vweird.f32 %v952
      %vm1156 = vweird.f32 %v1150
      %vm1157 = vmor %vm1155, %vm1156
      %v1158 = vsel %vm1157, %v1150, %v1154
      %v1159 = vand.u32 2147483647, %v952
      %vm1160 = vcmp.eq.f32.partialorder %v1159, 8.507059e+37
      %v1161 = vand.u32 %v952, 2147483648
      %v1162 = vor.u32 1.1754944e-38, %v1161
      %v1163 = vsel %vm1160, %v1162, %v1158
      %v1164 = vmul.f32 1.0, %v1163
      %v1165 = vrcp.pop %v953
      %v1166 = vmul.f32 %v953, %v1165
      %v1167 = vsub.f32 1.0, %v1166
      %v1168 = vmul.f32 %v1165, %v1167
      %v1169 = vadd.f32 %v1165, %v1168
      %vm1170 = vweird.f32 %v953
      %vm1171 = vweird.f32 %v1165
      %vm1172 = vmor %vm1170, %vm1171
      %v1173 = vsel %vm1172, %v1165, %v1169
      %v1174 = vand.u32 2147483647, %v953
      %vm1175 = vcmp.eq.f32.partialorder %v1174, 8.507059e+37
      %v1176 = vand.u32 %v953, 2147483648
      %v1177 = vor.u32 1.1754944e-38, %v1176
      %v1178 = vsel %vm1175, %v1177, %v1173
      %v1179 = vmul.f32 1.0, %v1178
      %v1180 = vrcp.pop %v954
      %v1181 = vmul.f32 %v954, %v1180
      %v1182 = vsub.f32 1.0, %v1181
      %v1183 = vmul.f32 %v1180, %v1182
      %v1184 = vadd.f32 %v1180, %v1183
      %vm1185 = vweird.f32 %v954
      %vm1186 = vweird.f32 %v1180
      %vm1187 = vmor %vm1185, %vm1186
      %v1188 = vsel %vm1187, %v1180, %v1184
      %v1189 = vand.u32 2147483647, %v954
      %vm1190 = vcmp.eq.f32.partialorder %v1189, 8.507059e+37
      %v1191 = vand.u32 %v954, 2147483648
      %v1192 = vor.u32 1.1754944e-38, %v1191
      %v1193 = vsel %vm1190, %v1192, %v1188
      %v1194 = vmul.f32 1.0, %v1193
      %v1195 = vmul.f32 %v777, %v865
      %v1196 = vmul.f32 %v779, %v866
      %v1197 = vmul.f32 %v782, %v865
      %v1198 = vmul.f32 %v784, %v866
      %v1199 = vmul.f32 %v787, %v865
      %v1200 = vmul.f32 %v789, %v866
      %v1201 = vmul.f32 %v792, %v865
      %v1202 = vmul.f32 %v794, %v866
      %v1203 = vmul.f32 %v797, %v865
      %v1204 = vmul.f32 %v799, %v866
      %v1205 = vmul.f32 %v802, %v865
      %v1206 = vmul.f32 %v804, %v866
      %v1207 = vmul.f32 %v807, %v865
      %v1208 = vmul.f32 %v809, %v866
      %v1209 = vmul.f32 %v812, %v865
      %v1210 = vmul.f32 %v814, %v866
      %1213 = vrot.lane.b32.xlu0 %v867, 96
      %v1214 = vpop.permute.xlu0 %1213
      %1215 = vrot.lane.b32.xlu0 %v868, 96
      %v1216 = vpop.permute.xlu0 %1215
      %v1219 = vmul.f32 %v777, %v1214
      %v1220 = vmul.f32 %v779, %v1216
      %v1221 = vmul.f32 %v782, %v1214
      %v1222 = vmul.f32 %v784, %v1216
      %v1223 = vmul.f32 %v787, %v1214
      %v1224 = vmul.f32 %v789, %v1216
      %v1225 = vmul.f32 %v792, %v1214
      %v1226 = vmul.f32 %v794, %v1216
      %v1227 = vmul.f32 %v797, %v1214
      %v1228 = vmul.f32 %v799, %v1216
      %v1229 = vmul.f32 %v802, %v1214
      %v1230 = vmul.f32 %v804, %v1216
      %v1231 = vmul.f32 %v807, %v1214
      %v1232 = vmul.f32 %v809, %v1216
      %v1233 = vmul.f32 %v812, %v1214
      %v1234 = vmul.f32 %v814, %v1216
      %1251 = vrot.lane.b32.xlu0 %v1219, 32
      %v1252 = vpop.permute.xlu0 %1251
      %1253 = vrot.lane.b32.xlu0 %v1220, 32
      %v1254 = vpop.permute.xlu0 %1253
      %1255 = vrot.lane.b32.xlu0 %v1221, 32
      %v1256 = vpop.permute.xlu0 %1255
      %1257 = vrot.lane.b32.xlu0 %v1222, 32
      %v1258 = vpop.permute.xlu0 %1257
      %1259 = vrot.lane.b32.xlu0 %v1223, 32
      %v1260 = vpop.permute.xlu0 %1259
      %1261 = vrot.lane.b32.xlu0 %v1224, 32
      %v1262 = vpop.permute.xlu0 %1261
      %1263 = vrot.lane.b32.xlu0 %v1225, 32
      %v1264 = vpop.permute.xlu0 %1263
      %1265 = vrot.lane.b32.xlu0 %v1226, 32
      %v1266 = vpop.permute.xlu0 %1265
      %1267 = vrot.lane.b32.xlu0 %v1227, 32
      %v1268 = vpop.permute.xlu0 %1267
      %1269 = vrot.lane.b32.xlu0 %v1228, 32
      %v1270 = vpop.permute.xlu0 %1269
      %1271 = vrot.lane.b32.xlu0 %v1229, 32
      %v1272 = vpop.permute.xlu0 %1271
      %1273 = vrot.lane.b32.xlu0 %v1230, 32
      %v1274 = vpop.permute.xlu0 %1273
      %1275 = vrot.lane.b32.xlu0 %v1231, 32
      %v1276 = vpop.permute.xlu0 %1275
      %1277 = vrot.lane.b32.xlu0 %v1232, 32
      %v1278 = vpop.permute.xlu0 %1277
      %1279 = vrot.lane.b32.xlu0 %v1233, 32
      %v1280 = vpop.permute.xlu0 %1279
      %1281 = vrot.lane.b32.xlu0 %v1234, 32
      %v1282 = vpop.permute.xlu0 %1281
      %v1299 = vadd.f32 %v1195, %v1252
      %v1300 = vadd.f32 %v1196, %v1254
      %v1301 = vadd.f32 %v1197, %v1256
      %v1302 = vadd.f32 %v1198, %v1258
      %v1303 = vadd.f32 %v1199, %v1260
      %v1304 = vadd.f32 %v1200, %v1262
      %v1305 = vadd.f32 %v1201, %v1264
      %v1306 = vadd.f32 %v1202, %v1266
      %v1307 = vadd.f32 %v1203, %v1268
      %v1308 = vadd.f32 %v1204, %v1270
      %v1309 = vadd.f32 %v1205, %v1272
      %v1310 = vadd.f32 %v1206, %v1274
      %v1311 = vadd.f32 %v1207, %v1276
      %v1312 = vadd.f32 %v1208, %v1278
      %v1313 = vadd.f32 %v1209, %v1280
      %v1314 = vadd.f32 %v1210, %v1282
      %1317 = vrot.lane.b32.xlu0 %v865, 32
      %v1318 = vpop.permute.xlu0 %1317
      %1319 = vrot.lane.b32.xlu0 %v866, 32
      %v1320 = vpop.permute.xlu0 %1319
      %v1323 = vmul.f32 %v777, %v1318
      %v1324 = vmul.f32 %v779, %v1320
      %v1325 = vmul.f32 %v782, %v1318
      %v1326 = vmul.f32 %v784, %v1320
      %v1327 = vmul.f32 %v787, %v1318
      %v1328 = vmul.f32 %v789, %v1320
      %v1329 = vmul.f32 %v792, %v1318
      %v1330 = vmul.f32 %v794, %v1320
      %v1331 = vmul.f32 %v797, %v1318
      %v1332 = vmul.f32 %v799, %v1320
      %v1333 = vmul.f32 %v802, %v1318
      %v1334 = vmul.f32 %v804, %v1320
      %v1335 = vmul.f32 %v807, %v1318
      %v1336 = vmul.f32 %v809, %v1320
      %v1337 = vmul.f32 %v812, %v1318
      %v1338 = vmul.f32 %v814, %v1320
      %v1339 = vmul.f32 %v826, %v867
      %v1340 = vmul.f32 %v828, %v868
      %v1341 = vmul.f32 %v831, %v867
      %v1342 = vmul.f32 %v833, %v868
      %v1343 = vmul.f32 %v836, %v867
      %v1344 = vmul.f32 %v838, %v868
      %v1345 = vmul.f32 %v841, %v867
      %v1346 = vmul.f32 %v843, %v868
      %v1347 = vmul.f32 %v846, %v867
      %v1348 = vmul.f32 %v848, %v868
      %v1349 = vmul.f32 %v851, %v867
      %v1350 = vmul.f32 %v853, %v868
      %v1351 = vmul.f32 %v856, %v867
      %v1352 = vmul.f32 %v858, %v868
      %v1353 = vmul.f32 %v861, %v867
      %v1354 = vmul.f32 %v863, %v868
      %1371 = vrot.lane.b32.xlu0 %v1339, 32
      %v1372 = vpop.permute.xlu0 %1371
      %1373 = vrot.lane.b32.xlu0 %v1340, 32
      %v1374 = vpop.permute.xlu0 %1373
      %1375 = vrot.lane.b32.xlu0 %v1341, 32
      %v1376 = vpop.permute.xlu0 %1375
      %1377 = vrot.lane.b32.xlu0 %v1342, 32
      %v1378 = vpop.permute.xlu0 %1377
      %1379 = vrot.lane.b32.xlu0 %v1343, 32
      %v1380 = vpop.permute.xlu0 %1379
      %1381 = vrot.lane.b32.xlu0 %v1344, 32
      %v1382 = vpop.permute.xlu0 %1381
      %1383 = vrot.lane.b32.xlu0 %v1345, 32
      %v1384 = vpop.permute.xlu0 %1383
      %1385 = vrot.lane.b32.xlu0 %v1346, 32
      %v1386 = vpop.permute.xlu0 %1385
      %1387 = vrot.lane.b32.xlu0 %v1347, 32
      %v1388 = vpop.permute.xlu0 %1387
      %1389 = vrot.lane.b32.xlu0 %v1348, 32
      %v1390 = vpop.permute.xlu0 %1389
      %1391 = vrot.lane.b32.xlu0 %v1349, 32
      %v1392 = vpop.permute.xlu0 %1391
      %1393 = vrot.lane.b32.xlu0 %v1350, 32
      %v1394 = vpop.permute.xlu0 %1393
      %1395 = vrot.lane.b32.xlu0 %v1351, 32
      %v1396 = vpop.permute.xlu0 %1395
      %1397 = vrot.lane.b32.xlu0 %v1352, 32
      %v1398 = vpop.permute.xlu0 %1397
      %1399 = vrot.lane.b32.xlu0 %v1353, 32
      %v1400 = vpop.permute.xlu0 %1399
      %1401 = vrot.lane.b32.xlu0 %v1354, 32
      %v1402 = vpop.permute.xlu0 %1401
      %v1419 = vadd.f32 %v1323, %v1372
      %v1420 = vadd.f32 %v1324, %v1374
      %v1421 = vadd.f32 %v1325, %v1376
      %v1422 = vadd.f32 %v1326, %v1378
      %v1423 = vadd.f32 %v1327, %v1380
      %v1424 = vadd.f32 %v1328, %v1382
      %v1425 = vadd.f32 %v1329, %v1384
      %v1426 = vadd.f32 %v1330, %v1386
      %v1427 = vadd.f32 %v1331, %v1388
      %v1428 = vadd.f32 %v1332, %v1390
      %v1429 = vadd.f32 %v1333, %v1392
      %v1430 = vadd.f32 %v1334, %v1394
      %v1431 = vadd.f32 %v1335, %v1396
      %v1432 = vadd.f32 %v1336, %v1398
      %v1433 = vadd.f32 %v1337, %v1400
      %v1434 = vadd.f32 %v1338, %v1402
      %v1435 = vpack.c.bf16 %v1299, %v1299
      %v1436 = vpack.c.bf16 %v1300, %v1300
      %v1437 = vpack.c.bf16 %v1301, %v1301
      %v1438 = vpack.c.bf16 %v1302, %v1302
      %v1439 = vpack.c.bf16 %v1303, %v1303
      %v1440 = vpack.c.bf16 %v1304, %v1304
      %v1441 = vpack.c.bf16 %v1305, %v1305
      %v1442 = vpack.c.bf16 %v1306, %v1306
      %v1443 = vpack.c.bf16 %v1307, %v1307
      %v1444 = vpack.c.bf16 %v1308, %v1308
      %v1445 = vpack.c.bf16 %v1309, %v1309
      %v1446 = vpack.c.bf16 %v1310, %v1310
      %v1447 = vpack.c.bf16 %v1311, %v1311
      %v1448 = vpack.c.bf16 %v1312, %v1312
      %v1449 = vpack.c.bf16 %v1313, %v1313
      %v1450 = vpack.c.bf16 %v1314, %v1314
      %v1451 = vpack.c.bf16 %v1419, %v1419
      %v1452 = vpack.c.bf16 %v1420, %v1420
      %v1453 = vpack.c.bf16 %v1421, %v1421
      %v1454 = vpack.c.bf16 %v1422, %v1422
      %v1455 = vpack.c.bf16 %v1423, %v1423
      %v1456 = vpack.c.bf16 %v1424, %v1424
      %v1457 = vpack.c.bf16 %v1425, %v1425
      %v1458 = vpack.c.bf16 %v1426, %v1426
      %v1459 = vpack.c.bf16 %v1427, %v1427
      %v1460 = vpack.c.bf16 %v1428, %v1428
      %v1461 = vpack.c.bf16 %v1429, %v1429
      %v1462 = vpack.c.bf16 %v1430, %v1430
      %v1463 = vpack.c.bf16 %v1431, %v1431
      %v1464 = vpack.c.bf16 %v1432, %v1432
      %v1465 = vpack.c.bf16 %v1433, %v1433
      %v1466 = vpack.c.bf16 %v1434, %v1434
      %v1469 = vunpack.c.l.b16 %v1435
      %v1470 = vunpack.c.l.b16 %v1436
      %v1471 = vpack.c.b16 %v1470, %v1469
      %v1474 = vunpack.c.l.b16 %v1451
      %v1475 = vunpack.c.l.b16 %v1452
      %v1476 = vpack.c.b16 %v1475, %v1474
      %1477 = vrot.lane.b32.xlu0 %v1476, 96
      %v1478 = vpop.permute.xlu0 %1477
      %vm1479 = vcmask 64512
      %v1481 = vsel %vm1479, %v1471, 0
      %v1484 = vsel %vm1479, %v1478, 0
      %1486 = vmatpush.bf16.xpose.msra.mxu0 0
      %1487 = vmatpush.bf16.xpose.msra.mxu0 0
      %1488 = vmatpush.bf16.xpose.msra.mxu0 0
      %1489 = vmatpush.bf16.xpose.msra.mxu0 0
      %1490 = vmatpush.bf16.xpose.msra.mxu0 0
      %1491 = vmatpush.bf16.xpose.msra.mxu0 0
      %1492 = vmatpush.bf16.xpose.msra.mxu0 0
      %1493 = vmatpush.bf16.xpose.msra.mxu0 %v1484
      %1494 = vmatmul.bf16.gmra.mxu0 %v1481
      %v1495 = vpop.f32.mrf.mxu0
      %v1496 = vadd.f32 0.0, %v1495
      %v1497 = vpop.f32.mrf.mxu0
      %v1498 = vadd.f32 0.0, %v1497
      %1499 = vdwg.mxu0
      %v1502 = vunpack.c.l.b16 %v1437
      %v1503 = vunpack.c.l.b16 %v1438
      %v1504 = vpack.c.b16 %v1503, %v1502
      %v1507 = vunpack.c.l.b16 %v1453
      %v1508 = vunpack.c.l.b16 %v1454
      %v1509 = vpack.c.b16 %v1508, %v1507
      %1510 = vrot.lane.b32.xlu0 %v1509, 96
      %v1511 = vpop.permute.xlu0 %1510
      %v1513 = vsel %vm1479, %v1504, 0
      %v1516 = vsel %vm1479, %v1511, 0
      %1518 = vmatpush.bf16.xpose.msra.mxu0 0
      %1519 = vmatpush.bf16.xpose.msra.mxu0 0
      %1520 = vmatpush.bf16.xpose.msra.mxu0 0
      %1521 = vmatpush.bf16.xpose.msra.mxu0 0
      %1522 = vmatpush.bf16.xpose.msra.mxu0 0
      %1523 = vmatpush.bf16.xpose.msra.mxu0 0
      %1524 = vmatpush.bf16.xpose.msra.mxu0 0
      %1525 = vmatpush.bf16.xpose.msra.mxu0 %v1516
      %1526 = vmatmul.bf16.gmra.mxu0 %v1513
      %v1527 = vpop.f32.mrf.mxu0
      %v1528 = vadd.f32 0.0, %v1527
      %v1529 = vpop.f32.mrf.mxu0
      %v1530 = vadd.f32 0.0, %v1529
      %1531 = vdwg.mxu0
      %v1534 = vunpack.c.l.b16 %v1439
      %v1535 = vunpack.c.l.b16 %v1440
      %v1536 = vpack.c.b16 %v1535, %v1534
      %v1539 = vunpack.c.l.b16 %v1455
      %v1540 = vunpack.c.l.b16 %v1456
      %v1541 = vpack.c.b16 %v1540, %v1539
      %1542 = vrot.lane.b32.xlu0 %v1541, 96
      %v1543 = vpop.permute.xlu0 %1542
      %v1545 = vsel %vm1479, %v1536, 0
      %v1548 = vsel %vm1479, %v1543, 0
      %1550 = vmatpush.bf16.xpose.msra.mxu0 0
      %1551 = vmatpush.bf16.xpose.msra.mxu0 0
      %1552 = vmatpush.bf16.xpose.msra.mxu0 0
      %1553 = vmatpush.bf16.xpose.msra.mxu0 0
      %1554 = vmatpush.bf16.xpose.msra.mxu0 0
      %1555 = vmatpush.bf16.xpose.msra.mxu0 0
      %1556 = vmatpush.bf16.xpose.msra.mxu0 0
      %1557 = vmatpush.bf16.xpose.msra.mxu0 %v1548
      %1558 = vmatmul.bf16.gmra.mxu0 %v1545
      %v1559 = vpop.f32.mrf.mxu0
      %v1560 = vadd.f32 0.0, %v1559
      %v1561 = vpop.f32.mrf.mxu0
      %v1562 = vadd.f32 0.0, %v1561
      %1563 = vdwg.mxu0
      %v1566 = vunpack.c.l.b16 %v1441
      %v1567 = vunpack.c.l.b16 %v1442
      %v1568 = vpack.c.b16 %v1567, %v1566
      %v1571 = vunpack.c.l.b16 %v1457
      %v1572 = vunpack.c.l.b16 %v1458
      %v1573 = vpack.c.b16 %v1572, %v1571
      %1574 = vrot.lane.b32.xlu0 %v1573, 96
      %v1575 = vpop.permute.xlu0 %1574
      %v1577 = vsel %vm1479, %v1568, 0
      %v1580 = vsel %vm1479, %v1575, 0
      %1582 = vmatpush.bf16.xpose.msra.mxu0 0
      %1583 = vmatpush.bf16.xpose.msra.mxu0 0
      %1584 = vmatpush.bf16.xpose.msra.mxu0 0
      %1585 = vmatpush.bf16.xpose.msra.mxu0 0
      %1586 = vmatpush.bf16.xpose.msra.mxu0 0
      %1587 = vmatpush.bf16.xpose.msra.mxu0 0
      %1588 = vmatpush.bf16.xpose.msra.mxu0 0
      %1589 = vmatpush.bf16.xpose.msra.mxu0 %v1580
      %1590 = vmatmul.bf16.gmra.mxu0 %v1577
      %v1591 = vpop.f32.mrf.mxu0
      %v1592 = vadd.f32 0.0, %v1591
      %v1593 = vpop.f32.mrf.mxu0
      %v1594 = vadd.f32 0.0, %v1593
      %1595 = vdwg.mxu0
      %v1598 = vunpack.c.l.b16 %v1443
      %v1599 = vunpack.c.l.b16 %v1444
      %v1600 = vpack.c.b16 %v1599, %v1598
      %v1603 = vunpack.c.l.b16 %v1459
      %v1604 = vunpack.c.l.b16 %v1460
      %v1605 = vpack.c.b16 %v1604, %v1603
      %1606 = vrot.lane.b32.xlu0 %v1605, 96
      %v1607 = vpop.permute.xlu0 %1606
      %v1609 = vsel %vm1479, %v1600, 0
      %v1612 = vsel %vm1479, %v1607, 0
      %1614 = vmatpush.bf16.xpose.msra.mxu0 0
      %1615 = vmatpush.bf16.xpose.msra.mxu0 0
      %1616 = vmatpush.bf16.xpose.msra.mxu0 0
      %1617 = vmatpush.bf16.xpose.msra.mxu0 0
      %1618 = vmatpush.bf16.xpose.msra.mxu0 0
      %1619 = vmatpush.bf16.xpose.msra.mxu0 0
      %1620 = vmatpush.bf16.xpose.msra.mxu0 0
      %1621 = vmatpush.bf16.xpose.msra.mxu0 %v1612
      %1622 = vmatmul.bf16.gmra.mxu0 %v1609
      %v1623 = vpop.f32.mrf.mxu0
      %v1624 = vadd.f32 0.0, %v1623
      %v1625 = vpop.f32.mrf.mxu0
      %v1626 = vadd.f32 0.0, %v1625
      %1627 = vdwg.mxu0
      %v1630 = vunpack.c.l.b16 %v1445
      %v1631 = vunpack.c.l.b16 %v1446
      %v1632 = vpack.c.b16 %v1631, %v1630
      %v1635 = vunpack.c.l.b16 %v1461
      %v1636 = vunpack.c.l.b16 %v1462
      %v1637 = vpack.c.b16 %v1636, %v1635
      %1638 = vrot.lane.b32.xlu0 %v1637, 96
      %v1639 = vpop.permute.xlu0 %1638
      %v1641 = vsel %vm1479, %v1632, 0
      %v1644 = vsel %vm1479, %v1639, 0
      %1646 = vmatpush.bf16.xpose.msra.mxu0 0
      %1647 = vmatpush.bf16.xpose.msra.mxu0 0
      %1648 = vmatpush.bf16.xpose.msra.mxu0 0
      %1649 = vmatpush.bf16.xpose.msra.mxu0 0
      %1650 = vmatpush.bf16.xpose.msra.mxu0 0
      %1651 = vmatpush.bf16.xpose.msra.mxu0 0
      %1652 = vmatpush.bf16.xpose.msra.mxu0 0
      %1653 = vmatpush.bf16.xpose.msra.mxu0 %v1644
      %1654 = vmatmul.bf16.gmra.mxu0 %v1641
      %v1655 = vpop.f32.mrf.mxu0
      %v1656 = vadd.f32 0.0, %v1655
      %v1657 = vpop.f32.mrf.mxu0
      %v1658 = vadd.f32 0.0, %v1657
      %1659 = vdwg.mxu0
      %v1662 = vunpack.c.l.b16 %v1447
      %v1663 = vunpack.c.l.b16 %v1448
      %v1664 = vpack.c.b16 %v1663, %v1662
      %v1667 = vunpack.c.l.b16 %v1463
      %v1668 = vunpack.c.l.b16 %v1464
      %v1669 = vpack.c.b16 %v1668, %v1667
      %1670 = vrot.lane.b32.xlu0 %v1669, 96
      %v1671 = vpop.permute.xlu0 %1670
      %v1673 = vsel %vm1479, %v1664, 0
      %v1676 = vsel %vm1479, %v1671, 0
      %1678 = vmatpush.bf16.xpose.msra.mxu0 0
      %1679 = vmatpush.bf16.xpose.msra.mxu0 0
      %1680 = vmatpush.bf16.xpose.msra.mxu0 0
      %1681 = vmatpush.bf16.xpose.msra.mxu0 0
      %1682 = vmatpush.bf16.xpose.msra.mxu0 0
      %1683 = vmatpush.bf16.xpose.msra.mxu0 0
      %1684 = vmatpush.bf16.xpose.msra.mxu0 0
      %1685 = vmatpush.bf16.xpose.msra.mxu0 %v1676
      %1686 = vmatmul.bf16.gmra.mxu0 %v1673
      %v1687 = vpop.f32.mrf.mxu0
      %v1688 = vadd.f32 0.0, %v1687
      %v1689 = vpop.f32.mrf.mxu0
      %v1690 = vadd.f32 0.0, %v1689
      %1691 = vdwg.mxu0
      %v1694 = vunpack.c.l.b16 %v1449
      %v1695 = vunpack.c.l.b16 %v1450
      %v1696 = vpack.c.b16 %v1695, %v1694
      %v1699 = vunpack.c.l.b16 %v1465
      %v1700 = vunpack.c.l.b16 %v1466
      %v1701 = vpack.c.b16 %v1700, %v1699
      %1702 = vrot.lane.b32.xlu0 %v1701, 96
      %v1703 = vpop.permute.xlu0 %1702
      %v1705 = vsel %vm1479, %v1696, 0
      %v1708 = vsel %vm1479, %v1703, 0
      %1710 = vmatpush.bf16.xpose.msra.mxu0 0
      %1711 = vmatpush.bf16.xpose.msra.mxu0 0
      %1712 = vmatpush.bf16.xpose.msra.mxu0 0
      %1713 = vmatpush.bf16.xpose.msra.mxu0 0
      %1714 = vmatpush.bf16.xpose.msra.mxu0 0
      %1715 = vmatpush.bf16.xpose.msra.mxu0 0
      %1716 = vmatpush.bf16.xpose.msra.mxu0 0
      %1717 = vmatpush.bf16.xpose.msra.mxu0 %v1708
      %1718 = vmatmul.bf16.gmra.mxu0 %v1705
      %v1719 = vpop.f32.mrf.mxu0
      %v1720 = vadd.f32 0.0, %v1719
      %v1721 = vpop.f32.mrf.mxu0
      %v1722 = vadd.f32 0.0, %v1721
      %1723 = vdwg.mxu0
      %vm1724 = vcmask 130048
      %v1725 = vsel %vm1724, %v1496, -inf
      %1726 = vmax.xlane.f32.xlu0 %v1725
      %v1727 = vpop.xlane.xlu0 %1726
      %v1728 = vsel %vm1724, %v1498, -inf
      %1729 = vmax.xlane.f32.xlu0 %v1728
      %v1730 = vpop.xlane.xlu0 %1729
      %v1731 = vsel %vm1724, %v1528, -inf
      %1732 = vmax.xlane.f32.xlu0 %v1731
      %v1733 = vpop.xlane.xlu0 %1732
      %v1734 = vsel %vm1724, %v1530, -inf
      %1735 = vmax.xlane.f32.xlu0 %v1734
      %v1736 = vpop.xlane.xlu0 %1735
      %v1737 = vsel %vm1724, %v1560, -inf
      %1738 = vmax.xlane.f32.xlu0 %v1737
      %v1739 = vpop.xlane.xlu0 %1738
      %v1740 = vsel %vm1724, %v1562, -inf
      %1741 = vmax.xlane.f32.xlu0 %v1740
      %v1742 = vpop.xlane.xlu0 %1741
      %v1743 = vsel %vm1724, %v1592, -inf
      %1744 = vmax.xlane.f32.xlu0 %v1743
      %v1745 = vpop.xlane.xlu0 %1744
      %v1746 = vsel %vm1724, %v1594, -inf
      %1747 = vmax.xlane.f32.xlu0 %v1746
      %v1748 = vpop.xlane.xlu0 %1747
      %v1749 = vsel %vm1724, %v1624, -inf
      %1750 = vmax.xlane.f32.xlu0 %v1749
      %v1751 = vpop.xlane.xlu0 %1750
      %v1752 = vsel %vm1724, %v1626, -inf
      %1753 = vmax.xlane.f32.xlu0 %v1752
      %v1754 = vpop.xlane.xlu0 %1753
      %v1755 = vsel %vm1724, %v1656, -inf
      %1756 = vmax.xlane.f32.xlu0 %v1755
      %v1757 = vpop.xlane.xlu0 %1756
      %v1758 = vsel %vm1724, %v1658, -inf
      %1759 = vmax.xlane.f32.xlu0 %v1758
      %v1760 = vpop.xlane.xlu0 %1759
      %v1761 = vsel %vm1724, %v1688, -inf
      %1762 = vmax.xlane.f32.xlu0 %v1761
      %v1763 = vpop.xlane.xlu0 %1762
      %v1764 = vsel %vm1724, %v1690, -inf
      %1765 = vmax.xlane.f32.xlu0 %v1764
      %v1766 = vpop.xlane.xlu0 %1765
      %v1767 = vsel %vm1724, %v1720, -inf
      %1768 = vmax.xlane.f32.xlu0 %v1767
      %v1769 = vpop.xlane.xlu0 %1768
      %v1770 = vsel %vm1724, %v1722, -inf
      %1771 = vmax.xlane.f32.xlu0 %v1770
      %v1772 = vpop.xlane.xlu0 %1771
      %v1773 = vsub.f32 %v1496, %v1727
      %v1774 = vsub.f32 %v1498, %v1730
      %v1775 = vsub.f32 %v1528, %v1733
      %v1776 = vsub.f32 %v1530, %v1736
      %v1777 = vsub.f32 %v1560, %v1739
      %v1778 = vsub.f32 %v1562, %v1742
      %v1779 = vsub.f32 %v1592, %v1745
      %v1780 = vsub.f32 %v1594, %v1748
      %v1781 = vsub.f32 %v1624, %v1751
      %v1782 = vsub.f32 %v1626, %v1754
      %v1783 = vsub.f32 %v1656, %v1757
      %v1784 = vsub.f32 %v1658, %v1760
      %v1785 = vsub.f32 %v1688, %v1763
      %v1786 = vsub.f32 %v1690, %v1766
      %v1787 = vsub.f32 %v1720, %v1769
      %v1788 = vsub.f32 %v1722, %v1772
      %v1789 = vmul.f32 %v1773, 1.442695
      %v1790 = vpow.pop %v1789
      %v1791 = vmul.f32 %v1774, 1.442695
      %v1792 = vpow.pop %v1791
      %v1793 = vmul.f32 %v1775, 1.442695
      %v1794 = vpow.pop %v1793
      %v1795 = vmul.f32 %v1776, 1.442695
      %v1796 = vpow.pop %v1795
      %v1797 = vmul.f32 %v1777, 1.442695
      %v1798 = vpow.pop %v1797
      %v1799 = vmul.f32 %v1778, 1.442695
      %v1800 = vpow.pop %v1799
      %v1801 = vmul.f32 %v1779, 1.442695
      %v1802 = vpow.pop %v1801
      %v1803 = vmul.f32 %v1780, 1.442695
      %v1804 = vpow.pop %v1803
      %v1805 = vmul.f32 %v1781, 1.442695
      %v1806 = vpow.pop %v1805
      %v1807 = vmul.f32 %v1782, 1.442695
      %v1808 = vpow.pop %v1807
      %v1809 = vmul.f32 %v1783, 1.442695
      %v1810 = vpow.pop %v1809
      %v1811 = vmul.f32 %v1784, 1.442695
      %v1812 = vpow.pop %v1811
      %v1813 = vmul.f32 %v1785, 1.442695
      %v1814 = vpow.pop %v1813
      %v1815 = vmul.f32 %v1786, 1.442695
      %v1816 = vpow.pop %v1815
      %v1817 = vmul.f32 %v1787, 1.442695
      %v1818 = vpow.pop %v1817
      %v1819 = vmul.f32 %v1788, 1.442695
      %v1820 = vpow.pop %v1819
      %v1821 = vsel %vm1724, %v1790, 0.0
      %1822 = vadd.xlane.f32.xlu0 %v1821
      %v1823 = vpop.xlane.xlu0 %1822
      %v1824 = vsel %vm1724, %v1792, 0.0
      %1825 = vadd.xlane.f32.xlu0 %v1824
      %v1826 = vpop.xlane.xlu0 %1825
      %v1827 = vsel %vm1724, %v1794, 0.0
      %1828 = vadd.xlane.f32.xlu0 %v1827
      %v1829 = vpop.xlane.xlu0 %1828
      %v1830 = vsel %vm1724, %v1796, 0.0
      %1831 = vadd.xlane.f32.xlu0 %v1830
      %v1832 = vpop.xlane.xlu0 %1831
      %v1833 = vsel %vm1724, %v1798, 0.0
      %1834 = vadd.xlane.f32.xlu0 %v1833
      %v1835 = vpop.xlane.xlu0 %1834
      %v1836 = vsel %vm1724, %v1800, 0.0
      %1837 = vadd.xlane.f32.xlu0 %v1836
      %v1838 = vpop.xlane.xlu0 %1837
      %v1839 = vsel %vm1724, %v1802, 0.0
      %1840 = vadd.xlane.f32.xlu0 %v1839
      %v1841 = vpop.xlane.xlu0 %1840
      %v1842 = vsel %vm1724, %v1804, 0.0
      %1843 = vadd.xlane.f32.xlu0 %v1842
      %v1844 = vpop.xlane.xlu0 %1843
      %v1845 = vsel %vm1724, %v1806, 0.0
      %1846 = vadd.xlane.f32.xlu0 %v1845
      %v1847 = vpop.xlane.xlu0 %1846
      %v1848 = vsel %vm1724, %v1808, 0.0
      %1849 = vadd.xlane.f32.xlu0 %v1848
      %v1850 = vpop.xlane.xlu0 %1849
      %v1851 = vsel %vm1724, %v1810, 0.0
      %1852 = vadd.xlane.f32.xlu0 %v1851
      %v1853 = vpop.xlane.xlu0 %1852
      %v1854 = vsel %vm1724, %v1812, 0.0
      %1855 = vadd.xlane.f32.xlu0 %v1854
      %v1856 = vpop.xlane.xlu0 %1855
      %v1857 = vsel %vm1724, %v1814, 0.0
      %1858 = vadd.xlane.f32.xlu0 %v1857
      %v1859 = vpop.xlane.xlu0 %1858
      %v1860 = vsel %vm1724, %v1816, 0.0
      %1861 = vadd.xlane.f32.xlu0 %v1860
      %v1862 = vpop.xlane.xlu0 %1861
      %v1863 = vsel %vm1724, %v1818, 0.0
      %1864 = vadd.xlane.f32.xlu0 %v1863
      %v1865 = vpop.xlane.xlu0 %1864
      %v1866 = vsel %vm1724, %v1820, 0.0
      %1867 = vadd.xlane.f32.xlu0 %v1866
      %v1868 = vpop.xlane.xlu0 %1867
      %v1869 = vrcp.pop %v1823
      %v1870 = vmul.f32 %v1823, %v1869
      %v1871 = vsub.f32 1.0, %v1870
      %v1872 = vmul.f32 %v1869, %v1871
      %v1873 = vadd.f32 %v1869, %v1872
      %vm1874 = vweird.f32 %v1823
      %vm1875 = vweird.f32 %v1869
      %vm1876 = vmor %vm1874, %vm1875
      %v1877 = vsel %vm1876, %v1869, %v1873
      %v1878 = vand.u32 2147483647, %v1823
      %vm1879 = vcmp.eq.f32.partialorder %v1878, 8.507059e+37
      %v1880 = vand.u32 %v1823, 2147483648
      %v1881 = vor.u32 1.1754944e-38, %v1880
      %v1882 = vsel %vm1879, %v1881, %v1877
      %v1883 = vmul.f32 %v1790, %v1882
      %v1884 = vrcp.pop %v1826
      %v1885 = vmul.f32 %v1826, %v1884
      %v1886 = vsub.f32 1.0, %v1885
      %v1887 = vmul.f32 %v1884, %v1886
      %v1888 = vadd.f32 %v1884, %v1887
      %vm1889 = vweird.f32 %v1826
      %vm1890 = vweird.f32 %v1884
      %vm1891 = vmor %vm1889, %vm1890
      %v1892 = vsel %vm1891, %v1884, %v1888
      %v1893 = vand.u32 2147483647, %v1826
      %vm1894 = vcmp.eq.f32.partialorder %v1893, 8.507059e+37
      %v1895 = vand.u32 %v1826, 2147483648
      %v1896 = vor.u32 1.1754944e-38, %v1895
      %v1897 = vsel %vm1894, %v1896, %v1892
      %v1898 = vmul.f32 %v1792, %v1897
      %v1899 = vrcp.pop %v1829
      %v1900 = vmul.f32 %v1829, %v1899
      %v1901 = vsub.f32 1.0, %v1900
      %v1902 = vmul.f32 %v1899, %v1901
      %v1903 = vadd.f32 %v1899, %v1902
      %vm1904 = vweird.f32 %v1829
      %vm1905 = vweird.f32 %v1899
      %vm1906 = vmor %vm1904, %vm1905
      %v1907 = vsel %vm1906, %v1899, %v1903
      %v1908 = vand.u32 2147483647, %v1829
      %vm1909 = vcmp.eq.f32.partialorder %v1908, 8.507059e+37
      %v1910 = vand.u32 %v1829, 2147483648
      %v1911 = vor.u32 1.1754944e-38, %v1910
      %v1912 = vsel %vm1909, %v1911, %v1907
      %v1913 = vmul.f32 %v1794, %v1912
      %v1914 = vrcp.pop %v1832
      %v1915 = vmul.f32 %v1832, %v1914
      %v1916 = vsub.f32 1.0, %v1915
      %v1917 = vmul.f32 %v1914, %v1916
      %v1918 = vadd.f32 %v1914, %v1917
      %vm1919 = vweird.f32 %v1832
      %vm1920 = vweird.f32 %v1914
      %vm1921 = vmor %vm1919, %vm1920
      %v1922 = vsel %vm1921, %v1914, %v1918
      %v1923 = vand.u32 2147483647, %v1832
      %vm1924 = vcmp.eq.f32.partialorder %v1923, 8.507059e+37
      %v1925 = vand.u32 %v1832, 2147483648
      %v1926 = vor.u32 1.1754944e-38, %v1925
      %v1927 = vsel %vm1924, %v1926, %v1922
      %v1928 = vmul.f32 %v1796, %v1927
      %v1929 = vrcp.pop %v1835
      %v1930 = vmul.f32 %v1835, %v1929
      %v1931 = vsub.f32 1.0, %v1930
      %v1932 = vmul.f32 %v1929, %v1931
      %v1933 = vadd.f32 %v1929, %v1932
      %vm1934 = vweird.f32 %v1835
      %vm1935 = vweird.f32 %v1929
      %vm1936 = vmor %vm1934, %vm1935
      %v1937 = vsel %vm1936, %v1929, %v1933
      %v1938 = vand.u32 2147483647, %v1835
      %vm1939 = vcmp.eq.f32.partialorder %v1938, 8.507059e+37
      %v1940 = vand.u32 %v1835, 2147483648
      %v1941 = vor.u32 1.1754944e-38, %v1940
      %v1942 = vsel %vm1939, %v1941, %v1937
      %v1943 = vmul.f32 %v1798, %v1942
      %v1944 = vrcp.pop %v1838
      %v1945 = vmul.f32 %v1838, %v1944
      %v1946 = vsub.f32 1.0, %v1945
      %v1947 = vmul.f32 %v1944, %v1946
      %v1948 = vadd.f32 %v1944, %v1947
      %vm1949 = vweird.f32 %v1838
      %vm1950 = vweird.f32 %v1944
      %vm1951 = vmor %vm1949, %vm1950
      %v1952 = vsel %vm1951, %v1944, %v1948
      %v1953 = vand.u32 2147483647, %v1838
      %vm1954 = vcmp.eq.f32.partialorder %v1953, 8.507059e+37
      %v1955 = vand.u32 %v1838, 2147483648
      %v1956 = vor.u32 1.1754944e-38, %v1955
      %v1957 = vsel %vm1954, %v1956, %v1952
      %v1958 = vmul.f32 %v1800, %v1957
      %v1959 = vrcp.pop %v1841
      %v1960 = vmul.f32 %v1841, %v1959
      %v1961 = vsub.f32 1.0, %v1960
      %v1962 = vmul.f32 %v1959, %v1961
      %v1963 = vadd.f32 %v1959, %v1962
      %vm1964 = vweird.f32 %v1841
      %vm1965 = vweird.f32 %v1959
      %vm1966 = vmor %vm1964, %vm1965
      %v1967 = vsel %vm1966, %v1959, %v1963
      %v1968 = vand.u32 2147483647, %v1841
      %vm1969 = vcmp.eq.f32.partialorder %v1968, 8.507059e+37
      %v1970 = vand.u32 %v1841, 2147483648
      %v1971 = vor.u32 1.1754944e-38, %v1970
      %v1972 = vsel %vm1969, %v1971, %v1967
      %v1973 = vmul.f32 %v1802, %v1972
      %v1974 = vrcp.pop %v1844
      %v1975 = vmul.f32 %v1844, %v1974
      %v1976 = vsub.f32 1.0, %v1975
      %v1977 = vmul.f32 %v1974, %v1976
      %v1978 = vadd.f32 %v1974, %v1977
      %vm1979 = vweird.f32 %v1844
      %vm1980 = vweird.f32 %v1974
      %vm1981 = vmor %vm1979, %vm1980
      %v1982 = vsel %vm1981, %v1974, %v1978
      %v1983 = vand.u32 2147483647, %v1844
      %vm1984 = vcmp.eq.f32.partialorder %v1983, 8.507059e+37
      %v1985 = vand.u32 %v1844, 2147483648
      %v1986 = vor.u32 1.1754944e-38, %v1985
      %v1987 = vsel %vm1984, %v1986, %v1982
      %v1988 = vmul.f32 %v1804, %v1987
      %v1989 = vrcp.pop %v1847
      %v1990 = vmul.f32 %v1847, %v1989
      %v1991 = vsub.f32 1.0, %v1990
      %v1992 = vmul.f32 %v1989, %v1991
      %v1993 = vadd.f32 %v1989, %v1992
      %vm1994 = vweird.f32 %v1847
      %vm1995 = vweird.f32 %v1989
      %vm1996 = vmor %vm1994, %vm1995
      %v1997 = vsel %vm1996, %v1989, %v1993
      %v1998 = vand.u32 2147483647, %v1847
      %vm1999 = vcmp.eq.f32.partialorder %v1998, 8.507059e+37
      %v2000 = vand.u32 %v1847, 2147483648
      %v2001 = vor.u32 1.1754944e-38, %v2000
      %v2002 = vsel %vm1999, %v2001, %v1997
      %v2003 = vmul.f32 %v1806, %v2002
      %v2004 = vrcp.pop %v1850
      %v2005 = vmul.f32 %v1850, %v2004
      %v2006 = vsub.f32 1.0, %v2005
      %v2007 = vmul.f32 %v2004, %v2006
      %v2008 = vadd.f32 %v2004, %v2007
      %vm2009 = vweird.f32 %v1850
      %vm2010 = vweird.f32 %v2004
      %vm2011 = vmor %vm2009, %vm2010
      %v2012 = vsel %vm2011, %v2004, %v2008
      %v2013 = vand.u32 2147483647, %v1850
      %vm2014 = vcmp.eq.f32.partialorder %v2013, 8.507059e+37
      %v2015 = vand.u32 %v1850, 2147483648
      %v2016 = vor.u32 1.1754944e-38, %v2015
      %v2017 = vsel %vm2014, %v2016, %v2012
      %v2018 = vmul.f32 %v1808, %v2017
      %v2019 = vrcp.pop %v1853
      %v2020 = vmul.f32 %v1853, %v2019
      %v2021 = vsub.f32 1.0, %v2020
      %v2022 = vmul.f32 %v2019, %v2021
      %v2023 = vadd.f32 %v2019, %v2022
      %vm2024 = vweird.f32 %v1853
      %vm2025 = vweird.f32 %v2019
      %vm2026 = vmor %vm2024, %vm2025
      %v2027 = vsel %vm2026, %v2019, %v2023
      %v2028 = vand.u32 2147483647, %v1853
      %vm2029 = vcmp.eq.f32.partialorder %v2028, 8.507059e+37
      %v2030 = vand.u32 %v1853, 2147483648
      %v2031 = vor.u32 1.1754944e-38, %v2030
      %v2032 = vsel %vm2029, %v2031, %v2027
      %v2033 = vmul.f32 %v1810, %v2032
      %v2034 = vrcp.pop %v1856
      %v2035 = vmul.f32 %v1856, %v2034
      %v2036 = vsub.f32 1.0, %v2035
      %v2037 = vmul.f32 %v2034, %v2036
      %v2038 = vadd.f32 %v2034, %v2037
      %vm2039 = vweird.f32 %v1856
      %vm2040 = vweird.f32 %v2034
      %vm2041 = vmor %vm2039, %vm2040
      %v2042 = vsel %vm2041, %v2034, %v2038
      %v2043 = vand.u32 2147483647, %v1856
      %vm2044 = vcmp.eq.f32.partialorder %v2043, 8.507059e+37
      %v2045 = vand.u32 %v1856, 2147483648
      %v2046 = vor.u32 1.1754944e-38, %v2045
      %v2047 = vsel %vm2044, %v2046, %v2042
      %v2048 = vmul.f32 %v1812, %v2047
      %v2049 = vrcp.pop %v1859
      %v2050 = vmul.f32 %v1859, %v2049
      %v2051 = vsub.f32 1.0, %v2050
      %v2052 = vmul.f32 %v2049, %v2051
      %v2053 = vadd.f32 %v2049, %v2052
      %vm2054 = vweird.f32 %v1859
      %vm2055 = vweird.f32 %v2049
      %vm2056 = vmor %vm2054, %vm2055
      %v2057 = vsel %vm2056, %v2049, %v2053
      %v2058 = vand.u32 2147483647, %v1859
      %vm2059 = vcmp.eq.f32.partialorder %v2058, 8.507059e+37
      %v2060 = vand.u32 %v1859, 2147483648
      %v2061 = vor.u32 1.1754944e-38, %v2060
      %v2062 = vsel %vm2059, %v2061, %v2057
      %v2063 = vmul.f32 %v1814, %v2062
      %v2064 = vrcp.pop %v1862
      %v2065 = vmul.f32 %v1862, %v2064
      %v2066 = vsub.f32 1.0, %v2065
      %v2067 = vmul.f32 %v2064, %v2066
      %v2068 = vadd.f32 %v2064, %v2067
      %vm2069 = vweird.f32 %v1862
      %vm2070 = vweird.f32 %v2064
      %vm2071 = vmor %vm2069, %vm2070
      %v2072 = vsel %vm2071, %v2064, %v2068
      %v2073 = vand.u32 2147483647, %v1862
      %vm2074 = vcmp.eq.f32.partialorder %v2073, 8.507059e+37
      %v2075 = vand.u32 %v1862, 2147483648
      %v2076 = vor.u32 1.1754944e-38, %v2075
      %v2077 = vsel %vm2074, %v2076, %v2072
      %v2078 = vmul.f32 %v1816, %v2077
      %v2079 = vrcp.pop %v1865
      %v2080 = vmul.f32 %v1865, %v2079
      %v2081 = vsub.f32 1.0, %v2080
      %v2082 = vmul.f32 %v2079, %v2081
      %v2083 = vadd.f32 %v2079, %v2082
      %vm2084 = vweird.f32 %v1865
      %vm2085 = vweird.f32 %v2079
      %vm2086 = vmor %vm2084, %vm2085
      %v2087 = vsel %vm2086, %v2079, %v2083
      %v2088 = vand.u32 2147483647, %v1865
      %vm2089 = vcmp.eq.f32.partialorder %v2088, 8.507059e+37
      %v2090 = vand.u32 %v1865, 2147483648
      %v2091 = vor.u32 1.1754944e-38, %v2090
      %v2092 = vsel %vm2089, %v2091, %v2087
      %v2093 = vmul.f32 %v1818, %v2092
      %v2094 = vrcp.pop %v1868
      %v2095 = vmul.f32 %v1868, %v2094
      %v2096 = vsub.f32 1.0, %v2095
      %v2097 = vmul.f32 %v2094, %v2096
      %v2098 = vadd.f32 %v2094, %v2097
      %vm2099 = vweird.f32 %v1868
      %vm2100 = vweird.f32 %v2094
      %vm2101 = vmor %vm2099, %vm2100
      %v2102 = vsel %vm2101, %v2094, %v2098
      %v2103 = vand.u32 2147483647, %v1868
      %vm2104 = vcmp.eq.f32.partialorder %v2103, 8.507059e+37
      %v2105 = vand.u32 %v1868, 2147483648
      %v2106 = vor.u32 1.1754944e-38, %v2105
      %v2107 = vsel %vm2104, %v2106, %v2102
      %v2108 = vmul.f32 %v1820, %v2107
      %v2109 = vpack.c.bf16 %v1883, %v1883
      %v2110 = vpack.c.bf16 %v1898, %v1898
      %v2111 = vpack.c.bf16 %v1913, %v1913
      %v2112 = vpack.c.bf16 %v1928, %v1928
      %v2113 = vpack.c.bf16 %v1943, %v1943
      %v2114 = vpack.c.bf16 %v1958, %v1958
      %v2115 = vpack.c.bf16 %v1973, %v1973
      %v2116 = vpack.c.bf16 %v1988, %v1988
      %v2117 = vpack.c.bf16 %v2003, %v2003
      %v2118 = vpack.c.bf16 %v2018, %v2018
      %v2119 = vpack.c.bf16 %v2033, %v2033
      %v2120 = vpack.c.bf16 %v2048, %v2048
      %v2121 = vpack.c.bf16 %v2063, %v2063
      %v2122 = vpack.c.bf16 %v2078, %v2078
      %v2123 = vpack.c.bf16 %v2093, %v2093
      %v2124 = vpack.c.bf16 %v2108, %v2108
      %v2125 = vpack.c.bf16 %v777, %v777
      %v2126 = vpack.c.bf16 %v779, %v779
      %v2127 = vpack.c.bf16 %v782, %v782
      %v2128 = vpack.c.bf16 %v784, %v784
      %v2129 = vpack.c.bf16 %v787, %v787
      %v2130 = vpack.c.bf16 %v789, %v789
      %v2131 = vpack.c.bf16 %v792, %v792
      %v2132 = vpack.c.bf16 %v794, %v794
      %v2133 = vpack.c.bf16 %v797, %v797
      %v2134 = vpack.c.bf16 %v799, %v799
      %v2135 = vpack.c.bf16 %v802, %v802
      %v2136 = vpack.c.bf16 %v804, %v804
      %v2137 = vpack.c.bf16 %v807, %v807
      %v2138 = vpack.c.bf16 %v809, %v809
      %v2139 = vpack.c.bf16 %v812, %v812
      %v2140 = vpack.c.bf16 %v814, %v814
      %v2143 = vunpack.c.l.b16 %v2109
      %v2144 = vunpack.c.l.b16 %v2110
      %v2145 = vpack.c.b16 %v2144, %v2143
      %v2148 = vunpack.c.l.b16 %v2125
      %v2149 = vunpack.c.l.b16 %v2126
      %v2150 = vpack.c.b16 %v2149, %v2148
      %2151 = vrot.lane.b32.xlu0 %v2150, 64
      %v2152 = vpop.permute.xlu0 %2151
      %v2155 = vsel %vm1724, %v2145, 0
      %2157 = vmatpush.bf16.msra.mxu0 0
      %2158 = vmatpush.bf16.msra.mxu0 0
      %2159 = vmatpush.bf16.msra.mxu0 0
      %2160 = vmatpush.bf16.msra.mxu0 0
      %2161 = vmatpush.bf16.msra.mxu0 0
      %2162 = vmatpush.bf16.msra.mxu0 0
      %2163 = vmatpush.bf16.msra.mxu0 0
      %2164 = vmatpush.bf16.msra.mxu0 %v2152
      %2165 = vmatmul.bf16.gmra.mxu0 %v2155
      %v2166 = vpop.f32.mrf.mxu0
      %v2167 = vadd.f32 0.0, %v2166
      %v2168 = vpop.f32.mrf.mxu0
      %v2169 = vadd.f32 0.0, %v2168
      %2170 = vdwg.mxu0
      %v2173 = vunpack.c.l.b16 %v2111
      %v2174 = vunpack.c.l.b16 %v2112
      %v2175 = vpack.c.b16 %v2174, %v2173
      %v2178 = vunpack.c.l.b16 %v2127
      %v2179 = vunpack.c.l.b16 %v2128
      %v2180 = vpack.c.b16 %v2179, %v2178
      %2181 = vrot.lane.b32.xlu0 %v2180, 64
      %v2182 = vpop.permute.xlu0 %2181
      %v2185 = vsel %vm1724, %v2175, 0
      %2187 = vmatpush.bf16.msra.mxu0 0
      %2188 = vmatpush.bf16.msra.mxu0 0
      %2189 = vmatpush.bf16.msra.mxu0 0
      %2190 = vmatpush.bf16.msra.mxu0 0
      %2191 = vmatpush.bf16.msra.mxu0 0
      %2192 = vmatpush.bf16.msra.mxu0 0
      %2193 = vmatpush.bf16.msra.mxu0 0
      %2194 = vmatpush.bf16.msra.mxu0 %v2182
      %2195 = vmatmul.bf16.gmra.mxu0 %v2185
      %v2196 = vpop.f32.mrf.mxu0
      %v2197 = vadd.f32 0.0, %v2196
      %v2198 = vpop.f32.mrf.mxu0
      %v2199 = vadd.f32 0.0, %v2198
      %2200 = vdwg.mxu0
      %v2203 = vunpack.c.l.b16 %v2113
      %v2204 = vunpack.c.l.b16 %v2114
      %v2205 = vpack.c.b16 %v2204, %v2203
      %v2208 = vunpack.c.l.b16 %v2129
      %v2209 = vunpack.c.l.b16 %v2130
      %v2210 = vpack.c.b16 %v2209, %v2208
      %2211 = vrot.lane.b32.xlu0 %v2210, 64
      %v2212 = vpop.permute.xlu0 %2211
      %v2215 = vsel %vm1724, %v2205, 0
      %2217 = vmatpush.bf16.msra.mxu0 0
      %2218 = vmatpush.bf16.msra.mxu0 0
      %2219 = vmatpush.bf16.msra.mxu0 0
      %2220 = vmatpush.bf16.msra.mxu0 0
      %2221 = vmatpush.bf16.msra.mxu0 0
      %2222 = vmatpush.bf16.msra.mxu0 0
      %2223 = vmatpush.bf16.msra.mxu0 0
      %2224 = vmatpush.bf16.msra.mxu0 %v2212
      %2225 = vmatmul.bf16.gmra.mxu0 %v2215
      %v2226 = vpop.f32.mrf.mxu0
      %v2227 = vadd.f32 0.0, %v2226
      %v2228 = vpop.f32.mrf.mxu0
      %v2229 = vadd.f32 0.0, %v2228
      %2230 = vdwg.mxu0
      %v2233 = vunpack.c.l.b16 %v2115
      %v2234 = vunpack.c.l.b16 %v2116
      %v2235 = vpack.c.b16 %v2234, %v2233
      %v2238 = vunpack.c.l.b16 %v2131
      %v2239 = vunpack.c.l.b16 %v2132
      %v2240 = vpack.c.b16 %v2239, %v2238
      %2241 = vrot.lane.b32.xlu0 %v2240, 64
      %v2242 = vpop.permute.xlu0 %2241
      %v2245 = vsel %vm1724, %v2235, 0
      %2247 = vmatpush.bf16.msra.mxu0 0
      %2248 = vmatpush.bf16.msra.mxu0 0
      %2249 = vmatpush.bf16.msra.mxu0 0
      %2250 = vmatpush.bf16.msra.mxu0 0
      %2251 = vmatpush.bf16.msra.mxu0 0
      %2252 = vmatpush.bf16.msra.mxu0 0
      %2253 = vmatpush.bf16.msra.mxu0 0
      %2254 = vmatpush.bf16.msra.mxu0 %v2242
      %2255 = vmatmul.bf16.gmra.mxu0 %v2245
      %v2256 = vpop.f32.mrf.mxu0
      %v2257 = vadd.f32 0.0, %v2256
      %v2258 = vpop.f32.mrf.mxu0
      %v2259 = vadd.f32 0.0, %v2258
      %2260 = vdwg.mxu0
      %v2263 = vunpack.c.l.b16 %v2117
      %v2264 = vunpack.c.l.b16 %v2118
      %v2265 = vpack.c.b16 %v2264, %v2263
      %v2268 = vunpack.c.l.b16 %v2133
      %v2269 = vunpack.c.l.b16 %v2134
      %v2270 = vpack.c.b16 %v2269, %v2268
      %2271 = vrot.lane.b32.xlu0 %v2270, 64
      %v2272 = vpop.permute.xlu0 %2271
      %v2275 = vsel %vm1724, %v2265, 0
      %2277 = vmatpush.bf16.msra.mxu0 0
      %2278 = vmatpush.bf16.msra.mxu0 0
      %2279 = vmatpush.bf16.msra.mxu0 0
      %2280 = vmatpush.bf16.msra.mxu0 0
      %2281 = vmatpush.bf16.msra.mxu0 0
      %2282 = vmatpush.bf16.msra.mxu0 0
      %2283 = vmatpush.bf16.msra.mxu0 0
      %2284 = vmatpush.bf16.msra.mxu0 %v2272
      %2285 = vmatmul.bf16.gmra.mxu0 %v2275
      %v2286 = vpop.f32.mrf.mxu0
      %v2287 = vadd.f32 0.0, %v2286
      %v2288 = vpop.f32.mrf.mxu0
      %v2289 = vadd.f32 0.0, %v2288
      %2290 = vdwg.mxu0
      %v2293 = vunpack.c.l.b16 %v2119
      %v2294 = vunpack.c.l.b16 %v2120
      %v2295 = vpack.c.b16 %v2294, %v2293
      %v2298 = vunpack.c.l.b16 %v2135
      %v2299 = vunpack.c.l.b16 %v2136
      %v2300 = vpack.c.b16 %v2299, %v2298
      %2301 = vrot.lane.b32.xlu0 %v2300, 64
      %v2302 = vpop.permute.xlu0 %2301
      %v2305 = vsel %vm1724, %v2295, 0
      %2307 = vmatpush.bf16.msra.mxu0 0
      %2308 = vmatpush.bf16.msra.mxu0 0
      %2309 = vmatpush.bf16.msra.mxu0 0
      %2310 = vmatpush.bf16.msra.mxu0 0
      %2311 = vmatpush.bf16.msra.mxu0 0
      %2312 = vmatpush.bf16.msra.mxu0 0
      %2313 = vmatpush.bf16.msra.mxu0 0
      %2314 = vmatpush.bf16.msra.mxu0 %v2302
      %2315 = vmatmul.bf16.gmra.mxu0 %v2305
      %v2316 = vpop.f32.mrf.mxu0
      %v2317 = vadd.f32 0.0, %v2316
      %v2318 = vpop.f32.mrf.mxu0
      %v2319 = vadd.f32 0.0, %v2318
      %2320 = vdwg.mxu0
      %v2323 = vunpack.c.l.b16 %v2121
      %v2324 = vunpack.c.l.b16 %v2122
      %v2325 = vpack.c.b16 %v2324, %v2323
      %v2328 = vunpack.c.l.b16 %v2137
      %v2329 = vunpack.c.l.b16 %v2138
      %v2330 = vpack.c.b16 %v2329, %v2328
      %2331 = vrot.lane.b32.xlu0 %v2330, 64
      %v2332 = vpop.permute.xlu0 %2331
      %v2335 = vsel %vm1724, %v2325, 0
      %2337 = vmatpush.bf16.msra.mxu0 0
      %2338 = vmatpush.bf16.msra.mxu0 0
      %2339 = vmatpush.bf16.msra.mxu0 0
      %2340 = vmatpush.bf16.msra.mxu0 0
      %2341 = vmatpush.bf16.msra.mxu0 0
      %2342 = vmatpush.bf16.msra.mxu0 0
      %2343 = vmatpush.bf16.msra.mxu0 0
      %2344 = vmatpush.bf16.msra.mxu0 %v2332
      %2345 = vmatmul.bf16.gmra.mxu0 %v2335
      %v2346 = vpop.f32.mrf.mxu0
      %v2347 = vadd.f32 0.0, %v2346
      %v2348 = vpop.f32.mrf.mxu0
      %v2349 = vadd.f32 0.0, %v2348
      %2350 = vdwg.mxu0
      %v2353 = vunpack.c.l.b16 %v2123
      %v2354 = vunpack.c.l.b16 %v2124
      %v2355 = vpack.c.b16 %v2354, %v2353
      %v2358 = vunpack.c.l.b16 %v2139
      %v2359 = vunpack.c.l.b16 %v2140
      %v2360 = vpack.c.b16 %v2359, %v2358
      %2361 = vrot.lane.b32.xlu0 %v2360, 64
      %v2362 = vpop.permute.xlu0 %2361
      %v2365 = vsel %vm1724, %v2355, 0
      %2367 = vmatpush.bf16.msra.mxu0 0
      %2368 = vmatpush.bf16.msra.mxu0 0
      %2369 = vmatpush.bf16.msra.mxu0 0
      %2370 = vmatpush.bf16.msra.mxu0 0
      %2371 = vmatpush.bf16.msra.mxu0 0
      %2372 = vmatpush.bf16.msra.mxu0 0
      %2373 = vmatpush.bf16.msra.mxu0 0
      %2374 = vmatpush.bf16.msra.mxu0 %v2362
      %2375 = vmatmul.bf16.gmra.mxu0 %v2365
      %v2376 = vpop.f32.mrf.mxu0
      %v2377 = vadd.f32 0.0, %v2376
      %v2378 = vpop.f32.mrf.mxu0
      %v2379 = vadd.f32 0.0, %v2378
      %2380 = vdwg.mxu0
      %2381 = vrot.lane.b32.xlu0 %v1471, 120
      %v2382 = vpop.permute.xlu0 %2381
      %2383 = vrot.lane.b32.xlu0 %v1476, 88
      %v2384 = vpop.permute.xlu0 %2383
      %v2386 = vsel %vm1479, %v2382, 0
      %v2389 = vsel %vm1479, %v2384, 0
      %2391 = vmatpush.bf16.xpose.msra.mxu0 0
      %2392 = vmatpush.bf16.xpose.msra.mxu0 0
      %2393 = vmatpush.bf16.xpose.msra.mxu0 0
      %2394 = vmatpush.bf16.xpose.msra.mxu0 0
      %2395 = vmatpush.bf16.xpose.msra.mxu0 0
      %2396 = vmatpush.bf16.xpose.msra.mxu0 0
      %2397 = vmatpush.bf16.xpose.msra.mxu0 0
      %2398 = vmatpush.bf16.xpose.msra.mxu0 %v2389
      %2399 = vmatmul.bf16.gmra.mxu0 %v2386
      %v2400 = vpop.f32.mrf.mxu0
      %v2401 = vadd.f32 0.0, %v2400
      %v2402 = vpop.f32.mrf.mxu0
      %v2403 = vadd.f32 0.0, %v2402
      %2404 = vdwg.mxu0
      %2405 = vrot.lane.b32.xlu0 %v1504, 120
      %v2406 = vpop.permute.xlu0 %2405
      %2407 = vrot.lane.b32.xlu0 %v1509, 88
      %v2408 = vpop.permute.xlu0 %2407
      %v2410 = vsel %vm1479, %v2406, 0
      %v2413 = vsel %vm1479, %v2408, 0
      %2415 = vmatpush.bf16.xpose.msra.mxu0 0
      %2416 = vmatpush.bf16.xpose.msra.mxu0 0
      %2417 = vmatpush.bf16.xpose.msra.mxu0 0
      %2418 = vmatpush.bf16.xpose.msra.mxu0 0
      %2419 = vmatpush.bf16.xpose.msra.mxu0 0
      %2420 = vmatpush.bf16.xpose.msra.mxu0 0
      %2421 = vmatpush.bf16.xpose.msra.mxu0 0
      %2422 = vmatpush.bf16.xpose.msra.mxu0 %v2413
      %2423 = vmatmul.bf16.gmra.mxu0 %v2410
      %v2424 = vpop.f32.mrf.mxu0
      %v2425 = vadd.f32 0.0, %v2424
      %v2426 = vpop.f32.mrf.mxu0
      %v2427 = vadd.f32 0.0, %v2426
      %2428 = vdwg.mxu0
      %2429 = vrot.lane.b32.xlu0 %v1536, 120
      %v2430 = vpop.permute.xlu0 %2429
      %2431 = vrot.lane.b32.xlu0 %v1541, 88
      %v2432 = vpop.permute.xlu0 %2431
      %v2434 = vsel %vm1479, %v2430, 0
      %v2437 = vsel %vm1479, %v2432, 0
      %2439 = vmatpush.bf16.xpose.msra.mxu0 0
      %2440 = vmatpush.bf16.xpose.msra.mxu0 0
      %2441 = vmatpush.bf16.xpose.msra.mxu0 0
      %2442 = vmatpush.bf16.xpose.msra.mxu0 0
      %2443 = vmatpush.bf16.xpose.msra.mxu0 0
      %2444 = vmatpush.bf16.xpose.msra.mxu0 0
      %2445 = vmatpush.bf16.xpose.msra.mxu0 0
      %2446 = vmatpush.bf16.xpose.msra.mxu0 %v2437
      %2447 = vmatmul.bf16.gmra.mxu0 %v2434
      %v2448 = vpop.f32.mrf.mxu0
      %v2449 = vadd.f32 0.0, %v2448
      %v2450 = vpop.f32.mrf.mxu0
      %v2451 = vadd.f32 0.0, %v2450
      %2452 = vdwg.mxu0
      %2453 = vrot.lane.b32.xlu0 %v1568, 120
      %v2454 = vpop.permute.xlu0 %2453
      %2455 = vrot.lane.b32.xlu0 %v1573, 88
      %v2456 = vpop.permute.xlu0 %2455
      %v2458 = vsel %vm1479, %v2454, 0
      %v2461 = vsel %vm1479, %v2456, 0
      %2463 = vmatpush.bf16.xpose.msra.mxu0 0
      %2464 = vmatpush.bf16.xpose.msra.mxu0 0
      %2465 = vmatpush.bf16.xpose.msra.mxu0 0
      %2466 = vmatpush.bf16.xpose.msra.mxu0 0
      %2467 = vmatpush.bf16.xpose.msra.mxu0 0
      %2468 = vmatpush.bf16.xpose.msra.mxu0 0
      %2469 = vmatpush.bf16.xpose.msra.mxu0 0
      %2470 = vmatpush.bf16.xpose.msra.mxu0 %v2461
      %2471 = vmatmul.bf16.gmra.mxu0 %v2458
      %v2472 = vpop.f32.mrf.mxu0
      %v2473 = vadd.f32 0.0, %v2472
      %v2474 = vpop.f32.mrf.mxu0
      %v2475 = vadd.f32 0.0, %v2474
      %2476 = vdwg.mxu0
      %2477 = vrot.lane.b32.xlu0 %v1600, 120
      %v2478 = vpop.permute.xlu0 %2477
      %2479 = vrot.lane.b32.xlu0 %v1605, 88
      %v2480 = vpop.permute.xlu0 %2479
      %v2482 = vsel %vm1479, %v2478, 0
      %v2485 = vsel %vm1479, %v2480, 0
      %2487 = vmatpush.bf16.xpose.msra.mxu0 0
      %2488 = vmatpush.bf16.xpose.msra.mxu0 0
      %2489 = vmatpush.bf16.xpose.msra.mxu0 0
      %2490 = vmatpush.bf16.xpose.msra.mxu0 0
      %2491 = vmatpush.bf16.xpose.msra.mxu0 0
      %2492 = vmatpush.bf16.xpose.msra.mxu0 0
      %2493 = vmatpush.bf16.xpose.msra.mxu0 0
      %2494 = vmatpush.bf16.xpose.msra.mxu0 %v2485
      %2495 = vmatmul.bf16.gmra.mxu0 %v2482
      %v2496 = vpop.f32.mrf.mxu0
      %v2497 = vadd.f32 0.0, %v2496
      %v2498 = vpop.f32.mrf.mxu0
      %v2499 = vadd.f32 0.0, %v2498
      %2500 = vdwg.mxu0
      %2501 = vrot.lane.b32.xlu0 %v1632, 120
      %v2502 = vpop.permute.xlu0 %2501
      %2503 = vrot.lane.b32.xlu0 %v1637, 88
      %v2504 = vpop.permute.xlu0 %2503
      %v2506 = vsel %vm1479, %v2502, 0
      %v2509 = vsel %vm1479, %v2504, 0
      %2511 = vmatpush.bf16.xpose.msra.mxu0 0
      %2512 = vmatpush.bf16.xpose.msra.mxu0 0
      %2513 = vmatpush.bf16.xpose.msra.mxu0 0
      %2514 = vmatpush.bf16.xpose.msra.mxu0 0
      %2515 = vmatpush.bf16.xpose.msra.mxu0 0
      %2516 = vmatpush.bf16.xpose.msra.mxu0 0
      %2517 = vmatpush.bf16.xpose.msra.mxu0 0
      %2518 = vmatpush.bf16.xpose.msra.mxu0 %v2509
      %2519 = vmatmul.bf16.gmra.mxu0 %v2506
      %v2520 = vpop.f32.mrf.mxu0
      %v2521 = vadd.f32 0.0, %v2520
      %v2522 = vpop.f32.mrf.mxu0
      %v2523 = vadd.f32 0.0, %v2522
      %2524 = vdwg.mxu0
      %2525 = vrot.lane.b32.xlu0 %v1664, 120
      %v2526 = vpop.permute.xlu0 %2525
      %2527 = vrot.lane.b32.xlu0 %v1669, 88
      %v2528 = vpop.permute.xlu0 %2527
      %v2530 = vsel %vm1479, %v2526, 0
      %v2533 = vsel %vm1479, %v2528, 0
      %2535 = vmatpush.bf16.xpose.msra.mxu0 0
      %2536 = vmatpush.bf16.xpose.msra.mxu0 0
      %2537 = vmatpush.bf16.xpose.msra.mxu0 0
      %2538 = vmatpush.bf16.xpose.msra.mxu0 0
      %2539 = vmatpush.bf16.xpose.msra.mxu0 0
      %2540 = vmatpush.bf16.xpose.msra.mxu0 0
      %2541 = vmatpush.bf16.xpose.msra.mxu0 0
      %2542 = vmatpush.bf16.xpose.msra.mxu0 %v2533
      %2543 = vmatmul.bf16.gmra.mxu0 %v2530
      %v2544 = vpop.f32.mrf.mxu0
      %v2545 = vadd.f32 0.0, %v2544
      %v2546 = vpop.f32.mrf.mxu0
      %v2547 = vadd.f32 0.0, %v2546
      %2548 = vdwg.mxu0
      %2549 = vrot.lane.b32.xlu0 %v1696, 120
      %v2550 = vpop.permute.xlu0 %2549
      %2551 = vrot.lane.b32.xlu0 %v1701, 88
      %v2552 = vpop.permute.xlu0 %2551
      %v2554 = vsel %vm1479, %v2550, 0
      %v2557 = vsel %vm1479, %v2552, 0
      %2559 = vmatpush.bf16.xpose.msra.mxu0 0
      %2560 = vmatpush.bf16.xpose.msra.mxu0 0
      %2561 = vmatpush.bf16.xpose.msra.mxu0 0
      %2562 = vmatpush.bf16.xpose.msra.mxu0 0
      %2563 = vmatpush.bf16.xpose.msra.mxu0 0
      %2564 = vmatpush.bf16.xpose.msra.mxu0 0
      %2565 = vmatpush.bf16.xpose.msra.mxu0 0
      %2566 = vmatpush.bf16.xpose.msra.mxu0 %v2557
      %2567 = vmatmul.bf16.gmra.mxu0 %v2554
      %v2568 = vpop.f32.mrf.mxu0
      %v2569 = vadd.f32 0.0, %v2568
      %v2570 = vpop.f32.mrf.mxu0
      %v2571 = vadd.f32 0.0, %v2570
      %2572 = vdwg.mxu0
      %v2573 = vsel %vm1724, %v2401, -inf
      %2574 = vmax.xlane.f32.xlu0 %v2573
      %v2575 = vpop.xlane.xlu0 %2574
      %v2576 = vsel %vm1724, %v2403, -inf
      %2577 = vmax.xlane.f32.xlu0 %v2576
      %v2578 = vpop.xlane.xlu0 %2577
      %v2579 = vsel %vm1724, %v2425, -inf
      %2580 = vmax.xlane.f32.xlu0 %v2579
      %v2581 = vpop.xlane.xlu0 %2580
      %v2582 = vsel %vm1724, %v2427, -inf
      %2583 = vmax.xlane.f32.xlu0 %v2582
      %v2584 = vpop.xlane.xlu0 %2583
      %v2585 = vsel %vm1724, %v2449, -inf
      %2586 = vmax.xlane.f32.xlu0 %v2585
      %v2587 = vpop.xlane.xlu0 %2586
      %v2588 = vsel %vm1724, %v2451, -inf
      %2589 = vmax.xlane.f32.xlu0 %v2588
      %v2590 = vpop.xlane.xlu0 %2589
      %v2591 = vsel %vm1724, %v2473, -inf
      %2592 = vmax.xlane.f32.xlu0 %v2591
      %v2593 = vpop.xlane.xlu0 %2592
      %v2594 = vsel %vm1724, %v2475, -inf
      %2595 = vmax.xlane.f32.xlu0 %v2594
      %v2596 = vpop.xlane.xlu0 %2595
      %v2597 = vsel %vm1724, %v2497, -inf
      %2598 = vmax.xlane.f32.xlu0 %v2597
      %v2599 = vpop.xlane.xlu0 %2598
      %v2600 = vsel %vm1724, %v2499, -inf
      %2601 = vmax.xlane.f32.xlu0 %v2600
      %v2602 = vpop.xlane.xlu0 %2601
      %v2603 = vsel %vm1724, %v2521, -inf
      %2604 = vmax.xlane.f32.xlu0 %v2603
      %v2605 = vpop.xlane.xlu0 %2604
      %v2606 = vsel %vm1724, %v2523, -inf
      %2607 = vmax.xlane.f32.xlu0 %v2606
      %v2608 = vpop.xlane.xlu0 %2607
      %v2609 = vsel %vm1724, %v2545, -inf
      %2610 = vmax.xlane.f32.xlu0 %v2609
      %v2611 = vpop.xlane.xlu0 %2610
      %v2612 = vsel %vm1724, %v2547, -inf
      %2613 = vmax.xlane.f32.xlu0 %v2612
      %v2614 = vpop.xlane.xlu0 %2613
      %v2615 = vsel %vm1724, %v2569, -inf
      %2616 = vmax.xlane.f32.xlu0 %v2615
      %v2617 = vpop.xlane.xlu0 %2616
      %v2618 = vsel %vm1724, %v2571, -inf
      %2619 = vmax.xlane.f32.xlu0 %v2618
      %v2620 = vpop.xlane.xlu0 %2619
      %v2621 = vsub.f32 %v2401, %v2575
      %v2622 = vsub.f32 %v2403, %v2578
      %v2623 = vsub.f32 %v2425, %v2581
      %v2624 = vsub.f32 %v2427, %v2584
      %v2625 = vsub.f32 %v2449, %v2587
      %v2626 = vsub.f32 %v2451, %v2590
      %v2627 = vsub.f32 %v2473, %v2593
      %v2628 = vsub.f32 %v2475, %v2596
      %v2629 = vsub.f32 %v2497, %v2599
      %v2630 = vsub.f32 %v2499, %v2602
      %v2631 = vsub.f32 %v2521, %v2605
      %v2632 = vsub.f32 %v2523, %v2608
      %v2633 = vsub.f32 %v2545, %v2611
      %v2634 = vsub.f32 %v2547, %v2614
      %v2635 = vsub.f32 %v2569, %v2617
      %v2636 = vsub.f32 %v2571, %v2620
      %v2637 = vmul.f32 %v2621, 1.442695
      %v2638 = vpow.pop %v2637
      %v2639 = vmul.f32 %v2622, 1.442695
      %v2640 = vpow.pop %v2639
      %v2641 = vmul.f32 %v2623, 1.442695
      %v2642 = vpow.pop %v2641
      %v2643 = vmul.f32 %v2624, 1.442695
      %v2644 = vpow.pop %v2643
      %v2645 = vmul.f32 %v2625, 1.442695
      %v2646 = vpow.pop %v2645
      %v2647 = vmul.f32 %v2626, 1.442695
      %v2648 = vpow.pop %v2647
      %v2649 = vmul.f32 %v2627, 1.442695
      %v2650 = vpow.pop %v2649
      %v2651 = vmul.f32 %v2628, 1.442695
      %v2652 = vpow.pop %v2651
      %v2653 = vmul.f32 %v2629, 1.442695
      %v2654 = vpow.pop %v2653
      %v2655 = vmul.f32 %v2630, 1.442695
      %v2656 = vpow.pop %v2655
      %v2657 = vmul.f32 %v2631, 1.442695
      %v2658 = vpow.pop %v2657
      %v2659 = vmul.f32 %v2632, 1.442695
      %v2660 = vpow.pop %v2659
      %v2661 = vmul.f32 %v2633, 1.442695
      %v2662 = vpow.pop %v2661
      %v2663 = vmul.f32 %v2634, 1.442695
      %v2664 = vpow.pop %v2663
      %v2665 = vmul.f32 %v2635, 1.442695
      %v2666 = vpow.pop %v2665
      %v2667 = vmul.f32 %v2636, 1.442695
      %v2668 = vpow.pop %v2667
      %v2669 = vsel %vm1724, %v2638, 0.0
      %2670 = vadd.xlane.f32.xlu0 %v2669
      %v2671 = vpop.xlane.xlu0 %2670
      %v2672 = vsel %vm1724, %v2640, 0.0
      %2673 = vadd.xlane.f32.xlu0 %v2672
      %v2674 = vpop.xlane.xlu0 %2673
      %v2675 = vsel %vm1724, %v2642, 0.0
      %2676 = vadd.xlane.f32.xlu0 %v2675
      %v2677 = vpop.xlane.xlu0 %2676
      %v2678 = vsel %vm1724, %v2644, 0.0
      %2679 = vadd.xlane.f32.xlu0 %v2678
      %v2680 = vpop.xlane.xlu0 %2679
      %v2681 = vsel %vm1724, %v2646, 0.0
      %2682 = vadd.xlane.f32.xlu0 %v2681
      %v2683 = vpop.xlane.xlu0 %2682
      %v2684 = vsel %vm1724, %v2648, 0.0
      %2685 = vadd.xlane.f32.xlu0 %v2684
      %v2686 = vpop.xlane.xlu0 %2685
      %v2687 = vsel %vm1724, %v2650, 0.0
      %2688 = vadd.xlane.f32.xlu0 %v2687
      %v2689 = vpop.xlane.xlu0 %2688
      %v2690 = vsel %vm1724, %v2652, 0.0
      %2691 = vadd.xlane.f32.xlu0 %v2690
      %v2692 = vpop.xlane.xlu0 %2691
      %v2693 = vsel %vm1724, %v2654, 0.0
      %2694 = vadd.xlane.f32.xlu0 %v2693
      %v2695 = vpop.xlane.xlu0 %2694
      %v2696 = vsel %vm1724, %v2656, 0.0
      %2697 = vadd.xlane.f32.xlu0 %v2696
      %v2698 = vpop.xlane.xlu0 %2697
      %v2699 = vsel %vm1724, %v2658, 0.0
      %2700 = vadd.xlane.f32.xlu0 %v2699
      %v2701 = vpop.xlane.xlu0 %2700
      %v2702 = vsel %vm1724, %v2660, 0.0
      %2703 = vadd.xlane.f32.xlu0 %v2702
      %v2704 = vpop.xlane.xlu0 %2703
      %v2705 = vsel %vm1724, %v2662, 0.0
      %2706 = vadd.xlane.f32.xlu0 %v2705
      %v2707 = vpop.xlane.xlu0 %2706
      %v2708 = vsel %vm1724, %v2664, 0.0
      %2709 = vadd.xlane.f32.xlu0 %v2708
      %v2710 = vpop.xlane.xlu0 %2709
      %v2711 = vsel %vm1724, %v2666, 0.0
      %2712 = vadd.xlane.f32.xlu0 %v2711
      %v2713 = vpop.xlane.xlu0 %2712
      %v2714 = vsel %vm1724, %v2668, 0.0
      %2715 = vadd.xlane.f32.xlu0 %v2714
      %v2716 = vpop.xlane.xlu0 %2715
      %v2717 = vrcp.pop %v2671
      %v2718 = vmul.f32 %v2671, %v2717
      %v2719 = vsub.f32 1.0, %v2718
      %v2720 = vmul.f32 %v2717, %v2719
      %v2721 = vadd.f32 %v2717, %v2720
      %vm2722 = vweird.f32 %v2671
      %vm2723 = vweird.f32 %v2717
      %vm2724 = vmor %vm2722, %vm2723
      %v2725 = vsel %vm2724, %v2717, %v2721
      %v2726 = vand.u32 2147483647, %v2671
      %vm2727 = vcmp.eq.f32.partialorder %v2726, 8.507059e+37
      %v2728 = vand.u32 %v2671, 2147483648
      %v2729 = vor.u32 1.1754944e-38, %v2728
      %v2730 = vsel %vm2727, %v2729, %v2725
      %v2731 = vmul.f32 %v2638, %v2730
      %v2732 = vrcp.pop %v2674
      %v2733 = vmul.f32 %v2674, %v2732
      %v2734 = vsub.f32 1.0, %v2733
      %v2735 = vmul.f32 %v2732, %v2734
      %v2736 = vadd.f32 %v2732, %v2735
      %vm2737 = vweird.f32 %v2674
      %vm2738 = vweird.f32 %v2732
      %vm2739 = vmor %vm2737, %vm2738
      %v2740 = vsel %vm2739, %v2732, %v2736
      %v2741 = vand.u32 2147483647, %v2674
      %vm2742 = vcmp.eq.f32.partialorder %v2741, 8.507059e+37
      %v2743 = vand.u32 %v2674, 2147483648
      %v2744 = vor.u32 1.1754944e-38, %v2743
      %v2745 = vsel %vm2742, %v2744, %v2740
      %v2746 = vmul.f32 %v2640, %v2745
      %v2747 = vrcp.pop %v2677
      %v2748 = vmul.f32 %v2677, %v2747
      %v2749 = vsub.f32 1.0, %v2748
      %v2750 = vmul.f32 %v2747, %v2749
      %v2751 = vadd.f32 %v2747, %v2750
      %vm2752 = vweird.f32 %v2677
      %vm2753 = vweird.f32 %v2747
      %vm2754 = vmor %vm2752, %vm2753
      %v2755 = vsel %vm2754, %v2747, %v2751
      %v2756 = vand.u32 2147483647, %v2677
      %vm2757 = vcmp.eq.f32.partialorder %v2756, 8.507059e+37
      %v2758 = vand.u32 %v2677, 2147483648
      %v2759 = vor.u32 1.1754944e-38, %v2758
      %v2760 = vsel %vm2757, %v2759, %v2755
      %v2761 = vmul.f32 %v2642, %v2760
      %v2762 = vrcp.pop %v2680
      %v2763 = vmul.f32 %v2680, %v2762
      %v2764 = vsub.f32 1.0, %v2763
      %v2765 = vmul.f32 %v2762, %v2764
      %v2766 = vadd.f32 %v2762, %v2765
      %vm2767 = vweird.f32 %v2680
      %vm2768 = vweird.f32 %v2762
      %vm2769 = vmor %vm2767, %vm2768
      %v2770 = vsel %vm2769, %v2762, %v2766
      %v2771 = vand.u32 2147483647, %v2680
      %vm2772 = vcmp.eq.f32.partialorder %v2771, 8.507059e+37
      %v2773 = vand.u32 %v2680, 2147483648
      %v2774 = vor.u32 1.1754944e-38, %v2773
      %v2775 = vsel %vm2772, %v2774, %v2770
      %v2776 = vmul.f32 %v2644, %v2775
      %v2777 = vrcp.pop %v2683
      %v2778 = vmul.f32 %v2683, %v2777
      %v2779 = vsub.f32 1.0, %v2778
      %v2780 = vmul.f32 %v2777, %v2779
      %v2781 = vadd.f32 %v2777, %v2780
      %vm2782 = vweird.f32 %v2683
      %vm2783 = vweird.f32 %v2777
      %vm2784 = vmor %vm2782, %vm2783
      %v2785 = vsel %vm2784, %v2777, %v2781
      %v2786 = vand.u32 2147483647, %v2683
      %vm2787 = vcmp.eq.f32.partialorder %v2786, 8.507059e+37
      %v2788 = vand.u32 %v2683, 2147483648
      %v2789 = vor.u32 1.1754944e-38, %v2788
      %v2790 = vsel %vm2787, %v2789, %v2785
      %v2791 = vmul.f32 %v2646, %v2790
      %v2792 = vrcp.pop %v2686
      %v2793 = vmul.f32 %v2686, %v2792
      %v2794 = vsub.f32 1.0, %v2793
      %v2795 = vmul.f32 %v2792, %v2794
      %v2796 = vadd.f32 %v2792, %v2795
      %vm2797 = vweird.f32 %v2686
      %vm2798 = vweird.f32 %v2792
      %vm2799 = vmor %vm2797, %vm2798
      %v2800 = vsel %vm2799, %v2792, %v2796
      %v2801 = vand.u32 2147483647, %v2686
      %vm2802 = vcmp.eq.f32.partialorder %v2801, 8.507059e+37
      %v2803 = vand.u32 %v2686, 2147483648
      %v2804 = vor.u32 1.1754944e-38, %v2803
      %v2805 = vsel %vm2802, %v2804, %v2800
      %v2806 = vmul.f32 %v2648, %v2805
      %v2807 = vrcp.pop %v2689
      %v2808 = vmul.f32 %v2689, %v2807
      %v2809 = vsub.f32 1.0, %v2808
      %v2810 = vmul.f32 %v2807, %v2809
      %v2811 = vadd.f32 %v2807, %v2810
      %vm2812 = vweird.f32 %v2689
      %vm2813 = vweird.f32 %v2807
      %vm2814 = vmor %vm2812, %vm2813
      %v2815 = vsel %vm2814, %v2807, %v2811
      %v2816 = vand.u32 2147483647, %v2689
      %vm2817 = vcmp.eq.f32.partialorder %v2816, 8.507059e+37
      %v2818 = vand.u32 %v2689, 2147483648
      %v2819 = vor.u32 1.1754944e-38, %v2818
      %v2820 = vsel %vm2817, %v2819, %v2815
      %v2821 = vmul.f32 %v2650, %v2820
      %v2822 = vrcp.pop %v2692
      %v2823 = vmul.f32 %v2692, %v2822
      %v2824 = vsub.f32 1.0, %v2823
      %v2825 = vmul.f32 %v2822, %v2824
      %v2826 = vadd.f32 %v2822, %v2825
      %vm2827 = vweird.f32 %v2692
      %vm2828 = vweird.f32 %v2822
      %vm2829 = vmor %vm2827, %vm2828
      %v2830 = vsel %vm2829, %v2822, %v2826
      %v2831 = vand.u32 2147483647, %v2692
      %vm2832 = vcmp.eq.f32.partialorder %v2831, 8.507059e+37
      %v2833 = vand.u32 %v2692, 2147483648
      %v2834 = vor.u32 1.1754944e-38, %v2833
      %v2835 = vsel %vm2832, %v2834, %v2830
      %v2836 = vmul.f32 %v2652, %v2835
      %v2837 = vrcp.pop %v2695
      %v2838 = vmul.f32 %v2695, %v2837
      %v2839 = vsub.f32 1.0, %v2838
      %v2840 = vmul.f32 %v2837, %v2839
      %v2841 = vadd.f32 %v2837, %v2840
      %vm2842 = vweird.f32 %v2695
      %vm2843 = vweird.f32 %v2837
      %vm2844 = vmor %vm2842, %vm2843
      %v2845 = vsel %vm2844, %v2837, %v2841
      %v2846 = vand.u32 2147483647, %v2695
      %vm2847 = vcmp.eq.f32.partialorder %v2846, 8.507059e+37
      %v2848 = vand.u32 %v2695, 2147483648
      %v2849 = vor.u32 1.1754944e-38, %v2848
      %v2850 = vsel %vm2847, %v2849, %v2845
      %v2851 = vmul.f32 %v2654, %v2850
      %v2852 = vrcp.pop %v2698
      %v2853 = vmul.f32 %v2698, %v2852
      %v2854 = vsub.f32 1.0, %v2853
      %v2855 = vmul.f32 %v2852, %v2854
      %v2856 = vadd.f32 %v2852, %v2855
      %vm2857 = vweird.f32 %v2698
      %vm2858 = vweird.f32 %v2852
      %vm2859 = vmor %vm2857, %vm2858
      %v2860 = vsel %vm2859, %v2852, %v2856
      %v2861 = vand.u32 2147483647, %v2698
      %vm2862 = vcmp.eq.f32.partialorder %v2861, 8.507059e+37
      %v2863 = vand.u32 %v2698, 2147483648
      %v2864 = vor.u32 1.1754944e-38, %v2863
      %v2865 = vsel %vm2862, %v2864, %v2860
      %v2866 = vmul.f32 %v2656, %v2865
      %v2867 = vrcp.pop %v2701
      %v2868 = vmul.f32 %v2701, %v2867
      %v2869 = vsub.f32 1.0, %v2868
      %v2870 = vmul.f32 %v2867, %v2869
      %v2871 = vadd.f32 %v2867, %v2870
      %vm2872 = vweird.f32 %v2701
      %vm2873 = vweird.f32 %v2867
      %vm2874 = vmor %vm2872, %vm2873
      %v2875 = vsel %vm2874, %v2867, %v2871
      %v2876 = vand.u32 2147483647, %v2701
      %vm2877 = vcmp.eq.f32.partialorder %v2876, 8.507059e+37
      %v2878 = vand.u32 %v2701, 2147483648
      %v2879 = vor.u32 1.1754944e-38, %v2878
      %v2880 = vsel %vm2877, %v2879, %v2875
      %v2881 = vmul.f32 %v2658, %v2880
      %v2882 = vrcp.pop %v2704
      %v2883 = vmul.f32 %v2704, %v2882
      %v2884 = vsub.f32 1.0, %v2883
      %v2885 = vmul.f32 %v2882, %v2884
      %v2886 = vadd.f32 %v2882, %v2885
      %vm2887 = vweird.f32 %v2704
      %vm2888 = vweird.f32 %v2882
      %vm2889 = vmor %vm2887, %vm2888
      %v2890 = vsel %vm2889, %v2882, %v2886
      %v2891 = vand.u32 2147483647, %v2704
      %vm2892 = vcmp.eq.f32.partialorder %v2891, 8.507059e+37
      %v2893 = vand.u32 %v2704, 2147483648
      %v2894 = vor.u32 1.1754944e-38, %v2893
      %v2895 = vsel %vm2892, %v2894, %v2890
      %v2896 = vmul.f32 %v2660, %v2895
      %v2897 = vrcp.pop %v2707
      %v2898 = vmul.f32 %v2707, %v2897
      %v2899 = vsub.f32 1.0, %v2898
      %v2900 = vmul.f32 %v2897, %v2899
      %v2901 = vadd.f32 %v2897, %v2900
      %vm2902 = vweird.f32 %v2707
      %vm2903 = vweird.f32 %v2897
      %vm2904 = vmor %vm2902, %vm2903
      %v2905 = vsel %vm2904, %v2897, %v2901
      %v2906 = vand.u32 2147483647, %v2707
      %vm2907 = vcmp.eq.f32.partialorder %v2906, 8.507059e+37
      %v2908 = vand.u32 %v2707, 2147483648
      %v2909 = vor.u32 1.1754944e-38, %v2908
      %v2910 = vsel %vm2907, %v2909, %v2905
      %v2911 = vmul.f32 %v2662, %v2910
      %v2912 = vrcp.pop %v2710
      %v2913 = vmul.f32 %v2710, %v2912
      %v2914 = vsub.f32 1.0, %v2913
      %v2915 = vmul.f32 %v2912, %v2914
      %v2916 = vadd.f32 %v2912, %v2915
      %vm2917 = vweird.f32 %v2710
      %vm2918 = vweird.f32 %v2912
      %vm2919 = vmor %vm2917, %vm2918
      %v2920 = vsel %vm2919, %v2912, %v2916
      %v2921 = vand.u32 2147483647, %v2710
      %vm2922 = vcmp.eq.f32.partialorder %v2921, 8.507059e+37
      %v2923 = vand.u32 %v2710, 2147483648
      %v2924 = vor.u32 1.1754944e-38, %v2923
      %v2925 = vsel %vm2922, %v2924, %v2920
      %v2926 = vmul.f32 %v2664, %v2925
      %v2927 = vrcp.pop %v2713
      %v2928 = vmul.f32 %v2713, %v2927
      %v2929 = vsub.f32 1.0, %v2928
      %v2930 = vmul.f32 %v2927, %v2929
      %v2931 = vadd.f32 %v2927, %v2930
      %vm2932 = vweird.f32 %v2713
      %vm2933 = vweird.f32 %v2927
      %vm2934 = vmor %vm2932, %vm2933
      %v2935 = vsel %vm2934, %v2927, %v2931
      %v2936 = vand.u32 2147483647, %v2713
      %vm2937 = vcmp.eq.f32.partialorder %v2936, 8.507059e+37
      %v2938 = vand.u32 %v2713, 2147483648
      %v2939 = vor.u32 1.1754944e-38, %v2938
      %v2940 = vsel %vm2937, %v2939, %v2935
      %v2941 = vmul.f32 %v2666, %v2940
      %v2942 = vrcp.pop %v2716
      %v2943 = vmul.f32 %v2716, %v2942
      %v2944 = vsub.f32 1.0, %v2943
      %v2945 = vmul.f32 %v2942, %v2944
      %v2946 = vadd.f32 %v2942, %v2945
      %vm2947 = vweird.f32 %v2716
      %vm2948 = vweird.f32 %v2942
      %vm2949 = vmor %vm2947, %vm2948
      %v2950 = vsel %vm2949, %v2942, %v2946
      %v2951 = vand.u32 2147483647, %v2716
      %vm2952 = vcmp.eq.f32.partialorder %v2951, 8.507059e+37
      %v2953 = vand.u32 %v2716, 2147483648
      %v2954 = vor.u32 1.1754944e-38, %v2953
      %v2955 = vsel %vm2952, %v2954, %v2950
      %v2956 = vmul.f32 %v2668, %v2955
      %v2957 = vpack.c.bf16 %v2731, %v2731
      %v2958 = vpack.c.bf16 %v2746, %v2746
      %v2959 = vpack.c.bf16 %v2761, %v2761
      %v2960 = vpack.c.bf16 %v2776, %v2776
      %v2961 = vpack.c.bf16 %v2791, %v2791
      %v2962 = vpack.c.bf16 %v2806, %v2806
      %v2963 = vpack.c.bf16 %v2821, %v2821
      %v2964 = vpack.c.bf16 %v2836, %v2836
      %v2965 = vpack.c.bf16 %v2851, %v2851
      %v2966 = vpack.c.bf16 %v2866, %v2866
      %v2967 = vpack.c.bf16 %v2881, %v2881
      %v2968 = vpack.c.bf16 %v2896, %v2896
      %v2969 = vpack.c.bf16 %v2911, %v2911
      %v2970 = vpack.c.bf16 %v2926, %v2926
      %v2971 = vpack.c.bf16 %v2941, %v2941
      %v2972 = vpack.c.bf16 %v2956, %v2956
      %v2975 = vunpack.c.l.b16 %v2957
      %v2976 = vunpack.c.l.b16 %v2958
      %v2977 = vpack.c.b16 %v2976, %v2975
      %2978 = vrot.lane.b32.xlu0 %v2150, 56
      %v2979 = vpop.permute.xlu0 %2978
      %v2982 = vsel %vm1724, %v2977, 0
      %2984 = vmatpush.bf16.msra.mxu0 0
      %2985 = vmatpush.bf16.msra.mxu0 0
      %2986 = vmatpush.bf16.msra.mxu0 0
      %2987 = vmatpush.bf16.msra.mxu0 0
      %2988 = vmatpush.bf16.msra.mxu0 0
      %2989 = vmatpush.bf16.msra.mxu0 0
      %2990 = vmatpush.bf16.msra.mxu0 0
      %2991 = vmatpush.bf16.msra.mxu0 %v2979
      %2992 = vmatmul.bf16.gmra.mxu0 %v2982
      %v2993 = vpop.f32.mrf.mxu0
      %v2994 = vadd.f32 0.0, %v2993
      %v2995 = vpop.f32.mrf.mxu0
      %v2996 = vadd.f32 0.0, %v2995
      %2997 = vdwg.mxu0
      %v3000 = vunpack.c.l.b16 %v2959
      %v3001 = vunpack.c.l.b16 %v2960
      %v3002 = vpack.c.b16 %v3001, %v3000
      %3003 = vrot.lane.b32.xlu0 %v2180, 56
      %v3004 = vpop.permute.xlu0 %3003
      %v3007 = vsel %vm1724, %v3002, 0
      %3009 = vmatpush.bf16.msra.mxu0 0
      %3010 = vmatpush.bf16.msra.mxu0 0
      %3011 = vmatpush.bf16.msra.mxu0 0
      %3012 = vmatpush.bf16.msra.mxu0 0
      %3013 = vmatpush.bf16.msra.mxu0 0
      %3014 = vmatpush.bf16.msra.mxu0 0
      %3015 = vmatpush.bf16.msra.mxu0 0
      %3016 = vmatpush.bf16.msra.mxu0 %v3004
      %3017 = vmatmul.bf16.gmra.mxu0 %v3007
      %v3018 = vpop.f32.mrf.mxu0
      %v3019 = vadd.f32 0.0, %v3018
      %v3020 = vpop.f32.mrf.mxu0
      %v3021 = vadd.f32 0.0, %v3020
      %3022 = vdwg.mxu0
      %v3025 = vunpack.c.l.b16 %v2961
      %v3026 = vunpack.c.l.b16 %v2962
      %v3027 = vpack.c.b16 %v3026, %v3025
      %3028 = vrot.lane.b32.xlu0 %v2210, 56
      %v3029 = vpop.permute.xlu0 %3028
      %v3032 = vsel %vm1724, %v3027, 0
      %3034 = vmatpush.bf16.msra.mxu0 0
      %3035 = vmatpush.bf16.msra.mxu0 0
      %3036 = vmatpush.bf16.msra.mxu0 0
      %3037 = vmatpush.bf16.msra.mxu0 0
      %3038 = vmatpush.bf16.msra.mxu0 0
      %3039 = vmatpush.bf16.msra.mxu0 0
      %3040 = vmatpush.bf16.msra.mxu0 0
      %3041 = vmatpush.bf16.msra.mxu0 %v3029
      %3042 = vmatmul.bf16.gmra.mxu0 %v3032
      %v3043 = vpop.f32.mrf.mxu0
      %v3044 = vadd.f32 0.0, %v3043
      %v3045 = vpop.f32.mrf.mxu0
      %v3046 = vadd.f32 0.0, %v3045
      %3047 = vdwg.mxu0
      %v3050 = vunpack.c.l.b16 %v2963
      %v3051 = vunpack.c.l.b16 %v2964
      %v3052 = vpack.c.b16 %v3051, %v3050
      %3053 = vrot.lane.b32.xlu0 %v2240, 56
      %v3054 = vpop.permute.xlu0 %3053
      %v3057 = vsel %vm1724, %v3052, 0
      %3059 = vmatpush.bf16.msra.mxu0 0
      %3060 = vmatpush.bf16.msra.mxu0 0
      %3061 = vmatpush.bf16.msra.mxu0 0
      %3062 = vmatpush.bf16.msra.mxu0 0
      %3063 = vmatpush.bf16.msra.mxu0 0
      %3064 = vmatpush.bf16.msra.mxu0 0
      %3065 = vmatpush.bf16.msra.mxu0 0
      %3066 = vmatpush.bf16.msra.mxu0 %v3054
      %3067 = vmatmul.bf16.gmra.mxu0 %v3057
      %v3068 = vpop.f32.mrf.mxu0
      %v3069 = vadd.f32 0.0, %v3068
      %v3070 = vpop.f32.mrf.mxu0
      %v3071 = vadd.f32 0.0, %v3070
      %3072 = vdwg.mxu0
      %v3075 = vunpack.c.l.b16 %v2965
      %v3076 = vunpack.c.l.b16 %v2966
      %v3077 = vpack.c.b16 %v3076, %v3075
      %3078 = vrot.lane.b32.xlu0 %v2270, 56
      %v3079 = vpop.permute.xlu0 %3078
      %v3082 = vsel %vm1724, %v3077, 0
      %3084 = vmatpush.bf16.msra.mxu0 0
      %3085 = vmatpush.bf16.msra.mxu0 0
      %3086 = vmatpush.bf16.msra.mxu0 0
      %3087 = vmatpush.bf16.msra.mxu0 0
      %3088 = vmatpush.bf16.msra.mxu0 0
      %3089 = vmatpush.bf16.msra.mxu0 0
      %3090 = vmatpush.bf16.msra.mxu0 0
      %3091 = vmatpush.bf16.msra.mxu0 %v3079
      %3092 = vmatmul.bf16.gmra.mxu0 %v3082
      %v3093 = vpop.f32.mrf.mxu0
      %v3094 = vadd.f32 0.0, %v3093
      %v3095 = vpop.f32.mrf.mxu0
      %v3096 = vadd.f32 0.0, %v3095
      %3097 = vdwg.mxu0
      %v3100 = vunpack.c.l.b16 %v2967
      %v3101 = vunpack.c.l.b16 %v2968
      %v3102 = vpack.c.b16 %v3101, %v3100
      %3103 = vrot.lane.b32.xlu0 %v2300, 56
      %v3104 = vpop.permute.xlu0 %3103
      %v3107 = vsel %vm1724, %v3102, 0
      %3109 = vmatpush.bf16.msra.mxu0 0
      %3110 = vmatpush.bf16.msra.mxu0 0
      %3111 = vmatpush.bf16.msra.mxu0 0
      %3112 = vmatpush.bf16.msra.mxu0 0
      %3113 = vmatpush.bf16.msra.mxu0 0
      %3114 = vmatpush.bf16.msra.mxu0 0
      %3115 = vmatpush.bf16.msra.mxu0 0
      %3116 = vmatpush.bf16.msra.mxu0 %v3104
      %3117 = vmatmul.bf16.gmra.mxu0 %v3107
      %v3118 = vpop.f32.mrf.mxu0
      %v3119 = vadd.f32 0.0, %v3118
      %v3120 = vpop.f32.mrf.mxu0
      %v3121 = vadd.f32 0.0, %v3120
      %3122 = vdwg.mxu0
      %v3125 = vunpack.c.l.b16 %v2969
      %v3126 = vunpack.c.l.b16 %v2970
      %v3127 = vpack.c.b16 %v3126, %v3125
      %3128 = vrot.lane.b32.xlu0 %v2330, 56
      %v3129 = vpop.permute.xlu0 %3128
      %v3132 = vsel %vm1724, %v3127, 0
      %3134 = vmatpush.bf16.msra.mxu0 0
      %3135 = vmatpush.bf16.msra.mxu0 0
      %3136 = vmatpush.bf16.msra.mxu0 0
      %3137 = vmatpush.bf16.msra.mxu0 0
      %3138 = vmatpush.bf16.msra.mxu0 0
      %3139 = vmatpush.bf16.msra.mxu0 0
      %3140 = vmatpush.bf16.msra.mxu0 0
      %3141 = vmatpush.bf16.msra.mxu0 %v3129
      %3142 = vmatmul.bf16.gmra.mxu0 %v3132
      %v3143 = vpop.f32.mrf.mxu0
      %v3144 = vadd.f32 0.0, %v3143
      %v3145 = vpop.f32.mrf.mxu0
      %v3146 = vadd.f32 0.0, %v3145
      %3147 = vdwg.mxu0
      %v3150 = vunpack.c.l.b16 %v2971
      %v3151 = vunpack.c.l.b16 %v2972
      %v3152 = vpack.c.b16 %v3151, %v3150
      %3153 = vrot.lane.b32.xlu0 %v2360, 56
      %v3154 = vpop.permute.xlu0 %3153
      %v3157 = vsel %vm1724, %v3152, 0
      %3159 = vmatpush.bf16.msra.mxu0 0
      %3160 = vmatpush.bf16.msra.mxu0 0
      %3161 = vmatpush.bf16.msra.mxu0 0
      %3162 = vmatpush.bf16.msra.mxu0 0
      %3163 = vmatpush.bf16.msra.mxu0 0
      %3164 = vmatpush.bf16.msra.mxu0 0
      %3165 = vmatpush.bf16.msra.mxu0 0
      %3166 = vmatpush.bf16.msra.mxu0 %v3154
      %3167 = vmatmul.bf16.gmra.mxu0 %v3157
      %v3168 = vpop.f32.mrf.mxu0
      %v3169 = vadd.f32 0.0, %v3168
      %v3170 = vpop.f32.mrf.mxu0
      %v3171 = vadd.f32 0.0, %v3170
      %3172 = vdwg.mxu0
      %3173 = vrot.lane.b32.xlu0 %v1471, 112
      %v3174 = vpop.permute.xlu0 %3173
      %3175 = vrot.lane.b32.xlu0 %v1476, 80
      %v3176 = vpop.permute.xlu0 %3175
      %v3178 = vsel %vm1479, %v3174, 0
      %v3181 = vsel %vm1479, %v3176, 0
      %3183 = vmatpush.bf16.xpose.msra.mxu0 0
      %3184 = vmatpush.bf16.xpose.msra.mxu0 0
      %3185 = vmatpush.bf16.xpose.msra.mxu0 0
      %3186 = vmatpush.bf16.xpose.msra.mxu0 0
      %3187 = vmatpush.bf16.xpose.msra.mxu0 0
      %3188 = vmatpush.bf16.xpose.msra.mxu0 0
      %3189 = vmatpush.bf16.xpose.msra.mxu0 0
      %3190 = vmatpush.bf16.xpose.msra.mxu0 %v3181
      %3191 = vmatmul.bf16.gmra.mxu0 %v3178
      %v3192 = vpop.f32.mrf.mxu0
      %v3193 = vadd.f32 0.0, %v3192
      %v3194 = vpop.f32.mrf.mxu0
      %v3195 = vadd.f32 0.0, %v3194
      %3196 = vdwg.mxu0
      %3197 = vrot.lane.b32.xlu0 %v1504, 112
      %v3198 = vpop.permute.xlu0 %3197
      %3199 = vrot.lane.b32.xlu0 %v1509, 80
      %v3200 = vpop.permute.xlu0 %3199
      %v3202 = vsel %vm1479, %v3198, 0
      %v3205 = vsel %vm1479, %v3200, 0
      %3207 = vmatpush.bf16.xpose.msra.mxu0 0
      %3208 = vmatpush.bf16.xpose.msra.mxu0 0
      %3209 = vmatpush.bf16.xpose.msra.mxu0 0
      %3210 = vmatpush.bf16.xpose.msra.mxu0 0
      %3211 = vmatpush.bf16.xpose.msra.mxu0 0
      %3212 = vmatpush.bf16.xpose.msra.mxu0 0
      %3213 = vmatpush.bf16.xpose.msra.mxu0 0
      %3214 = vmatpush.bf16.xpose.msra.mxu0 %v3205
      %3215 = vmatmul.bf16.gmra.mxu0 %v3202
      %v3216 = vpop.f32.mrf.mxu0
      %v3217 = vadd.f32 0.0, %v3216
      %v3218 = vpop.f32.mrf.mxu0
      %v3219 = vadd.f32 0.0, %v3218
      %3220 = vdwg.mxu0
      %3221 = vrot.lane.b32.xlu0 %v1536, 112
      %v3222 = vpop.permute.xlu0 %3221
      %3223 = vrot.lane.b32.xlu0 %v1541, 80
      %v3224 = vpop.permute.xlu0 %3223
      %v3226 = vsel %vm1479, %v3222, 0
      %v3229 = vsel %vm1479, %v3224, 0
      %3231 = vmatpush.bf16.xpose.msra.mxu0 0
      %3232 = vmatpush.bf16.xpose.msra.mxu0 0
      %3233 = vmatpush.bf16.xpose.msra.mxu0 0
      %3234 = vmatpush.bf16.xpose.msra.mxu0 0
      %3235 = vmatpush.bf16.xpose.msra.mxu0 0
      %3236 = vmatpush.bf16.xpose.msra.mxu0 0
      %3237 = vmatpush.bf16.xpose.msra.mxu0 0
      %3238 = vmatpush.bf16.xpose.msra.mxu0 %v3229
      %3239 = vmatmul.bf16.gmra.mxu0 %v3226
      %v3240 = vpop.f32.mrf.mxu0
      %v3241 = vadd.f32 0.0, %v3240
      %v3242 = vpop.f32.mrf.mxu0
      %v3243 = vadd.f32 0.0, %v3242
      %3244 = vdwg.mxu0
      %3245 = vrot.lane.b32.xlu0 %v1568, 112
      %v3246 = vpop.permute.xlu0 %3245
      %3247 = vrot.lane.b32.xlu0 %v1573, 80
      %v3248 = vpop.permute.xlu0 %3247
      %v3250 = vsel %vm1479, %v3246, 0
      %v3253 = vsel %vm1479, %v3248, 0
      %3255 = vmatpush.bf16.xpose.msra.mxu0 0
      %3256 = vmatpush.bf16.xpose.msra.mxu0 0
      %3257 = vmatpush.bf16.xpose.msra.mxu0 0
      %3258 = vmatpush.bf16.xpose.msra.mxu0 0
      %3259 = vmatpush.bf16.xpose.msra.mxu0 0
      %3260 = vmatpush.bf16.xpose.msra.mxu0 0
      %3261 = vmatpush.bf16.xpose.msra.mxu0 0
      %3262 = vmatpush.bf16.xpose.msra.mxu0 %v3253
      %3263 = vmatmul.bf16.gmra.mxu0 %v3250
      %v3264 = vpop.f32.mrf.mxu0
      %v3265 = vadd.f32 0.0, %v3264
      %v3266 = vpop.f32.mrf.mxu0
      %v3267 = vadd.f32 0.0, %v3266
      %3268 = vdwg.mxu0
      %3269 = vrot.lane.b32.xlu0 %v1600, 112
      %v3270 = vpop.permute.xlu0 %3269
      %3271 = vrot.lane.b32.xlu0 %v1605, 80
      %v3272 = vpop.permute.xlu0 %3271
      %v3274 = vsel %vm1479, %v3270, 0
      %v3277 = vsel %vm1479, %v3272, 0
      %3279 = vmatpush.bf16.xpose.msra.mxu0 0
      %3280 = vmatpush.bf16.xpose.msra.mxu0 0
      %3281 = vmatpush.bf16.xpose.msra.mxu0 0
      %3282 = vmatpush.bf16.xpose.msra.mxu0 0
      %3283 = vmatpush.bf16.xpose.msra.mxu0 0
      %3284 = vmatpush.bf16.xpose.msra.mxu0 0
      %3285 = vmatpush.bf16.xpose.msra.mxu0 0
      %3286 = vmatpush.bf16.xpose.msra.mxu0 %v3277
      %3287 = vmatmul.bf16.gmra.mxu0 %v3274
      %v3288 = vpop.f32.mrf.mxu0
      %v3289 = vadd.f32 0.0, %v3288
      %v3290 = vpop.f32.mrf.mxu0
      %v3291 = vadd.f32 0.0, %v3290
      %3292 = vdwg.mxu0
      %3293 = vrot.lane.b32.xlu0 %v1632, 112
      %v3294 = vpop.permute.xlu0 %3293
      %3295 = vrot.lane.b32.xlu0 %v1637, 80
      %v3296 = vpop.permute.xlu0 %3295
      %v3298 = vsel %vm1479, %v3294, 0
      %v3301 = vsel %vm1479, %v3296, 0
      %3303 = vmatpush.bf16.xpose.msra.mxu0 0
      %3304 = vmatpush.bf16.xpose.msra.mxu0 0
      %3305 = vmatpush.bf16.xpose.msra.mxu0 0
      %3306 = vmatpush.bf16.xpose.msra.mxu0 0
      %3307 = vmatpush.bf16.xpose.msra.mxu0 0
      %3308 = vmatpush.bf16.xpose.msra.mxu0 0
      %3309 = vmatpush.bf16.xpose.msra.mxu0 0
      %3310 = vmatpush.bf16.xpose.msra.mxu0 %v3301
      %3311 = vmatmul.bf16.gmra.mxu0 %v3298
      %v3312 = vpop.f32.mrf.mxu0
      %v3313 = vadd.f32 0.0, %v3312
      %v3314 = vpop.f32.mrf.mxu0
      %v3315 = vadd.f32 0.0, %v3314
      %3316 = vdwg.mxu0
      %3317 = vrot.lane.b32.xlu0 %v1664, 112
      %v3318 = vpop.permute.xlu0 %3317
      %3319 = vrot.lane.b32.xlu0 %v1669, 80
      %v3320 = vpop.permute.xlu0 %3319
      %v3322 = vsel %vm1479, %v3318, 0
      %v3325 = vsel %vm1479, %v3320, 0
      %3327 = vmatpush.bf16.xpose.msra.mxu0 0
      %3328 = vmatpush.bf16.xpose.msra.mxu0 0
      %3329 = vmatpush.bf16.xpose.msra.mxu0 0
      %3330 = vmatpush.bf16.xpose.msra.mxu0 0
      %3331 = vmatpush.bf16.xpose.msra.mxu0 0
      %3332 = vmatpush.bf16.xpose.msra.mxu0 0
      %3333 = vmatpush.bf16.xpose.msra.mxu0 0
      %3334 = vmatpush.bf16.xpose.msra.mxu0 %v3325
      %3335 = vmatmul.bf16.gmra.mxu0 %v3322
      %v3336 = vpop.f32.mrf.mxu0
      %v3337 = vadd.f32 0.0, %v3336
      %v3338 = vpop.f32.mrf.mxu0
      %v3339 = vadd.f32 0.0, %v3338
      %3340 = vdwg.mxu0
      %3341 = vrot.lane.b32.xlu0 %v1696, 112
      %v3342 = vpop.permute.xlu0 %3341
      %3343 = vrot.lane.b32.xlu0 %v1701, 80
      %v3344 = vpop.permute.xlu0 %3343
      %v3346 = vsel %vm1479, %v3342, 0
      %v3349 = vsel %vm1479, %v3344, 0
      %3351 = vmatpush.bf16.xpose.msra.mxu0 0
      %3352 = vmatpush.bf16.xpose.msra.mxu0 0
      %3353 = vmatpush.bf16.xpose.msra.mxu0 0
      %3354 = vmatpush.bf16.xpose.msra.mxu0 0
      %3355 = vmatpush.bf16.xpose.msra.mxu0 0
      %3356 = vmatpush.bf16.xpose.msra.mxu0 0
      %3357 = vmatpush.bf16.xpose.msra.mxu0 0
      %3358 = vmatpush.bf16.xpose.msra.mxu0 %v3349
      %3359 = vmatmul.bf16.gmra.mxu0 %v3346
      %v3360 = vpop.f32.mrf.mxu0
      %v3361 = vadd.f32 0.0, %v3360
      %v3362 = vpop.f32.mrf.mxu0
      %v3363 = vadd.f32 0.0, %v3362
      %3364 = vdwg.mxu0
      %v3365 = vsel %vm1724, %v3193, -inf
      %3366 = vmax.xlane.f32.xlu0 %v3365
      %v3367 = vpop.xlane.xlu0 %3366
      %v3368 = vsel %vm1724, %v3195, -inf
      %3369 = vmax.xlane.f32.xlu0 %v3368
      %v3370 = vpop.xlane.xlu0 %3369
      %v3371 = vsel %vm1724, %v3217, -inf
      %3372 = vmax.xlane.f32.xlu0 %v3371
      %v3373 = vpop.xlane.xlu0 %3372
      %v3374 = vsel %vm1724, %v3219, -inf
      %3375 = vmax.xlane.f32.xlu0 %v3374
      %v3376 = vpop.xlane.xlu0 %3375
      %v3377 = vsel %vm1724, %v3241, -inf
      %3378 = vmax.xlane.f32.xlu0 %v3377
      %v3379 = vpop.xlane.xlu0 %3378
      %v3380 = vsel %vm1724, %v3243, -inf
      %3381 = vmax.xlane.f32.xlu0 %v3380
      %v3382 = vpop.xlane.xlu0 %3381
      %v3383 = vsel %vm1724, %v3265, -inf
      %3384 = vmax.xlane.f32.xlu0 %v3383
      %v3385 = vpop.xlane.xlu0 %3384
      %v3386 = vsel %vm1724, %v3267, -inf
      %3387 = vmax.xlane.f32.xlu0 %v3386
      %v3388 = vpop.xlane.xlu0 %3387
      %v3389 = vsel %vm1724, %v3289, -inf
      %3390 = vmax.xlane.f32.xlu0 %v3389
      %v3391 = vpop.xlane.xlu0 %3390
      %v3392 = vsel %vm1724, %v3291, -inf
      %3393 = vmax.xlane.f32.xlu0 %v3392
      %v3394 = vpop.xlane.xlu0 %3393
      %v3395 = vsel %vm1724, %v3313, -inf
      %3396 = vmax.xlane.f32.xlu0 %v3395
      %v3397 = vpop.xlane.xlu0 %3396
      %v3398 = vsel %vm1724, %v3315, -inf
      %3399 = vmax.xlane.f32.xlu0 %v3398
      %v3400 = vpop.xlane.xlu0 %3399
      %v3401 = vsel %vm1724, %v3337, -inf
      %3402 = vmax.xlane.f32.xlu0 %v3401
      %v3403 = vpop.xlane.xlu0 %3402
      %v3404 = vsel %vm1724, %v3339, -inf
      %3405 = vmax.xlane.f32.xlu0 %v3404
      %v3406 = vpop.xlane.xlu0 %3405
      %v3407 = vsel %vm1724, %v3361, -inf
      %3408 = vmax.xlane.f32.xlu0 %v3407
      %v3409 = vpop.xlane.xlu0 %3408
      %v3410 = vsel %vm1724, %v3363, -inf
      %3411 = vmax.xlane.f32.xlu0 %v3410
      %v3412 = vpop.xlane.xlu0 %3411
      %v3413 = vsub.f32 %v3193, %v3367
      %v3414 = vsub.f32 %v3195, %v3370
      %v3415 = vsub.f32 %v3217, %v3373
      %v3416 = vsub.f32 %v3219, %v3376
      %v3417 = vsub.f32 %v3241, %v3379
      %v3418 = vsub.f32 %v3243, %v3382
      %v3419 = vsub.f32 %v3265, %v3385
      %v3420 = vsub.f32 %v3267, %v3388
      %v3421 = vsub.f32 %v3289, %v3391
      %v3422 = vsub.f32 %v3291, %v3394
      %v3423 = vsub.f32 %v3313, %v3397
      %v3424 = vsub.f32 %v3315, %v3400
      %v3425 = vsub.f32 %v3337, %v3403
      %v3426 = vsub.f32 %v3339, %v3406
      %v3427 = vsub.f32 %v3361, %v3409
      %v3428 = vsub.f32 %v3363, %v3412
      %v3429 = vmul.f32 %v3413, 1.442695
      %v3430 = vpow.pop %v3429
      %v3431 = vmul.f32 %v3414, 1.442695
      %v3432 = vpow.pop %v3431
      %v3433 = vmul.f32 %v3415, 1.442695
      %v3434 = vpow.pop %v3433
      %v3435 = vmul.f32 %v3416, 1.442695
      %v3436 = vpow.pop %v3435
      %v3437 = vmul.f32 %v3417, 1.442695
      %v3438 = vpow.pop %v3437
      %v3439 = vmul.f32 %v3418, 1.442695
      %v3440 = vpow.pop %v3439
      %v3441 = vmul.f32 %v3419, 1.442695
      %v3442 = vpow.pop %v3441
      %v3443 = vmul.f32 %v3420, 1.442695
      %v3444 = vpow.pop %v3443
      %v3445 = vmul.f32 %v3421, 1.442695
      %v3446 = vpow.pop %v3445
      %v3447 = vmul.f32 %v3422, 1.442695
      %v3448 = vpow.pop %v3447
      %v3449 = vmul.f32 %v3423, 1.442695
      %v3450 = vpow.pop %v3449
      %v3451 = vmul.f32 %v3424, 1.442695
      %v3452 = vpow.pop %v3451
      %v3453 = vmul.f32 %v3425, 1.442695
      %v3454 = vpow.pop %v3453
      %v3455 = vmul.f32 %v3426, 1.442695
      %v3456 = vpow.pop %v3455
      %v3457 = vmul.f32 %v3427, 1.442695
      %v3458 = vpow.pop %v3457
      %v3459 = vmul.f32 %v3428, 1.442695
      %v3460 = vpow.pop %v3459
      %v3461 = vsel %vm1724, %v3430, 0.0
      %3462 = vadd.xlane.f32.xlu0 %v3461
      %v3463 = vpop.xlane.xlu0 %3462
      %v3464 = vsel %vm1724, %v3432, 0.0
      %3465 = vadd.xlane.f32.xlu0 %v3464
      %v3466 = vpop.xlane.xlu0 %3465
      %v3467 = vsel %vm1724, %v3434, 0.0
      %3468 = vadd.xlane.f32.xlu0 %v3467
      %v3469 = vpop.xlane.xlu0 %3468
      %v3470 = vsel %vm1724, %v3436, 0.0
      %3471 = vadd.xlane.f32.xlu0 %v3470
      %v3472 = vpop.xlane.xlu0 %3471
      %v3473 = vsel %vm1724, %v3438, 0.0
      %3474 = vadd.xlane.f32.xlu0 %v3473
      %v3475 = vpop.xlane.xlu0 %3474
      %v3476 = vsel %vm1724, %v3440, 0.0
      %3477 = vadd.xlane.f32.xlu0 %v3476
      %v3478 = vpop.xlane.xlu0 %3477
      %v3479 = vsel %vm1724, %v3442, 0.0
      %3480 = vadd.xlane.f32.xlu0 %v3479
      %v3481 = vpop.xlane.xlu0 %3480
      %v3482 = vsel %vm1724, %v3444, 0.0
      %3483 = vadd.xlane.f32.xlu0 %v3482
      %v3484 = vpop.xlane.xlu0 %3483
      %v3485 = vsel %vm1724, %v3446, 0.0
      %3486 = vadd.xlane.f32.xlu0 %v3485
      %v3487 = vpop.xlane.xlu0 %3486
      %v3488 = vsel %vm1724, %v3448, 0.0
      %3489 = vadd.xlane.f32.xlu0 %v3488
      %v3490 = vpop.xlane.xlu0 %3489
      %v3491 = vsel %vm1724, %v3450, 0.0
      %3492 = vadd.xlane.f32.xlu0 %v3491
      %v3493 = vpop.xlane.xlu0 %3492
      %v3494 = vsel %vm1724, %v3452, 0.0
      %3495 = vadd.xlane.f32.xlu0 %v3494
      %v3496 = vpop.xlane.xlu0 %3495
      %v3497 = vsel %vm1724, %v3454, 0.0
      %3498 = vadd.xlane.f32.xlu0 %v3497
      %v3499 = vpop.xlane.xlu0 %3498
      %v3500 = vsel %vm1724, %v3456, 0.0
      %3501 = vadd.xlane.f32.xlu0 %v3500
      %v3502 = vpop.xlane.xlu0 %3501
      %v3503 = vsel %vm1724, %v3458, 0.0
      %3504 = vadd.xlane.f32.xlu0 %v3503
      %v3505 = vpop.xlane.xlu0 %3504
      %v3506 = vsel %vm1724, %v3460, 0.0
      %3507 = vadd.xlane.f32.xlu0 %v3506
      %v3508 = vpop.xlane.xlu0 %3507
      %v3509 = vrcp.pop %v3463
      %v3510 = vmul.f32 %v3463, %v3509
      %v3511 = vsub.f32 1.0, %v3510
      %v3512 = vmul.f32 %v3509, %v3511
      %v3513 = vadd.f32 %v3509, %v3512
      %vm3514 = vweird.f32 %v3463
      %vm3515 = vweird.f32 %v3509
      %vm3516 = vmor %vm3514, %vm3515
      %v3517 = vsel %vm3516, %v3509, %v3513
      %v3518 = vand.u32 2147483647, %v3463
      %vm3519 = vcmp.eq.f32.partialorder %v3518, 8.507059e+37
      %v3520 = vand.u32 %v3463, 2147483648
      %v3521 = vor.u32 1.1754944e-38, %v3520
      %v3522 = vsel %vm3519, %v3521, %v3517
      %v3523 = vmul.f32 %v3430, %v3522
      %v3524 = vrcp.pop %v3466
      %v3525 = vmul.f32 %v3466, %v3524
      %v3526 = vsub.f32 1.0, %v3525
      %v3527 = vmul.f32 %v3524, %v3526
      %v3528 = vadd.f32 %v3524, %v3527
      %vm3529 = vweird.f32 %v3466
      %vm3530 = vweird.f32 %v3524
      %vm3531 = vmor %vm3529, %vm3530
      %v3532 = vsel %vm3531, %v3524, %v3528
      %v3533 = vand.u32 2147483647, %v3466
      %vm3534 = vcmp.eq.f32.partialorder %v3533, 8.507059e+37
      %v3535 = vand.u32 %v3466, 2147483648
      %v3536 = vor.u32 1.1754944e-38, %v3535
      %v3537 = vsel %vm3534, %v3536, %v3532
      %v3538 = vmul.f32 %v3432, %v3537
      %v3539 = vrcp.pop %v3469
      %v3540 = vmul.f32 %v3469, %v3539
      %v3541 = vsub.f32 1.0, %v3540
      %v3542 = vmul.f32 %v3539, %v3541
      %v3543 = vadd.f32 %v3539, %v3542
      %vm3544 = vweird.f32 %v3469
      %vm3545 = vweird.f32 %v3539
      %vm3546 = vmor %vm3544, %vm3545
      %v3547 = vsel %vm3546, %v3539, %v3543
      %v3548 = vand.u32 2147483647, %v3469
      %vm3549 = vcmp.eq.f32.partialorder %v3548, 8.507059e+37
      %v3550 = vand.u32 %v3469, 2147483648
      %v3551 = vor.u32 1.1754944e-38, %v3550
      %v3552 = vsel %vm3549, %v3551, %v3547
      %v3553 = vmul.f32 %v3434, %v3552
      %v3554 = vrcp.pop %v3472
      %v3555 = vmul.f32 %v3472, %v3554
      %v3556 = vsub.f32 1.0, %v3555
      %v3557 = vmul.f32 %v3554, %v3556
      %v3558 = vadd.f32 %v3554, %v3557
      %vm3559 = vweird.f32 %v3472
      %vm3560 = vweird.f32 %v3554
      %vm3561 = vmor %vm3559, %vm3560
      %v3562 = vsel %vm3561, %v3554, %v3558
      %v3563 = vand.u32 2147483647, %v3472
      %vm3564 = vcmp.eq.f32.partialorder %v3563, 8.507059e+37
      %v3565 = vand.u32 %v3472, 2147483648
      %v3566 = vor.u32 1.1754944e-38, %v3565
      %v3567 = vsel %vm3564, %v3566, %v3562
      %v3568 = vmul.f32 %v3436, %v3567
      %v3569 = vrcp.pop %v3475
      %v3570 = vmul.f32 %v3475, %v3569
      %v3571 = vsub.f32 1.0, %v3570
      %v3572 = vmul.f32 %v3569, %v3571
      %v3573 = vadd.f32 %v3569, %v3572
      %vm3574 = vweird.f32 %v3475
      %vm3575 = vweird.f32 %v3569
      %vm3576 = vmor %vm3574, %vm3575
      %v3577 = vsel %vm3576, %v3569, %v3573
      %v3578 = vand.u32 2147483647, %v3475
      %vm3579 = vcmp.eq.f32.partialorder %v3578, 8.507059e+37
      %v3580 = vand.u32 %v3475, 2147483648
      %v3581 = vor.u32 1.1754944e-38, %v3580
      %v3582 = vsel %vm3579, %v3581, %v3577
      %v3583 = vmul.f32 %v3438, %v3582
      %v3584 = vrcp.pop %v3478
      %v3585 = vmul.f32 %v3478, %v3584
      %v3586 = vsub.f32 1.0, %v3585
      %v3587 = vmul.f32 %v3584, %v3586
      %v3588 = vadd.f32 %v3584, %v3587
      %vm3589 = vweird.f32 %v3478
      %vm3590 = vweird.f32 %v3584
      %vm3591 = vmor %vm3589, %vm3590
      %v3592 = vsel %vm3591, %v3584, %v3588
      %v3593 = vand.u32 2147483647, %v3478
      %vm3594 = vcmp.eq.f32.partialorder %v3593, 8.507059e+37
      %v3595 = vand.u32 %v3478, 2147483648
      %v3596 = vor.u32 1.1754944e-38, %v3595
      %v3597 = vsel %vm3594, %v3596, %v3592
      %v3598 = vmul.f32 %v3440, %v3597
      %v3599 = vrcp.pop %v3481
      %v3600 = vmul.f32 %v3481, %v3599
      %v3601 = vsub.f32 1.0, %v3600
      %v3602 = vmul.f32 %v3599, %v3601
      %v3603 = vadd.f32 %v3599, %v3602
      %vm3604 = vweird.f32 %v3481
      %vm3605 = vweird.f32 %v3599
      %vm3606 = vmor %vm3604, %vm3605
      %v3607 = vsel %vm3606, %v3599, %v3603
      %v3608 = vand.u32 2147483647, %v3481
      %vm3609 = vcmp.eq.f32.partialorder %v3608, 8.507059e+37
      %v3610 = vand.u32 %v3481, 2147483648
      %v3611 = vor.u32 1.1754944e-38, %v3610
      %v3612 = vsel %vm3609, %v3611, %v3607
      %v3613 = vmul.f32 %v3442, %v3612
      %v3614 = vrcp.pop %v3484
      %v3615 = vmul.f32 %v3484, %v3614
      %v3616 = vsub.f32 1.0, %v3615
      %v3617 = vmul.f32 %v3614, %v3616
      %v3618 = vadd.f32 %v3614, %v3617
      %vm3619 = vweird.f32 %v3484
      %vm3620 = vweird.f32 %v3614
      %vm3621 = vmor %vm3619, %vm3620
      %v3622 = vsel %vm3621, %v3614, %v3618
      %v3623 = vand.u32 2147483647, %v3484
      %vm3624 = vcmp.eq.f32.partialorder %v3623, 8.507059e+37
      %v3625 = vand.u32 %v3484, 2147483648
      %v3626 = vor.u32 1.1754944e-38, %v3625
      %v3627 = vsel %vm3624, %v3626, %v3622
      %v3628 = vmul.f32 %v3444, %v3627
      %v3629 = vrcp.pop %v3487
      %v3630 = vmul.f32 %v3487, %v3629
      %v3631 = vsub.f32 1.0, %v3630
      %v3632 = vmul.f32 %v3629, %v3631
      %v3633 = vadd.f32 %v3629, %v3632
      %vm3634 = vweird.f32 %v3487
      %vm3635 = vweird.f32 %v3629
      %vm3636 = vmor %vm3634, %vm3635
      %v3637 = vsel %vm3636, %v3629, %v3633
      %v3638 = vand.u32 2147483647, %v3487
      %vm3639 = vcmp.eq.f32.partialorder %v3638, 8.507059e+37
      %v3640 = vand.u32 %v3487, 2147483648
      %v3641 = vor.u32 1.1754944e-38, %v3640
      %v3642 = vsel %vm3639, %v3641, %v3637
      %v3643 = vmul.f32 %v3446, %v3642
      %v3644 = vrcp.pop %v3490
      %v3645 = vmul.f32 %v3490, %v3644
      %v3646 = vsub.f32 1.0, %v3645
      %v3647 = vmul.f32 %v3644, %v3646
      %v3648 = vadd.f32 %v3644, %v3647
      %vm3649 = vweird.f32 %v3490
      %vm3650 = vweird.f32 %v3644
      %vm3651 = vmor %vm3649, %vm3650
      %v3652 = vsel %vm3651, %v3644, %v3648
      %v3653 = vand.u32 2147483647, %v3490
      %vm3654 = vcmp.eq.f32.partialorder %v3653, 8.507059e+37
      %v3655 = vand.u32 %v3490, 2147483648
      %v3656 = vor.u32 1.1754944e-38, %v3655
      %v3657 = vsel %vm3654, %v3656, %v3652
      %v3658 = vmul.f32 %v3448, %v3657
      %v3659 = vrcp.pop %v3493
      %v3660 = vmul.f32 %v3493, %v3659
      %v3661 = vsub.f32 1.0, %v3660
      %v3662 = vmul.f32 %v3659, %v3661
      %v3663 = vadd.f32 %v3659, %v3662
      %vm3664 = vweird.f32 %v3493
      %vm3665 = vweird.f32 %v3659
      %vm3666 = vmor %vm3664, %vm3665
      %v3667 = vsel %vm3666, %v3659, %v3663
      %v3668 = vand.u32 2147483647, %v3493
      %vm3669 = vcmp.eq.f32.partialorder %v3668, 8.507059e+37
      %v3670 = vand.u32 %v3493, 2147483648
      %v3671 = vor.u32 1.1754944e-38, %v3670
      %v3672 = vsel %vm3669, %v3671, %v3667
      %v3673 = vmul.f32 %v3450, %v3672
      %v3674 = vrcp.pop %v3496
      %v3675 = vmul.f32 %v3496, %v3674
      %v3676 = vsub.f32 1.0, %v3675
      %v3677 = vmul.f32 %v3674, %v3676
      %v3678 = vadd.f32 %v3674, %v3677
      %vm3679 = vweird.f32 %v3496
      %vm3680 = vweird.f32 %v3674
      %vm3681 = vmor %vm3679, %vm3680
      %v3682 = vsel %vm3681, %v3674, %v3678
      %v3683 = vand.u32 2147483647, %v3496
      %vm3684 = vcmp.eq.f32.partialorder %v3683, 8.507059e+37
      %v3685 = vand.u32 %v3496, 2147483648
      %v3686 = vor.u32 1.1754944e-38, %v3685
      %v3687 = vsel %vm3684, %v3686, %v3682
      %v3688 = vmul.f32 %v3452, %v3687
      %v3689 = vrcp.pop %v3499
      %v3690 = vmul.f32 %v3499, %v3689
      %v3691 = vsub.f32 1.0, %v3690
      %v3692 = vmul.f32 %v3689, %v3691
      %v3693 = vadd.f32 %v3689, %v3692
      %vm3694 = vweird.f32 %v3499
      %vm3695 = vweird.f32 %v3689
      %vm3696 = vmor %vm3694, %vm3695
      %v3697 = vsel %vm3696, %v3689, %v3693
      %v3698 = vand.u32 2147483647, %v3499
      %vm3699 = vcmp.eq.f32.partialorder %v3698, 8.507059e+37
      %v3700 = vand.u32 %v3499, 2147483648
      %v3701 = vor.u32 1.1754944e-38, %v3700
      %v3702 = vsel %vm3699, %v3701, %v3697
      %v3703 = vmul.f32 %v3454, %v3702
      %v3704 = vrcp.pop %v3502
      %v3705 = vmul.f32 %v3502, %v3704
      %v3706 = vsub.f32 1.0, %v3705
      %v3707 = vmul.f32 %v3704, %v3706
      %v3708 = vadd.f32 %v3704, %v3707
      %vm3709 = vweird.f32 %v3502
      %vm3710 = vweird.f32 %v3704
      %vm3711 = vmor %vm3709, %vm3710
      %v3712 = vsel %vm3711, %v3704, %v3708
      %v3713 = vand.u32 2147483647, %v3502
      %vm3714 = vcmp.eq.f32.partialorder %v3713, 8.507059e+37
      %v3715 = vand.u32 %v3502, 2147483648
      %v3716 = vor.u32 1.1754944e-38, %v3715
      %v3717 = vsel %vm3714, %v3716, %v3712
      %v3718 = vmul.f32 %v3456, %v3717
      %v3719 = vrcp.pop %v3505
      %v3720 = vmul.f32 %v3505, %v3719
      %v3721 = vsub.f32 1.0, %v3720
      %v3722 = vmul.f32 %v3719, %v3721
      %v3723 = vadd.f32 %v3719, %v3722
      %vm3724 = vweird.f32 %v3505
      %vm3725 = vweird.f32 %v3719
      %vm3726 = vmor %vm3724, %vm3725
      %v3727 = vsel %vm3726, %v3719, %v3723
      %v3728 = vand.u32 2147483647, %v3505
      %vm3729 = vcmp.eq.f32.partialorder %v3728, 8.507059e+37
      %v3730 = vand.u32 %v3505, 2147483648
      %v3731 = vor.u32 1.1754944e-38, %v3730
      %v3732 = vsel %vm3729, %v3731, %v3727
      %v3733 = vmul.f32 %v3458, %v3732
      %v3734 = vrcp.pop %v3508
      %v3735 = vmul.f32 %v3508, %v3734
      %v3736 = vsub.f32 1.0, %v3735
      %v3737 = vmul.f32 %v3734, %v3736
      %v3738 = vadd.f32 %v3734, %v3737
      %vm3739 = vweird.f32 %v3508
      %vm3740 = vweird.f32 %v3734
      %vm3741 = vmor %vm3739, %vm3740
      %v3742 = vsel %vm3741, %v3734, %v3738
      %v3743 = vand.u32 2147483647, %v3508
      %vm3744 = vcmp.eq.f32.partialorder %v3743, 8.507059e+37
      %v3745 = vand.u32 %v3508, 2147483648
      %v3746 = vor.u32 1.1754944e-38, %v3745
      %v3747 = vsel %vm3744, %v3746, %v3742
      %v3748 = vmul.f32 %v3460, %v3747
      %v3749 = vpack.c.bf16 %v3523, %v3523
      %v3750 = vpack.c.bf16 %v3538, %v3538
      %v3751 = vpack.c.bf16 %v3553, %v3553
      %v3752 = vpack.c.bf16 %v3568, %v3568
      %v3753 = vpack.c.bf16 %v3583, %v3583
      %v3754 = vpack.c.bf16 %v3598, %v3598
      %v3755 = vpack.c.bf16 %v3613, %v3613
      %v3756 = vpack.c.bf16 %v3628, %v3628
      %v3757 = vpack.c.bf16 %v3643, %v3643
      %v3758 = vpack.c.bf16 %v3658, %v3658
      %v3759 = vpack.c.bf16 %v3673, %v3673
      %v3760 = vpack.c.bf16 %v3688, %v3688
      %v3761 = vpack.c.bf16 %v3703, %v3703
      %v3762 = vpack.c.bf16 %v3718, %v3718
      %v3763 = vpack.c.bf16 %v3733, %v3733
      %v3764 = vpack.c.bf16 %v3748, %v3748
      %v3767 = vunpack.c.l.b16 %v3749
      %v3768 = vunpack.c.l.b16 %v3750
      %v3769 = vpack.c.b16 %v3768, %v3767
      %3770 = vrot.lane.b32.xlu0 %v2150, 48
      %v3771 = vpop.permute.xlu0 %3770
      %v3774 = vsel %vm1724, %v3769, 0
      %3776 = vmatpush.bf16.msra.mxu0 0
      %3777 = vmatpush.bf16.msra.mxu0 0
      %3778 = vmatpush.bf16.msra.mxu0 0
      %3779 = vmatpush.bf16.msra.mxu0 0
      %3780 = vmatpush.bf16.msra.mxu0 0
      %3781 = vmatpush.bf16.msra.mxu0 0
      %3782 = vmatpush.bf16.msra.mxu0 0
      %3783 = vmatpush.bf16.msra.mxu0 %v3771
      %3784 = vmatmul.bf16.gmra.mxu0 %v3774
      %v3785 = vpop.f32.mrf.mxu0
      %v3786 = vadd.f32 0.0, %v3785
      %v3787 = vpop.f32.mrf.mxu0
      %v3788 = vadd.f32 0.0, %v3787
      %3789 = vdwg.mxu0
      %v3792 = vunpack.c.l.b16 %v3751
      %v3793 = vunpack.c.l.b16 %v3752
      %v3794 = vpack.c.b16 %v3793, %v3792
      %3795 = vrot.lane.b32.xlu0 %v2180, 48
      %v3796 = vpop.permute.xlu0 %3795
      %v3799 = vsel %vm1724, %v3794, 0
      %3801 = vmatpush.bf16.msra.mxu0 0
      %3802 = vmatpush.bf16.msra.mxu0 0
      %3803 = vmatpush.bf16.msra.mxu0 0
      %3804 = vmatpush.bf16.msra.mxu0 0
      %3805 = vmatpush.bf16.msra.mxu0 0
      %3806 = vmatpush.bf16.msra.mxu0 0
      %3807 = vmatpush.bf16.msra.mxu0 0
      %3808 = vmatpush.bf16.msra.mxu0 %v3796
      %3809 = vmatmul.bf16.gmra.mxu0 %v3799
      %v3810 = vpop.f32.mrf.mxu0
      %v3811 = vadd.f32 0.0, %v3810
      %v3812 = vpop.f32.mrf.mxu0
      %v3813 = vadd.f32 0.0, %v3812
      %3814 = vdwg.mxu0
      %v3817 = vunpack.c.l.b16 %v3753
      %v3818 = vunpack.c.l.b16 %v3754
      %v3819 = vpack.c.b16 %v3818, %v3817
      %3820 = vrot.lane.b32.xlu0 %v2210, 48
      %v3821 = vpop.permute.xlu0 %3820
      %v3824 = vsel %vm1724, %v3819, 0
      %3826 = vmatpush.bf16.msra.mxu0 0
      %3827 = vmatpush.bf16.msra.mxu0 0
      %3828 = vmatpush.bf16.msra.mxu0 0
      %3829 = vmatpush.bf16.msra.mxu0 0
      %3830 = vmatpush.bf16.msra.mxu0 0
      %3831 = vmatpush.bf16.msra.mxu0 0
      %3832 = vmatpush.bf16.msra.mxu0 0
      %3833 = vmatpush.bf16.msra.mxu0 %v3821
      %3834 = vmatmul.bf16.gmra.mxu0 %v3824
      %v3835 = vpop.f32.mrf.mxu0
      %v3836 = vadd.f32 0.0, %v3835
      %v3837 = vpop.f32.mrf.mxu0
      %v3838 = vadd.f32 0.0, %v3837
      %3839 = vdwg.mxu0
      %v3842 = vunpack.c.l.b16 %v3755
      %v3843 = vunpack.c.l.b16 %v3756
      %v3844 = vpack.c.b16 %v3843, %v3842
      %3845 = vrot.lane.b32.xlu0 %v2240, 48
      %v3846 = vpop.permute.xlu0 %3845
      %v3849 = vsel %vm1724, %v3844, 0
      %3851 = vmatpush.bf16.msra.mxu0 0
      %3852 = vmatpush.bf16.msra.mxu0 0
      %3853 = vmatpush.bf16.msra.mxu0 0
      %3854 = vmatpush.bf16.msra.mxu0 0
      %3855 = vmatpush.bf16.msra.mxu0 0
      %3856 = vmatpush.bf16.msra.mxu0 0
      %3857 = vmatpush.bf16.msra.mxu0 0
      %3858 = vmatpush.bf16.msra.mxu0 %v3846
      %3859 = vmatmul.bf16.gmra.mxu0 %v3849
      %v3860 = vpop.f32.mrf.mxu0
      %v3861 = vadd.f32 0.0, %v3860
      %v3862 = vpop.f32.mrf.mxu0
      %v3863 = vadd.f32 0.0, %v3862
      %3864 = vdwg.mxu0
      %v3867 = vunpack.c.l.b16 %v3757
      %v3868 = vunpack.c.l.b16 %v3758
      %v3869 = vpack.c.b16 %v3868, %v3867
      %3870 = vrot.lane.b32.xlu0 %v2270, 48
      %v3871 = vpop.permute.xlu0 %3870
      %v3874 = vsel %vm1724, %v3869, 0
      %3876 = vmatpush.bf16.msra.mxu0 0
      %3877 = vmatpush.bf16.msra.mxu0 0
      %3878 = vmatpush.bf16.msra.mxu0 0
      %3879 = vmatpush.bf16.msra.mxu0 0
      %3880 = vmatpush.bf16.msra.mxu0 0
      %3881 = vmatpush.bf16.msra.mxu0 0
      %3882 = vmatpush.bf16.msra.mxu0 0
      %3883 = vmatpush.bf16.msra.mxu0 %v3871
      %3884 = vmatmul.bf16.gmra.mxu0 %v3874
      %v3885 = vpop.f32.mrf.mxu0
      %v3886 = vadd.f32 0.0, %v3885
      %v3887 = vpop.f32.mrf.mxu0
      %v3888 = vadd.f32 0.0, %v3887
      %3889 = vdwg.mxu0
      %v3892 = vunpack.c.l.b16 %v3759
      %v3893 = vunpack.c.l.b16 %v3760
      %v3894 = vpack.c.b16 %v3893, %v3892
      %3895 = vrot.lane.b32.xlu0 %v2300, 48
      %v3896 = vpop.permute.xlu0 %3895
      %v3899 = vsel %vm1724, %v3894, 0
      %3901 = vmatpush.bf16.msra.mxu0 0
      %3902 = vmatpush.bf16.msra.mxu0 0
      %3903 = vmatpush.bf16.msra.mxu0 0
      %3904 = vmatpush.bf16.msra.mxu0 0
      %3905 = vmatpush.bf16.msra.mxu0 0
      %3906 = vmatpush.bf16.msra.mxu0 0
      %3907 = vmatpush.bf16.msra.mxu0 0
      %3908 = vmatpush.bf16.msra.mxu0 %v3896
      %3909 = vmatmul.bf16.gmra.mxu0 %v3899
      %v3910 = vpop.f32.mrf.mxu0
      %v3911 = vadd.f32 0.0, %v3910
      %v3912 = vpop.f32.mrf.mxu0
      %v3913 = vadd.f32 0.0, %v3912
      %3914 = vdwg.mxu0
      %v3917 = vunpack.c.l.b16 %v3761
      %v3918 = vunpack.c.l.b16 %v3762
      %v3919 = vpack.c.b16 %v3918, %v3917
      %3920 = vrot.lane.b32.xlu0 %v2330, 48
      %v3921 = vpop.permute.xlu0 %3920
      %v3924 = vsel %vm1724, %v3919, 0
      %3926 = vmatpush.bf16.msra.mxu0 0
      %3927 = vmatpush.bf16.msra.mxu0 0
      %3928 = vmatpush.bf16.msra.mxu0 0
      %3929 = vmatpush.bf16.msra.mxu0 0
      %3930 = vmatpush.bf16.msra.mxu0 0
      %3931 = vmatpush.bf16.msra.mxu0 0
      %3932 = vmatpush.bf16.msra.mxu0 0
      %3933 = vmatpush.bf16.msra.mxu0 %v3921
      %3934 = vmatmul.bf16.gmra.mxu0 %v3924
      %v3935 = vpop.f32.mrf.mxu0
      %v3936 = vadd.f32 0.0, %v3935
      %v3937 = vpop.f32.mrf.mxu0
      %v3938 = vadd.f32 0.0, %v3937
      %3939 = vdwg.mxu0
      %v3942 = vunpack.c.l.b16 %v3763
      %v3943 = vunpack.c.l.b16 %v3764
      %v3944 = vpack.c.b16 %v3943, %v3942
      %3945 = vrot.lane.b32.xlu0 %v2360, 48
      %v3946 = vpop.permute.xlu0 %3945
      %v3949 = vsel %vm1724, %v3944, 0
      %3951 = vmatpush.bf16.msra.mxu0 0
      %3952 = vmatpush.bf16.msra.mxu0 0
      %3953 = vmatpush.bf16.msra.mxu0 0
      %3954 = vmatpush.bf16.msra.mxu0 0
      %3955 = vmatpush.bf16.msra.mxu0 0
      %3956 = vmatpush.bf16.msra.mxu0 0
      %3957 = vmatpush.bf16.msra.mxu0 0
      %3958 = vmatpush.bf16.msra.mxu0 %v3946
      %3959 = vmatmul.bf16.gmra.mxu0 %v3949
      %v3960 = vpop.f32.mrf.mxu0
      %v3961 = vadd.f32 0.0, %v3960
      %v3962 = vpop.f32.mrf.mxu0
      %v3963 = vadd.f32 0.0, %v3962
      %3964 = vdwg.mxu0
      %3965 = vrot.lane.b32.xlu0 %v1471, 104
      %v3966 = vpop.permute.xlu0 %3965
      %3967 = vrot.lane.b32.xlu0 %v1476, 72
      %v3968 = vpop.permute.xlu0 %3967
      %v3970 = vsel %vm1479, %v3966, 0
      %v3973 = vsel %vm1479, %v3968, 0
      %3975 = vmatpush.bf16.xpose.msra.mxu0 0
      %3976 = vmatpush.bf16.xpose.msra.mxu0 0
      %3977 = vmatpush.bf16.xpose.msra.mxu0 0
      %3978 = vmatpush.bf16.xpose.msra.mxu0 0
      %3979 = vmatpush.bf16.xpose.msra.mxu0 0
      %3980 = vmatpush.bf16.xpose.msra.mxu0 0
      %3981 = vmatpush.bf16.xpose.msra.mxu0 0
      %3982 = vmatpush.bf16.xpose.msra.mxu0 %v3973
      %3983 = vmatmul.bf16.gmra.mxu0 %v3970
      %v3984 = vpop.f32.mrf.mxu0
      %v3985 = vadd.f32 0.0, %v3984
      %v3986 = vpop.f32.mrf.mxu0
      %v3987 = vadd.f32 0.0, %v3986
      %3988 = vdwg.mxu0
      %3989 = vrot.lane.b32.xlu0 %v1504, 104
      %v3990 = vpop.permute.xlu0 %3989
      %3991 = vrot.lane.b32.xlu0 %v1509, 72
      %v3992 = vpop.permute.xlu0 %3991
      %v3994 = vsel %vm1479, %v3990, 0
      %v3997 = vsel %vm1479, %v3992, 0
      %3999 = vmatpush.bf16.xpose.msra.mxu0 0
      %4000 = vmatpush.bf16.xpose.msra.mxu0 0
      %4001 = vmatpush.bf16.xpose.msra.mxu0 0
      %4002 = vmatpush.bf16.xpose.msra.mxu0 0
      %4003 = vmatpush.bf16.xpose.msra.mxu0 0
      %4004 = vmatpush.bf16.xpose.msra.mxu0 0
      %4005 = vmatpush.bf16.xpose.msra.mxu0 0
      %4006 = vmatpush.bf16.xpose.msra.mxu0 %v3997
      %4007 = vmatmul.bf16.gmra.mxu0 %v3994
      %v4008 = vpop.f32.mrf.mxu0
      %v4009 = vadd.f32 0.0, %v4008
      %v4010 = vpop.f32.mrf.mxu0
      %v4011 = vadd.f32 0.0, %v4010
      %4012 = vdwg.mxu0
      %4013 = vrot.lane.b32.xlu0 %v1536, 104
      %v4014 = vpop.permute.xlu0 %4013
      %4015 = vrot.lane.b32.xlu0 %v1541, 72
      %v4016 = vpop.permute.xlu0 %4015
      %v4018 = vsel %vm1479, %v4014, 0
      %v4021 = vsel %vm1479, %v4016, 0
      %4023 = vmatpush.bf16.xpose.msra.mxu0 0
      %4024 = vmatpush.bf16.xpose.msra.mxu0 0
      %4025 = vmatpush.bf16.xpose.msra.mxu0 0
      %4026 = vmatpush.bf16.xpose.msra.mxu0 0
      %4027 = vmatpush.bf16.xpose.msra.mxu0 0
      %4028 = vmatpush.bf16.xpose.msra.mxu0 0
      %4029 = vmatpush.bf16.xpose.msra.mxu0 0
      %4030 = vmatpush.bf16.xpose.msra.mxu0 %v4021
      %4031 = vmatmul.bf16.gmra.mxu0 %v4018
      %v4032 = vpop.f32.mrf.mxu0
      %v4033 = vadd.f32 0.0, %v4032
      %v4034 = vpop.f32.mrf.mxu0
      %v4035 = vadd.f32 0.0, %v4034
      %4036 = vdwg.mxu0
      %4037 = vrot.lane.b32.xlu0 %v1568, 104
      %v4038 = vpop.permute.xlu0 %4037
      %4039 = vrot.lane.b32.xlu0 %v1573, 72
      %v4040 = vpop.permute.xlu0 %4039
      %v4042 = vsel %vm1479, %v4038, 0
      %v4045 = vsel %vm1479, %v4040, 0
      %4047 = vmatpush.bf16.xpose.msra.mxu0 0
      %4048 = vmatpush.bf16.xpose.msra.mxu0 0
      %4049 = vmatpush.bf16.xpose.msra.mxu0 0
      %4050 = vmatpush.bf16.xpose.msra.mxu0 0
      %4051 = vmatpush.bf16.xpose.msra.mxu0 0
      %4052 = vmatpush.bf16.xpose.msra.mxu0 0
      %4053 = vmatpush.bf16.xpose.msra.mxu0 0
      %4054 = vmatpush.bf16.xpose.msra.mxu0 %v4045
      %4055 = vmatmul.bf16.gmra.mxu0 %v4042
      %v4056 = vpop.f32.mrf.mxu0
      %v4057 = vadd.f32 0.0, %v4056
      %v4058 = vpop.f32.mrf.mxu0
      %v4059 = vadd.f32 0.0, %v4058
      %4060 = vdwg.mxu0
      %4061 = vrot.lane.b32.xlu0 %v1600, 104
      %v4062 = vpop.permute.xlu0 %4061
      %4063 = vrot.lane.b32.xlu0 %v1605, 72
      %v4064 = vpop.permute.xlu0 %4063
      %v4066 = vsel %vm1479, %v4062, 0
      %v4069 = vsel %vm1479, %v4064, 0
      %4071 = vmatpush.bf16.xpose.msra.mxu0 0
      %4072 = vmatpush.bf16.xpose.msra.mxu0 0
      %4073 = vmatpush.bf16.xpose.msra.mxu0 0
      %4074 = vmatpush.bf16.xpose.msra.mxu0 0
      %4075 = vmatpush.bf16.xpose.msra.mxu0 0
      %4076 = vmatpush.bf16.xpose.msra.mxu0 0
      %4077 = vmatpush.bf16.xpose.msra.mxu0 0
      %4078 = vmatpush.bf16.xpose.msra.mxu0 %v4069
      %4079 = vmatmul.bf16.gmra.mxu0 %v4066
      %v4080 = vpop.f32.mrf.mxu0
      %v4081 = vadd.f32 0.0, %v4080
      %v4082 = vpop.f32.mrf.mxu0
      %v4083 = vadd.f32 0.0, %v4082
      %4084 = vdwg.mxu0
      %4085 = vrot.lane.b32.xlu0 %v1632, 104
      %v4086 = vpop.permute.xlu0 %4085
      %4087 = vrot.lane.b32.xlu0 %v1637, 72
      %v4088 = vpop.permute.xlu0 %4087
      %v4090 = vsel %vm1479, %v4086, 0
      %v4093 = vsel %vm1479, %v4088, 0
      %4095 = vmatpush.bf16.xpose.msra.mxu0 0
      %4096 = vmatpush.bf16.xpose.msra.mxu0 0
      %4097 = vmatpush.bf16.xpose.msra.mxu0 0
      %4098 = vmatpush.bf16.xpose.msra.mxu0 0
      %4099 = vmatpush.bf16.xpose.msra.mxu0 0
      %4100 = vmatpush.bf16.xpose.msra.mxu0 0
      %4101 = vmatpush.bf16.xpose.msra.mxu0 0
      %4102 = vmatpush.bf16.xpose.msra.mxu0 %v4093
      %4103 = vmatmul.bf16.gmra.mxu0 %v4090
      %v4104 = vpop.f32.mrf.mxu0
      %v4105 = vadd.f32 0.0, %v4104
      %v4106 = vpop.f32.mrf.mxu0
      %v4107 = vadd.f32 0.0, %v4106
      %4108 = vdwg.mxu0
      %4109 = vrot.lane.b32.xlu0 %v1664, 104
      %v4110 = vpop.permute.xlu0 %4109
      %4111 = vrot.lane.b32.xlu0 %v1669, 72
      %v4112 = vpop.permute.xlu0 %4111
      %v4114 = vsel %vm1479, %v4110, 0
      %v4117 = vsel %vm1479, %v4112, 0
      %4119 = vmatpush.bf16.xpose.msra.mxu0 0
      %4120 = vmatpush.bf16.xpose.msra.mxu0 0
      %4121 = vmatpush.bf16.xpose.msra.mxu0 0
      %4122 = vmatpush.bf16.xpose.msra.mxu0 0
      %4123 = vmatpush.bf16.xpose.msra.mxu0 0
      %4124 = vmatpush.bf16.xpose.msra.mxu0 0
      %4125 = vmatpush.bf16.xpose.msra.mxu0 0
      %4126 = vmatpush.bf16.xpose.msra.mxu0 %v4117
      %4127 = vmatmul.bf16.gmra.mxu0 %v4114
      %v4128 = vpop.f32.mrf.mxu0
      %v4129 = vadd.f32 0.0, %v4128
      %v4130 = vpop.f32.mrf.mxu0
      %v4131 = vadd.f32 0.0, %v4130
      %4132 = vdwg.mxu0
      %4133 = vrot.lane.b32.xlu0 %v1696, 104
      %v4134 = vpop.permute.xlu0 %4133
      %4135 = vrot.lane.b32.xlu0 %v1701, 72
      %v4136 = vpop.permute.xlu0 %4135
      %v4138 = vsel %vm1479, %v4134, 0
      %v4141 = vsel %vm1479, %v4136, 0
      %4143 = vmatpush.bf16.xpose.msra.mxu0 0
      %4144 = vmatpush.bf16.xpose.msra.mxu0 0
      %4145 = vmatpush.bf16.xpose.msra.mxu0 0
      %4146 = vmatpush.bf16.xpose.msra.mxu0 0
      %4147 = vmatpush.bf16.xpose.msra.mxu0 0
      %4148 = vmatpush.bf16.xpose.msra.mxu0 0
      %4149 = vmatpush.bf16.xpose.msra.mxu0 0
      %4150 = vmatpush.bf16.xpose.msra.mxu0 %v4141
      %4151 = vmatmul.bf16.gmra.mxu0 %v4138
      %v4152 = vpop.f32.mrf.mxu0
      %v4153 = vadd.f32 0.0, %v4152
      %v4154 = vpop.f32.mrf.mxu0
      %v4155 = vadd.f32 0.0, %v4154
      %4156 = vdwg.mxu0
      %v4157 = vsel %vm1724, %v3985, -inf
      %4158 = vmax.xlane.f32.xlu0 %v4157
      %v4159 = vpop.xlane.xlu0 %4158
      %v4160 = vsel %vm1724, %v3987, -inf
      %4161 = vmax.xlane.f32.xlu0 %v4160
      %v4162 = vpop.xlane.xlu0 %4161
      %v4163 = vsel %vm1724, %v4009, -inf
      %4164 = vmax.xlane.f32.xlu0 %v4163
      %v4165 = vpop.xlane.xlu0 %4164
      %v4166 = vsel %vm1724, %v4011, -inf
      %4167 = vmax.xlane.f32.xlu0 %v4166
      %v4168 = vpop.xlane.xlu0 %4167
      %v4169 = vsel %vm1724, %v4033, -inf
      %4170 = vmax.xlane.f32.xlu0 %v4169
      %v4171 = vpop.xlane.xlu0 %4170
      %v4172 = vsel %vm1724, %v4035, -inf
      %4173 = vmax.xlane.f32.xlu0 %v4172
      %v4174 = vpop.xlane.xlu0 %4173
      %v4175 = vsel %vm1724, %v4057, -inf
      %4176 = vmax.xlane.f32.xlu0 %v4175
      %v4177 = vpop.xlane.xlu0 %4176
      %v4178 = vsel %vm1724, %v4059, -inf
      %4179 = vmax.xlane.f32.xlu0 %v4178
      %v4180 = vpop.xlane.xlu0 %4179
      %v4181 = vsel %vm1724, %v4081, -inf
      %4182 = vmax.xlane.f32.xlu0 %v4181
      %v4183 = vpop.xlane.xlu0 %4182
      %v4184 = vsel %vm1724, %v4083, -inf
      %4185 = vmax.xlane.f32.xlu0 %v4184
      %v4186 = vpop.xlane.xlu0 %4185
      %v4187 = vsel %vm1724, %v4105, -inf
      %4188 = vmax.xlane.f32.xlu0 %v4187
      %v4189 = vpop.xlane.xlu0 %4188
      %v4190 = vsel %vm1724, %v4107, -inf
      %4191 = vmax.xlane.f32.xlu0 %v4190
      %v4192 = vpop.xlane.xlu0 %4191
      %v4193 = vsel %vm1724, %v4129, -inf
      %4194 = vmax.xlane.f32.xlu0 %v4193
      %v4195 = vpop.xlane.xlu0 %4194
      %v4196 = vsel %vm1724, %v4131, -inf
      %4197 = vmax.xlane.f32.xlu0 %v4196
      %v4198 = vpop.xlane.xlu0 %4197
      %v4199 = vsel %vm1724, %v4153, -inf
      %4200 = vmax.xlane.f32.xlu0 %v4199
      %v4201 = vpop.xlane.xlu0 %4200
      %v4202 = vsel %vm1724, %v4155, -inf
      %4203 = vmax.xlane.f32.xlu0 %v4202
      %v4204 = vpop.xlane.xlu0 %4203
      %v4205 = vsub.f32 %v3985, %v4159
      %v4206 = vsub.f32 %v3987, %v4162
      %v4207 = vsub.f32 %v4009, %v4165
      %v4208 = vsub.f32 %v4011, %v4168
      %v4209 = vsub.f32 %v4033, %v4171
      %v4210 = vsub.f32 %v4035, %v4174
      %v4211 = vsub.f32 %v4057, %v4177
      %v4212 = vsub.f32 %v4059, %v4180
      %v4213 = vsub.f32 %v4081, %v4183
      %v4214 = vsub.f32 %v4083, %v4186
      %v4215 = vsub.f32 %v4105, %v4189
      %v4216 = vsub.f32 %v4107, %v4192
      %v4217 = vsub.f32 %v4129, %v4195
      %v4218 = vsub.f32 %v4131, %v4198
      %v4219 = vsub.f32 %v4153, %v4201
      %v4220 = vsub.f32 %v4155, %v4204
      %v4221 = vmul.f32 %v4205, 1.442695
      %v4222 = vpow.pop %v4221
      %v4223 = vmul.f32 %v4206, 1.442695
      %v4224 = vpow.pop %v4223
      %v4225 = vmul.f32 %v4207, 1.442695
      %v4226 = vpow.pop %v4225
      %v4227 = vmul.f32 %v4208, 1.442695
      %v4228 = vpow.pop %v4227
      %v4229 = vmul.f32 %v4209, 1.442695
      %v4230 = vpow.pop %v4229
      %v4231 = vmul.f32 %v4210, 1.442695
      %v4232 = vpow.pop %v4231
      %v4233 = vmul.f32 %v4211, 1.442695
      %v4234 = vpow.pop %v4233
      %v4235 = vmul.f32 %v4212, 1.442695
      %v4236 = vpow.pop %v4235
      %v4237 = vmul.f32 %v4213, 1.442695
      %v4238 = vpow.pop %v4237
      %v4239 = vmul.f32 %v4214, 1.442695
      %v4240 = vpow.pop %v4239
      %v4241 = vmul.f32 %v4215, 1.442695
      %v4242 = vpow.pop %v4241
      %v4243 = vmul.f32 %v4216, 1.442695
      %v4244 = vpow.pop %v4243
      %v4245 = vmul.f32 %v4217, 1.442695
      %v4246 = vpow.pop %v4245
      %v4247 = vmul.f32 %v4218, 1.442695
      %v4248 = vpow.pop %v4247
      %v4249 = vmul.f32 %v4219, 1.442695
      %v4250 = vpow.pop %v4249
      %v4251 = vmul.f32 %v4220, 1.442695
      %v4252 = vpow.pop %v4251
      %v4253 = vsel %vm1724, %v4222, 0.0
      %4254 = vadd.xlane.f32.xlu0 %v4253
      %v4255 = vpop.xlane.xlu0 %4254
      %v4256 = vsel %vm1724, %v4224, 0.0
      %4257 = vadd.xlane.f32.xlu0 %v4256
      %v4258 = vpop.xlane.xlu0 %4257
      %v4259 = vsel %vm1724, %v4226, 0.0
      %4260 = vadd.xlane.f32.xlu0 %v4259
      %v4261 = vpop.xlane.xlu0 %4260
      %v4262 = vsel %vm1724, %v4228, 0.0
      %4263 = vadd.xlane.f32.xlu0 %v4262
      %v4264 = vpop.xlane.xlu0 %4263
      %v4265 = vsel %vm1724, %v4230, 0.0
      %4266 = vadd.xlane.f32.xlu0 %v4265
      %v4267 = vpop.xlane.xlu0 %4266
      %v4268 = vsel %vm1724, %v4232, 0.0
      %4269 = vadd.xlane.f32.xlu0 %v4268
      %v4270 = vpop.xlane.xlu0 %4269
      %v4271 = vsel %vm1724, %v4234, 0.0
      %4272 = vadd.xlane.f32.xlu0 %v4271
      %v4273 = vpop.xlane.xlu0 %4272
      %v4274 = vsel %vm1724, %v4236, 0.0
      %4275 = vadd.xlane.f32.xlu0 %v4274
      %v4276 = vpop.xlane.xlu0 %4275
      %v4277 = vsel %vm1724, %v4238, 0.0
      %4278 = vadd.xlane.f32.xlu0 %v4277
      %v4279 = vpop.xlane.xlu0 %4278
      %v4280 = vsel %vm1724, %v4240, 0.0
      %4281 = vadd.xlane.f32.xlu0 %v4280
      %v4282 = vpop.xlane.xlu0 %4281
      %v4283 = vsel %vm1724, %v4242, 0.0
      %4284 = vadd.xlane.f32.xlu0 %v4283
      %v4285 = vpop.xlane.xlu0 %4284
      %v4286 = vsel %vm1724, %v4244, 0.0
      %4287 = vadd.xlane.f32.xlu0 %v4286
      %v4288 = vpop.xlane.xlu0 %4287
      %v4289 = vsel %vm1724, %v4246, 0.0
      %4290 = vadd.xlane.f32.xlu0 %v4289
      %v4291 = vpop.xlane.xlu0 %4290
      %v4292 = vsel %vm1724, %v4248, 0.0
      %4293 = vadd.xlane.f32.xlu0 %v4292
      %v4294 = vpop.xlane.xlu0 %4293
      %v4295 = vsel %vm1724, %v4250, 0.0
      %4296 = vadd.xlane.f32.xlu0 %v4295
      %v4297 = vpop.xlane.xlu0 %4296
      %v4298 = vsel %vm1724, %v4252, 0.0
      %4299 = vadd.xlane.f32.xlu0 %v4298
      %v4300 = vpop.xlane.xlu0 %4299
      %v4301 = vrcp.pop %v4255
      %v4302 = vmul.f32 %v4255, %v4301
      %v4303 = vsub.f32 1.0, %v4302
      %v4304 = vmul.f32 %v4301, %v4303
      %v4305 = vadd.f32 %v4301, %v4304
      %vm4306 = vweird.f32 %v4255
      %vm4307 = vweird.f32 %v4301
      %vm4308 = vmor %vm4306, %vm4307
      %v4309 = vsel %vm4308, %v4301, %v4305
      %v4310 = vand.u32 2147483647, %v4255
      %vm4311 = vcmp.eq.f32.partialorder %v4310, 8.507059e+37
      %v4312 = vand.u32 %v4255, 2147483648
      %v4313 = vor.u32 1.1754944e-38, %v4312
      %v4314 = vsel %vm4311, %v4313, %v4309
      %v4315 = vmul.f32 %v4222, %v4314
      %v4316 = vrcp.pop %v4258
      %v4317 = vmul.f32 %v4258, %v4316
      %v4318 = vsub.f32 1.0, %v4317
      %v4319 = vmul.f32 %v4316, %v4318
      %v4320 = vadd.f32 %v4316, %v4319
      %vm4321 = vweird.f32 %v4258
      %vm4322 = vweird.f32 %v4316
      %vm4323 = vmor %vm4321, %vm4322
      %v4324 = vsel %vm4323, %v4316, %v4320
      %v4325 = vand.u32 2147483647, %v4258
      %vm4326 = vcmp.eq.f32.partialorder %v4325, 8.507059e+37
      %v4327 = vand.u32 %v4258, 2147483648
      %v4328 = vor.u32 1.1754944e-38, %v4327
      %v4329 = vsel %vm4326, %v4328, %v4324
      %v4330 = vmul.f32 %v4224, %v4329
      %v4331 = vrcp.pop %v4261
      %v4332 = vmul.f32 %v4261, %v4331
      %v4333 = vsub.f32 1.0, %v4332
      %v4334 = vmul.f32 %v4331, %v4333
      %v4335 = vadd.f32 %v4331, %v4334
      %vm4336 = vweird.f32 %v4261
      %vm4337 = vweird.f32 %v4331
      %vm4338 = vmor %vm4336, %vm4337
      %v4339 = vsel %vm4338, %v4331, %v4335
      %v4340 = vand.u32 2147483647, %v4261
      %vm4341 = vcmp.eq.f32.partialorder %v4340, 8.507059e+37
      %v4342 = vand.u32 %v4261, 2147483648
      %v4343 = vor.u32 1.1754944e-38, %v4342
      %v4344 = vsel %vm4341, %v4343, %v4339
      %v4345 = vmul.f32 %v4226, %v4344
      %v4346 = vrcp.pop %v4264
      %v4347 = vmul.f32 %v4264, %v4346
      %v4348 = vsub.f32 1.0, %v4347
      %v4349 = vmul.f32 %v4346, %v4348
      %v4350 = vadd.f32 %v4346, %v4349
      %vm4351 = vweird.f32 %v4264
      %vm4352 = vweird.f32 %v4346
      %vm4353 = vmor %vm4351, %vm4352
      %v4354 = vsel %vm4353, %v4346, %v4350
      %v4355 = vand.u32 2147483647, %v4264
      %vm4356 = vcmp.eq.f32.partialorder %v4355, 8.507059e+37
      %v4357 = vand.u32 %v4264, 2147483648
      %v4358 = vor.u32 1.1754944e-38, %v4357
      %v4359 = vsel %vm4356, %v4358, %v4354
      %v4360 = vmul.f32 %v4228, %v4359
      %v4361 = vrcp.pop %v4267
      %v4362 = vmul.f32 %v4267, %v4361
      %v4363 = vsub.f32 1.0, %v4362
      %v4364 = vmul.f32 %v4361, %v4363
      %v4365 = vadd.f32 %v4361, %v4364
      %vm4366 = vweird.f32 %v4267
      %vm4367 = vweird.f32 %v4361
      %vm4368 = vmor %vm4366, %vm4367
      %v4369 = vsel %vm4368, %v4361, %v4365
      %v4370 = vand.u32 2147483647, %v4267
      %vm4371 = vcmp.eq.f32.partialorder %v4370, 8.507059e+37
      %v4372 = vand.u32 %v4267, 2147483648
      %v4373 = vor.u32 1.1754944e-38, %v4372
      %v4374 = vsel %vm4371, %v4373, %v4369
      %v4375 = vmul.f32 %v4230, %v4374
      %v4376 = vrcp.pop %v4270
      %v4377 = vmul.f32 %v4270, %v4376
      %v4378 = vsub.f32 1.0, %v4377
      %v4379 = vmul.f32 %v4376, %v4378
      %v4380 = vadd.f32 %v4376, %v4379
      %vm4381 = vweird.f32 %v4270
      %vm4382 = vweird.f32 %v4376
      %vm4383 = vmor %vm4381, %vm4382
      %v4384 = vsel %vm4383, %v4376, %v4380
      %v4385 = vand.u32 2147483647, %v4270
      %vm4386 = vcmp.eq.f32.partialorder %v4385, 8.507059e+37
      %v4387 = vand.u32 %v4270, 2147483648
      %v4388 = vor.u32 1.1754944e-38, %v4387
      %v4389 = vsel %vm4386, %v4388, %v4384
      %v4390 = vmul.f32 %v4232, %v4389
      %v4391 = vrcp.pop %v4273
      %v4392 = vmul.f32 %v4273, %v4391
      %v4393 = vsub.f32 1.0, %v4392
      %v4394 = vmul.f32 %v4391, %v4393
      %v4395 = vadd.f32 %v4391, %v4394
      %vm4396 = vweird.f32 %v4273
      %vm4397 = vweird.f32 %v4391
      %vm4398 = vmor %vm4396, %vm4397
      %v4399 = vsel %vm4398, %v4391, %v4395
      %v4400 = vand.u32 2147483647, %v4273
      %vm4401 = vcmp.eq.f32.partialorder %v4400, 8.507059e+37
      %v4402 = vand.u32 %v4273, 2147483648
      %v4403 = vor.u32 1.1754944e-38, %v4402
      %v4404 = vsel %vm4401, %v4403, %v4399
      %v4405 = vmul.f32 %v4234, %v4404
      %v4406 = vrcp.pop %v4276
      %v4407 = vmul.f32 %v4276, %v4406
      %v4408 = vsub.f32 1.0, %v4407
      %v4409 = vmul.f32 %v4406, %v4408
      %v4410 = vadd.f32 %v4406, %v4409
      %vm4411 = vweird.f32 %v4276
      %vm4412 = vweird.f32 %v4406
      %vm4413 = vmor %vm4411, %vm4412
      %v4414 = vsel %vm4413, %v4406, %v4410
      %v4415 = vand.u32 2147483647, %v4276
      %vm4416 = vcmp.eq.f32.partialorder %v4415, 8.507059e+37
      %v4417 = vand.u32 %v4276, 2147483648
      %v4418 = vor.u32 1.1754944e-38, %v4417
      %v4419 = vsel %vm4416, %v4418, %v4414
      %v4420 = vmul.f32 %v4236, %v4419
      %v4421 = vrcp.pop %v4279
      %v4422 = vmul.f32 %v4279, %v4421
      %v4423 = vsub.f32 1.0, %v4422
      %v4424 = vmul.f32 %v4421, %v4423
      %v4425 = vadd.f32 %v4421, %v4424
      %vm4426 = vweird.f32 %v4279
      %vm4427 = vweird.f32 %v4421
      %vm4428 = vmor %vm4426, %vm4427
      %v4429 = vsel %vm4428, %v4421, %v4425
      %v4430 = vand.u32 2147483647, %v4279
      %vm4431 = vcmp.eq.f32.partialorder %v4430, 8.507059e+37
      %v4432 = vand.u32 %v4279, 2147483648
      %v4433 = vor.u32 1.1754944e-38, %v4432
      %v4434 = vsel %vm4431, %v4433, %v4429
      %v4435 = vmul.f32 %v4238, %v4434
      %v4436 = vrcp.pop %v4282
      %v4437 = vmul.f32 %v4282, %v4436
      %v4438 = vsub.f32 1.0, %v4437
      %v4439 = vmul.f32 %v4436, %v4438
      %v4440 = vadd.f32 %v4436, %v4439
      %vm4441 = vweird.f32 %v4282
      %vm4442 = vweird.f32 %v4436
      %vm4443 = vmor %vm4441, %vm4442
      %v4444 = vsel %vm4443, %v4436, %v4440
      %v4445 = vand.u32 2147483647, %v4282
      %vm4446 = vcmp.eq.f32.partialorder %v4445, 8.507059e+37
      %v4447 = vand.u32 %v4282, 2147483648
      %v4448 = vor.u32 1.1754944e-38, %v4447
      %v4449 = vsel %vm4446, %v4448, %v4444
      %v4450 = vmul.f32 %v4240, %v4449
      %v4451 = vrcp.pop %v4285
      %v4452 = vmul.f32 %v4285, %v4451
      %v4453 = vsub.f32 1.0, %v4452
      %v4454 = vmul.f32 %v4451, %v4453
      %v4455 = vadd.f32 %v4451, %v4454
      %vm4456 = vweird.f32 %v4285
      %vm4457 = vweird.f32 %v4451
      %vm4458 = vmor %vm4456, %vm4457
      %v4459 = vsel %vm4458, %v4451, %v4455
      %v4460 = vand.u32 2147483647, %v4285
      %vm4461 = vcmp.eq.f32.partialorder %v4460, 8.507059e+37
      %v4462 = vand.u32 %v4285, 2147483648
      %v4463 = vor.u32 1.1754944e-38, %v4462
      %v4464 = vsel %vm4461, %v4463, %v4459
      %v4465 = vmul.f32 %v4242, %v4464
      %v4466 = vrcp.pop %v4288
      %v4467 = vmul.f32 %v4288, %v4466
      %v4468 = vsub.f32 1.0, %v4467
      %v4469 = vmul.f32 %v4466, %v4468
      %v4470 = vadd.f32 %v4466, %v4469
      %vm4471 = vweird.f32 %v4288
      %vm4472 = vweird.f32 %v4466
      %vm4473 = vmor %vm4471, %vm4472
      %v4474 = vsel %vm4473, %v4466, %v4470
      %v4475 = vand.u32 2147483647, %v4288
      %vm4476 = vcmp.eq.f32.partialorder %v4475, 8.507059e+37
      %v4477 = vand.u32 %v4288, 2147483648
      %v4478 = vor.u32 1.1754944e-38, %v4477
      %v4479 = vsel %vm4476, %v4478, %v4474
      %v4480 = vmul.f32 %v4244, %v4479
      %v4481 = vrcp.pop %v4291
      %v4482 = vmul.f32 %v4291, %v4481
      %v4483 = vsub.f32 1.0, %v4482
      %v4484 = vmul.f32 %v4481, %v4483
      %v4485 = vadd.f32 %v4481, %v4484
      %vm4486 = vweird.f32 %v4291
      %vm4487 = vweird.f32 %v4481
      %vm4488 = vmor %vm4486, %vm4487
      %v4489 = vsel %vm4488, %v4481, %v4485
      %v4490 = vand.u32 2147483647, %v4291
      %vm4491 = vcmp.eq.f32.partialorder %v4490, 8.507059e+37
      %v4492 = vand.u32 %v4291, 2147483648
      %v4493 = vor.u32 1.1754944e-38, %v4492
      %v4494 = vsel %vm4491, %v4493, %v4489
      %v4495 = vmul.f32 %v4246, %v4494
      %v4496 = vrcp.pop %v4294
      %v4497 = vmul.f32 %v4294, %v4496
      %v4498 = vsub.f32 1.0, %v4497
      %v4499 = vmul.f32 %v4496, %v4498
      %v4500 = vadd.f32 %v4496, %v4499
      %vm4501 = vweird.f32 %v4294
      %vm4502 = vweird.f32 %v4496
      %vm4503 = vmor %vm4501, %vm4502
      %v4504 = vsel %vm4503, %v4496, %v4500
      %v4505 = vand.u32 2147483647, %v4294
      %vm4506 = vcmp.eq.f32.partialorder %v4505, 8.507059e+37
      %v4507 = vand.u32 %v4294, 2147483648
      %v4508 = vor.u32 1.1754944e-38, %v4507
      %v4509 = vsel %vm4506, %v4508, %v4504
      %v4510 = vmul.f32 %v4248, %v4509
      %v4511 = vrcp.pop %v4297
      %v4512 = vmul.f32 %v4297, %v4511
      %v4513 = vsub.f32 1.0, %v4512
      %v4514 = vmul.f32 %v4511, %v4513
      %v4515 = vadd.f32 %v4511, %v4514
      %vm4516 = vweird.f32 %v4297
      %vm4517 = vweird.f32 %v4511
      %vm4518 = vmor %vm4516, %vm4517
      %v4519 = vsel %vm4518, %v4511, %v4515
      %v4520 = vand.u32 2147483647, %v4297
      %vm4521 = vcmp.eq.f32.partialorder %v4520, 8.507059e+37
      %v4522 = vand.u32 %v4297, 2147483648
      %v4523 = vor.u32 1.1754944e-38, %v4522
      %v4524 = vsel %vm4521, %v4523, %v4519
      %v4525 = vmul.f32 %v4250, %v4524
      %v4526 = vrcp.pop %v4300
      %v4527 = vmul.f32 %v4300, %v4526
      %v4528 = vsub.f32 1.0, %v4527
      %v4529 = vmul.f32 %v4526, %v4528
      %v4530 = vadd.f32 %v4526, %v4529
      %vm4531 = vweird.f32 %v4300
      %vm4532 = vweird.f32 %v4526
      %vm4533 = vmor %vm4531, %vm4532
      %v4534 = vsel %vm4533, %v4526, %v4530
      %v4535 = vand.u32 2147483647, %v4300
      %vm4536 = vcmp.eq.f32.partialorder %v4535, 8.507059e+37
      %v4537 = vand.u32 %v4300, 2147483648
      %v4538 = vor.u32 1.1754944e-38, %v4537
      %v4539 = vsel %vm4536, %v4538, %v4534
      %v4540 = vmul.f32 %v4252, %v4539
      %v4541 = vpack.c.bf16 %v4315, %v4315
      %v4542 = vpack.c.bf16 %v4330, %v4330
      %v4543 = vpack.c.bf16 %v4345, %v4345
      %v4544 = vpack.c.bf16 %v4360, %v4360
      %v4545 = vpack.c.bf16 %v4375, %v4375
      %v4546 = vpack.c.bf16 %v4390, %v4390
      %v4547 = vpack.c.bf16 %v4405, %v4405
      %v4548 = vpack.c.bf16 %v4420, %v4420
      %v4549 = vpack.c.bf16 %v4435, %v4435
      %v4550 = vpack.c.bf16 %v4450, %v4450
      %v4551 = vpack.c.bf16 %v4465, %v4465
      %v4552 = vpack.c.bf16 %v4480, %v4480
      %v4553 = vpack.c.bf16 %v4495, %v4495
      %v4554 = vpack.c.bf16 %v4510, %v4510
      %v4555 = vpack.c.bf16 %v4525, %v4525
      %v4556 = vpack.c.bf16 %v4540, %v4540
      %v4559 = vunpack.c.l.b16 %v4541
      %v4560 = vunpack.c.l.b16 %v4542
      %v4561 = vpack.c.b16 %v4560, %v4559
      %4562 = vrot.lane.b32.xlu0 %v2150, 40
      %v4563 = vpop.permute.xlu0 %4562
      %v4566 = vsel %vm1724, %v4561, 0
      %4568 = vmatpush.bf16.msra.mxu0 0
      %4569 = vmatpush.bf16.msra.mxu0 0
      %4570 = vmatpush.bf16.msra.mxu0 0
      %4571 = vmatpush.bf16.msra.mxu0 0
      %4572 = vmatpush.bf16.msra.mxu0 0
      %4573 = vmatpush.bf16.msra.mxu0 0
      %4574 = vmatpush.bf16.msra.mxu0 0
      %4575 = vmatpush.bf16.msra.mxu0 %v4563
      %4576 = vmatmul.bf16.gmra.mxu0 %v4566
      %v4577 = vpop.f32.mrf.mxu0
      %v4578 = vadd.f32 0.0, %v4577
      %v4579 = vpop.f32.mrf.mxu0
      %v4580 = vadd.f32 0.0, %v4579
      %4581 = vdwg.mxu0
      %v4584 = vunpack.c.l.b16 %v4543
      %v4585 = vunpack.c.l.b16 %v4544
      %v4586 = vpack.c.b16 %v4585, %v4584
      %4587 = vrot.lane.b32.xlu0 %v2180, 40
      %v4588 = vpop.permute.xlu0 %4587
      %v4591 = vsel %vm1724, %v4586, 0
      %4593 = vmatpush.bf16.msra.mxu0 0
      %4594 = vmatpush.bf16.msra.mxu0 0
      %4595 = vmatpush.bf16.msra.mxu0 0
      %4596 = vmatpush.bf16.msra.mxu0 0
      %4597 = vmatpush.bf16.msra.mxu0 0
      %4598 = vmatpush.bf16.msra.mxu0 0
      %4599 = vmatpush.bf16.msra.mxu0 0
      %4600 = vmatpush.bf16.msra.mxu0 %v4588
      %4601 = vmatmul.bf16.gmra.mxu0 %v4591
      %v4602 = vpop.f32.mrf.mxu0
      %v4603 = vadd.f32 0.0, %v4602
      %v4604 = vpop.f32.mrf.mxu0
      %v4605 = vadd.f32 0.0, %v4604
      %4606 = vdwg.mxu0
      %v4609 = vunpack.c.l.b16 %v4545
      %v4610 = vunpack.c.l.b16 %v4546
      %v4611 = vpack.c.b16 %v4610, %v4609
      %4612 = vrot.lane.b32.xlu0 %v2210, 40
      %v4613 = vpop.permute.xlu0 %4612
      %v4616 = vsel %vm1724, %v4611, 0
      %4618 = vmatpush.bf16.msra.mxu0 0
      %4619 = vmatpush.bf16.msra.mxu0 0
      %4620 = vmatpush.bf16.msra.mxu0 0
      %4621 = vmatpush.bf16.msra.mxu0 0
      %4622 = vmatpush.bf16.msra.mxu0 0
      %4623 = vmatpush.bf16.msra.mxu0 0
      %4624 = vmatpush.bf16.msra.mxu0 0
      %4625 = vmatpush.bf16.msra.mxu0 %v4613
      %4626 = vmatmul.bf16.gmra.mxu0 %v4616
      %v4627 = vpop.f32.mrf.mxu0
      %v4628 = vadd.f32 0.0, %v4627
      %v4629 = vpop.f32.mrf.mxu0
      %v4630 = vadd.f32 0.0, %v4629
      %4631 = vdwg.mxu0
      %v4634 = vunpack.c.l.b16 %v4547
      %v4635 = vunpack.c.l.b16 %v4548
      %v4636 = vpack.c.b16 %v4635, %v4634
      %4637 = vrot.lane.b32.xlu0 %v2240, 40
      %v4638 = vpop.permute.xlu0 %4637
      %v4641 = vsel %vm1724, %v4636, 0
      %4643 = vmatpush.bf16.msra.mxu0 0
      %4644 = vmatpush.bf16.msra.mxu0 0
      %4645 = vmatpush.bf16.msra.mxu0 0
      %4646 = vmatpush.bf16.msra.mxu0 0
      %4647 = vmatpush.bf16.msra.mxu0 0
      %4648 = vmatpush.bf16.msra.mxu0 0
      %4649 = vmatpush.bf16.msra.mxu0 0
      %4650 = vmatpush.bf16.msra.mxu0 %v4638
      %4651 = vmatmul.bf16.gmra.mxu0 %v4641
      %v4652 = vpop.f32.mrf.mxu0
      %v4653 = vadd.f32 0.0, %v4652
      %v4654 = vpop.f32.mrf.mxu0
      %v4655 = vadd.f32 0.0, %v4654
      %4656 = vdwg.mxu0
      %v4659 = vunpack.c.l.b16 %v4549
      %v4660 = vunpack.c.l.b16 %v4550
      %v4661 = vpack.c.b16 %v4660, %v4659
      %4662 = vrot.lane.b32.xlu0 %v2270, 40
      %v4663 = vpop.permute.xlu0 %4662
      %v4666 = vsel %vm1724, %v4661, 0
      %4668 = vmatpush.bf16.msra.mxu0 0
      %4669 = vmatpush.bf16.msra.mxu0 0
      %4670 = vmatpush.bf16.msra.mxu0 0
      %4671 = vmatpush.bf16.msra.mxu0 0
      %4672 = vmatpush.bf16.msra.mxu0 0
      %4673 = vmatpush.bf16.msra.mxu0 0
      %4674 = vmatpush.bf16.msra.mxu0 0
      %4675 = vmatpush.bf16.msra.mxu0 %v4663
      %4676 = vmatmul.bf16.gmra.mxu0 %v4666
      %v4677 = vpop.f32.mrf.mxu0
      %v4678 = vadd.f32 0.0, %v4677
      %v4679 = vpop.f32.mrf.mxu0
      %v4680 = vadd.f32 0.0, %v4679
      %4681 = vdwg.mxu0
      %v4684 = vunpack.c.l.b16 %v4551
      %v4685 = vunpack.c.l.b16 %v4552
      %v4686 = vpack.c.b16 %v4685, %v4684
      %4687 = vrot.lane.b32.xlu0 %v2300, 40
      %v4688 = vpop.permute.xlu0 %4687
      %v4691 = vsel %vm1724, %v4686, 0
      %4693 = vmatpush.bf16.msra.mxu0 0
      %4694 = vmatpush.bf16.msra.mxu0 0
      %4695 = vmatpush.bf16.msra.mxu0 0
      %4696 = vmatpush.bf16.msra.mxu0 0
      %4697 = vmatpush.bf16.msra.mxu0 0
      %4698 = vmatpush.bf16.msra.mxu0 0
      %4699 = vmatpush.bf16.msra.mxu0 0
      %4700 = vmatpush.bf16.msra.mxu0 %v4688
      %4701 = vmatmul.bf16.gmra.mxu0 %v4691
      %v4702 = vpop.f32.mrf.mxu0
      %v4703 = vadd.f32 0.0, %v4702
      %v4704 = vpop.f32.mrf.mxu0
      %v4705 = vadd.f32 0.0, %v4704
      %4706 = vdwg.mxu0
      %v4709 = vunpack.c.l.b16 %v4553
      %v4710 = vunpack.c.l.b16 %v4554
      %v4711 = vpack.c.b16 %v4710, %v4709
      %4712 = vrot.lane.b32.xlu0 %v2330, 40
      %v4713 = vpop.permute.xlu0 %4712
      %v4716 = vsel %vm1724, %v4711, 0
      %4718 = vmatpush.bf16.msra.mxu0 0
      %4719 = vmatpush.bf16.msra.mxu0 0
      %4720 = vmatpush.bf16.msra.mxu0 0
      %4721 = vmatpush.bf16.msra.mxu0 0
      %4722 = vmatpush.bf16.msra.mxu0 0
      %4723 = vmatpush.bf16.msra.mxu0 0
      %4724 = vmatpush.bf16.msra.mxu0 0
      %4725 = vmatpush.bf16.msra.mxu0 %v4713
      %4726 = vmatmul.bf16.gmra.mxu0 %v4716
      %v4727 = vpop.f32.mrf.mxu0
      %v4728 = vadd.f32 0.0, %v4727
      %v4729 = vpop.f32.mrf.mxu0
      %v4730 = vadd.f32 0.0, %v4729
      %4731 = vdwg.mxu0
      %v4734 = vunpack.c.l.b16 %v4555
      %v4735 = vunpack.c.l.b16 %v4556
      %v4736 = vpack.c.b16 %v4735, %v4734
      %4737 = vrot.lane.b32.xlu0 %v2360, 40
      %v4738 = vpop.permute.xlu0 %4737
      %v4741 = vsel %vm1724, %v4736, 0
      %4743 = vmatpush.bf16.msra.mxu0 0
      %4744 = vmatpush.bf16.msra.mxu0 0
      %4745 = vmatpush.bf16.msra.mxu0 0
      %4746 = vmatpush.bf16.msra.mxu0 0
      %4747 = vmatpush.bf16.msra.mxu0 0
      %4748 = vmatpush.bf16.msra.mxu0 0
      %4749 = vmatpush.bf16.msra.mxu0 0
      %4750 = vmatpush.bf16.msra.mxu0 %v4738
      %4751 = vmatmul.bf16.gmra.mxu0 %v4741
      %v4752 = vpop.f32.mrf.mxu0
      %v4753 = vadd.f32 0.0, %v4752
      %v4754 = vpop.f32.mrf.mxu0
      %v4755 = vadd.f32 0.0, %v4754
      %4756 = vdwg.mxu0
      %4773 = vrot.lane.b32.xlu0 %v2994, 8
      %v4774 = vpop.permute.xlu0 %4773
      %4775 = vrot.lane.b32.xlu0 %v2996, 8
      %v4776 = vpop.permute.xlu0 %4775
      %4777 = vrot.lane.b32.xlu0 %v3019, 8
      %v4778 = vpop.permute.xlu0 %4777
      %4779 = vrot.lane.b32.xlu0 %v3021, 8
      %v4780 = vpop.permute.xlu0 %4779
      %4781 = vrot.lane.b32.xlu0 %v3044, 8
      %v4782 = vpop.permute.xlu0 %4781
      %4783 = vrot.lane.b32.xlu0 %v3046, 8
      %v4784 = vpop.permute.xlu0 %4783
      %4785 = vrot.lane.b32.xlu0 %v3069, 8
      %v4786 = vpop.permute.xlu0 %4785
      %4787 = vrot.lane.b32.xlu0 %v3071, 8
      %v4788 = vpop.permute.xlu0 %4787
      %4789 = vrot.lane.b32.xlu0 %v3094, 8
      %v4790 = vpop.permute.xlu0 %4789
      %4791 = vrot.lane.b32.xlu0 %v3096, 8
      %v4792 = vpop.permute.xlu0 %4791
      %4793 = vrot.lane.b32.xlu0 %v3119, 8
      %v4794 = vpop.permute.xlu0 %4793
      %4795 = vrot.lane.b32.xlu0 %v3121, 8
      %v4796 = vpop.permute.xlu0 %4795
      %4797 = vrot.lane.b32.xlu0 %v3144, 8
      %v4798 = vpop.permute.xlu0 %4797
      %4799 = vrot.lane.b32.xlu0 %v3146, 8
      %v4800 = vpop.permute.xlu0 %4799
      %4801 = vrot.lane.b32.xlu0 %v3169, 8
      %v4802 = vpop.permute.xlu0 %4801
      %4803 = vrot.lane.b32.xlu0 %v3171, 8
      %v4804 = vpop.permute.xlu0 %4803
      %4837 = vrot.lane.b32.xlu0 %v3786, 16
      %v4838 = vpop.permute.xlu0 %4837
      %4839 = vrot.lane.b32.xlu0 %v3788, 16
      %v4840 = vpop.permute.xlu0 %4839
      %4841 = vrot.lane.b32.xlu0 %v3811, 16
      %v4842 = vpop.permute.xlu0 %4841
      %4843 = vrot.lane.b32.xlu0 %v3813, 16
      %v4844 = vpop.permute.xlu0 %4843
      %4845 = vrot.lane.b32.xlu0 %v3836, 16
      %v4846 = vpop.permute.xlu0 %4845
      %4847 = vrot.lane.b32.xlu0 %v3838, 16
      %v4848 = vpop.permute.xlu0 %4847
      %4849 = vrot.lane.b32.xlu0 %v3861, 16
      %v4850 = vpop.permute.xlu0 %4849
      %4851 = vrot.lane.b32.xlu0 %v3863, 16
      %v4852 = vpop.permute.xlu0 %4851
      %4853 = vrot.lane.b32.xlu0 %v3886, 16
      %v4854 = vpop.permute.xlu0 %4853
      %4855 = vrot.lane.b32.xlu0 %v3888, 16
      %v4856 = vpop.permute.xlu0 %4855
      %4857 = vrot.lane.b32.xlu0 %v3911, 16
      %v4858 = vpop.permute.xlu0 %4857
      %4859 = vrot.lane.b32.xlu0 %v3913, 16
      %v4860 = vpop.permute.xlu0 %4859
      %4861 = vrot.lane.b32.xlu0 %v3936, 16
      %v4862 = vpop.permute.xlu0 %4861
      %4863 = vrot.lane.b32.xlu0 %v3938, 16
      %v4864 = vpop.permute.xlu0 %4863
      %4865 = vrot.lane.b32.xlu0 %v3961, 16
      %v4866 = vpop.permute.xlu0 %4865
      %4867 = vrot.lane.b32.xlu0 %v3963, 16
      %v4868 = vpop.permute.xlu0 %4867
      %4901 = vrot.lane.b32.xlu0 %v4578, 24
      %v4902 = vpop.permute.xlu0 %4901
      %4903 = vrot.lane.b32.xlu0 %v4580, 24
      %v4904 = vpop.permute.xlu0 %4903
      %4905 = vrot.lane.b32.xlu0 %v4603, 24
      %v4906 = vpop.permute.xlu0 %4905
      %4907 = vrot.lane.b32.xlu0 %v4605, 24
      %v4908 = vpop.permute.xlu0 %4907
      %4909 = vrot.lane.b32.xlu0 %v4628, 24
      %v4910 = vpop.permute.xlu0 %4909
      %4911 = vrot.lane.b32.xlu0 %v4630, 24
      %v4912 = vpop.permute.xlu0 %4911
      %4913 = vrot.lane.b32.xlu0 %v4653, 24
      %v4914 = vpop.permute.xlu0 %4913
      %4915 = vrot.lane.b32.xlu0 %v4655, 24
      %v4916 = vpop.permute.xlu0 %4915
      %4917 = vrot.lane.b32.xlu0 %v4678, 24
      %v4918 = vpop.permute.xlu0 %4917
      %4919 = vrot.lane.b32.xlu0 %v4680, 24
      %v4920 = vpop.permute.xlu0 %4919
      %4921 = vrot.lane.b32.xlu0 %v4703, 24
      %v4922 = vpop.permute.xlu0 %4921
      %4923 = vrot.lane.b32.xlu0 %v4705, 24
      %v4924 = vpop.permute.xlu0 %4923
      %4925 = vrot.lane.b32.xlu0 %v4728, 24
      %v4926 = vpop.permute.xlu0 %4925
      %4927 = vrot.lane.b32.xlu0 %v4730, 24
      %v4928 = vpop.permute.xlu0 %4927
      %4929 = vrot.lane.b32.xlu0 %v4753, 24
      %v4930 = vpop.permute.xlu0 %4929
      %4931 = vrot.lane.b32.xlu0 %v4755, 24
      %v4932 = vpop.permute.xlu0 %4931
      %v4949 = vsel %vm1479, %v2167, %v4774
      %v4950 = vsel %vm1479, %v2169, %v4776
      %v4951 = vsel %vm1479, %v2197, %v4778
      %v4952 = vsel %vm1479, %v2199, %v4780
      %v4953 = vsel %vm1479, %v2227, %v4782
      %v4954 = vsel %vm1479, %v2229, %v4784
      %v4955 = vsel %vm1479, %v2257, %v4786
      %v4956 = vsel %vm1479, %v2259, %v4788
      %v4957 = vsel %vm1479, %v2287, %v4790
      %v4958 = vsel %vm1479, %v2289, %v4792
      %v4959 = vsel %vm1479, %v2317, %v4794
      %v4960 = vsel %vm1479, %v2319, %v4796
      %v4961 = vsel %vm1479, %v2347, %v4798
      %v4962 = vsel %vm1479, %v2349, %v4800
      %v4963 = vsel %vm1479, %v2377, %v4802
      %v4964 = vsel %vm1479, %v2379, %v4804
      %v4965 = vsel %vm1724, %v4949, %v4838
      %v4966 = vsel %vm1724, %v4950, %v4840
      %v4967 = vsel %vm1724, %v4951, %v4842
      %v4968 = vsel %vm1724, %v4952, %v4844
      %v4969 = vsel %vm1724, %v4953, %v4846
      %v4970 = vsel %vm1724, %v4954, %v4848
      %v4971 = vsel %vm1724, %v4955, %v4850
      %v4972 = vsel %vm1724, %v4956, %v4852
      %v4973 = vsel %vm1724, %v4957, %v4854
      %v4974 = vsel %vm1724, %v4958, %v4856
      %v4975 = vsel %vm1724, %v4959, %v4858
      %v4976 = vsel %vm1724, %v4960, %v4860
      %v4977 = vsel %vm1724, %v4961, %v4862
      %v4978 = vsel %vm1724, %v4962, %v4864
      %v4979 = vsel %vm1724, %v4963, %v4866
      %v4980 = vsel %vm1724, %v4964, %v4868
      %vm4981 = vcmask 195584
      %v4982 = vsel %vm4981, %v4965, %v4902
      %v4983 = vsel %vm4981, %v4966, %v4904
      %v4984 = vsel %vm4981, %v4967, %v4906
      %v4985 = vsel %vm4981, %v4968, %v4908
      %v4986 = vsel %vm4981, %v4969, %v4910
      %v4987 = vsel %vm4981, %v4970, %v4912
      %v4988 = vsel %vm4981, %v4971, %v4914
      %v4989 = vsel %vm4981, %v4972, %v4916
      %v4990 = vsel %vm4981, %v4973, %v4918
      %v4991 = vsel %vm4981, %v4974, %v4920
      %v4992 = vsel %vm4981, %v4975, %v4922
      %v4993 = vsel %vm4981, %v4976, %v4924
      %v4994 = vsel %vm4981, %v4977, %v4926
      %v4995 = vsel %vm4981, %v4978, %v4928
      %v4996 = vsel %vm4981, %v4979, %v4930
      %v4997 = vsel %vm4981, %v4980, %v4932
      %5014 = vrot.lane.b32.xlu0 %v969, 96
      %v5015 = vpop.permute.xlu0 %5014
      %5016 = vrot.lane.b32.xlu0 %v984, 96
      %v5017 = vpop.permute.xlu0 %5016
      %5018 = vrot.lane.b32.xlu0 %v999, 96
      %v5019 = vpop.permute.xlu0 %5018
      %5020 = vrot.lane.b32.xlu0 %v1014, 96
      %v5021 = vpop.permute.xlu0 %5020
      %5022 = vrot.lane.b32.xlu0 %v1029, 96
      %v5023 = vpop.permute.xlu0 %5022
      %5024 = vrot.lane.b32.xlu0 %v1044, 96
      %v5025 = vpop.permute.xlu0 %5024
      %5026 = vrot.lane.b32.xlu0 %v1059, 96
      %v5027 = vpop.permute.xlu0 %5026
      %5028 = vrot.lane.b32.xlu0 %v1074, 96
      %v5029 = vpop.permute.xlu0 %5028
      %5030 = vrot.lane.b32.xlu0 %v1089, 96
      %v5031 = vpop.permute.xlu0 %5030
      %5032 = vrot.lane.b32.xlu0 %v1104, 96
      %v5033 = vpop.permute.xlu0 %5032
      %5034 = vrot.lane.b32.xlu0 %v1119, 96
      %v5035 = vpop.permute.xlu0 %5034
      %5036 = vrot.lane.b32.xlu0 %v1134, 96
      %v5037 = vpop.permute.xlu0 %5036
      %5038 = vrot.lane.b32.xlu0 %v1149, 96
      %v5039 = vpop.permute.xlu0 %5038
      %5040 = vrot.lane.b32.xlu0 %v1164, 96
      %v5041 = vpop.permute.xlu0 %5040
      %5042 = vrot.lane.b32.xlu0 %v1179, 96
      %v5043 = vpop.permute.xlu0 %5042
      %5044 = vrot.lane.b32.xlu0 %v1194, 96
      %v5045 = vpop.permute.xlu0 %5044
      %v5062 = vmul.f32 %v4982, %v5015
      %v5063 = vmul.f32 %v4983, %v5017
      %v5064 = vmul.f32 %v4984, %v5019
      %v5065 = vmul.f32 %v4985, %v5021
      %v5066 = vmul.f32 %v4986, %v5023
      %v5067 = vmul.f32 %v4987, %v5025
      %v5068 = vmul.f32 %v4988, %v5027
      %v5069 = vmul.f32 %v4989, %v5029
      %v5070 = vmul.f32 %v4990, %v5031
      %v5071 = vmul.f32 %v4991, %v5033
      %v5072 = vmul.f32 %v4992, %v5035
      %v5073 = vmul.f32 %v4993, %v5037
      %v5074 = vmul.f32 %v4994, %v5039
      %v5075 = vmul.f32 %v4995, %v5041
      %v5076 = vmul.f32 %v4996, %v5043
      %v5077 = vmul.f32 %v4997, %v5045
      %v5078 = vpack.c.bf16 %v5063, %v5062
      %v5079 = vpack.c.bf16 %v5065, %v5064
      %v5080 = vpack.c.bf16 %v5067, %v5066
      %v5081 = vpack.c.bf16 %v5069, %v5068
      %v5082 = vpack.c.bf16 %v5071, %v5070
      %v5083 = vpack.c.bf16 %v5073, %v5072
      %v5084 = vpack.c.bf16 %v5075, %v5074
      %v5085 = vpack.c.bf16 %v5077, %v5076
      %v5086 = vld [vmem:[%s6] sm:$0xf]
      %v5087 = vld [vmem:[%s6 + $0x4] sm:$0xf]
      %v5088 = vld [vmem:[%s6 + $0x8] sm:$0xf]
      %v5089 = vld [vmem:[%s6 + $0xc] sm:$0xf]
      %v5094 = vunpack.c.l.b16 %v5086
      %v5095 = vunpack.c.l.b16 %v5087
      %v5096 = vunpack.c.l.b16 %v5088
      %v5097 = vunpack.c.l.b16 %v5089
      %v5098 = vpack.c.b16 %v5095, %v5094
      %v5099 = vpack.c.b16 %v5097, %v5096
      %v5103 = vsel %vm451, %v5078, 0
      %v5106 = vsel %vm451, %v5079, 0
      %v5109 = vsel %vm451, %v5080, 0
      %v5112 = vsel %vm451, %v5081, 0
      %v5115 = vsel %vm451, %v5082, 0
      %v5118 = vsel %vm451, %v5083, 0
      %v5121 = vsel %vm451, %v5084, 0
      %v5124 = vsel %vm451, %v5085, 0
      %5126 = vmatpush.bf16.msra.mxu0 0
      %5127 = vmatpush.bf16.msra.mxu0 0
      %5128 = vmatpush.bf16.msra.mxu0 0
      %5129 = vmatpush.bf16.msra.mxu0 0
      %5130 = vmatpush.bf16.msra.mxu0 0
      %5131 = vmatpush.bf16.msra.mxu0 0
      %5132 = vmatpush.bf16.msra.mxu0 %v5099
      %5133 = vmatpush.bf16.msra.mxu0 %v5098
      %5134 = vmatmul.bf16.gmra.mxu0 %v5103
      %v5135 = vpop.f32.mrf.mxu0
      %v5136 = vadd.f32 0.0, %v5135
      %v5137 = vpop.f32.mrf.mxu0
      %v5138 = vadd.f32 0.0, %v5137
      %5139 = vmatmul.bf16.gmra.mxu0 %v5106
      %v5140 = vpop.f32.mrf.mxu0
      %v5141 = vadd.f32 0.0, %v5140
      %v5142 = vpop.f32.mrf.mxu0
      %v5143 = vadd.f32 0.0, %v5142
      %5144 = vmatmul.bf16.gmra.mxu0 %v5109
      %v5145 = vpop.f32.mrf.mxu0
      %v5146 = vadd.f32 0.0, %v5145
      %v5147 = vpop.f32.mrf.mxu0
      %v5148 = vadd.f32 0.0, %v5147
      %5149 = vmatmul.bf16.gmra.mxu0 %v5112
      %v5150 = vpop.f32.mrf.mxu0
      %v5151 = vadd.f32 0.0, %v5150
      %v5152 = vpop.f32.mrf.mxu0
      %v5153 = vadd.f32 0.0, %v5152
      %5154 = vmatmul.bf16.gmra.mxu0 %v5115
      %v5155 = vpop.f32.mrf.mxu0
      %v5156 = vadd.f32 0.0, %v5155
      %v5157 = vpop.f32.mrf.mxu0
      %v5158 = vadd.f32 0.0, %v5157
      %5159 = vmatmul.bf16.gmra.mxu0 %v5118
      %v5160 = vpop.f32.mrf.mxu0
      %v5161 = vadd.f32 0.0, %v5160
      %v5162 = vpop.f32.mrf.mxu0
      %v5163 = vadd.f32 0.0, %v5162
      %5164 = vmatmul.bf16.gmra.mxu0 %v5121
      %v5165 = vpop.f32.mrf.mxu0
      %v5166 = vadd.f32 0.0, %v5165
      %v5167 = vpop.f32.mrf.mxu0
      %v5168 = vadd.f32 0.0, %v5167
      %5169 = vmatmul.bf16.gmra.mxu0 %v5124
      %v5170 = vpop.f32.mrf.mxu0
      %v5171 = vadd.f32 0.0, %v5170
      %v5172 = vpop.f32.mrf.mxu0
      %v5173 = vadd.f32 0.0, %v5172
      %5174 = vdwg.mxu0
      %v5175 = vadd.f32 %v418, %v5136
      %v5176 = vadd.f32 %v419, %v5138
      %v5177 = vadd.f32 %v420, %v5141
      %v5178 = vadd.f32 %v421, %v5143
      %v5179 = vadd.f32 %v422, %v5146
      %v5180 = vadd.f32 %v423, %v5148
      %v5181 = vadd.f32 %v424, %v5151
      %v5182 = vadd.f32 %v425, %v5153
      %v5183 = vadd.f32 %v426, %v5156
      %v5184 = vadd.f32 %v427, %v5158
      %v5185 = vadd.f32 %v428, %v5161
      %v5186 = vadd.f32 %v429, %v5163
      %v5187 = vadd.f32 %v430, %v5166
      %v5188 = vadd.f32 %v431, %v5168
      %v5189 = vadd.f32 %v432, %v5171
      %v5190 = vadd.f32 %v433, %v5173
      %v5191 = vld [vmem:[%s7] sm:$0x1]
      %v5192 = vmul.f32 %v5175, %v5175
      %v5193 = vmul.f32 %v5176, %v5176
      %v5194 = vmul.f32 %v5177, %v5177
      %v5195 = vmul.f32 %v5178, %v5178
      %v5196 = vmul.f32 %v5179, %v5179
      %v5197 = vmul.f32 %v5180, %v5180
      %v5198 = vmul.f32 %v5181, %v5181
      %v5199 = vmul.f32 %v5182, %v5182
      %v5200 = vmul.f32 %v5183, %v5183
      %v5201 = vmul.f32 %v5184, %v5184
      %v5202 = vmul.f32 %v5185, %v5185
      %v5203 = vmul.f32 %v5186, %v5186
      %v5204 = vmul.f32 %v5187, %v5187
      %v5205 = vmul.f32 %v5188, %v5188
      %v5206 = vmul.f32 %v5189, %v5189
      %v5207 = vmul.f32 %v5190, %v5190
      %v5208 = vsel %vm451, %v5192, 0.0
      %5209 = vadd.xlane.f32.xlu0 %v5208
      %v5210 = vpop.xlane.xlu0 %5209
      %v5211 = vsel %vm451, %v5193, 0.0
      %5212 = vadd.xlane.f32.xlu0 %v5211
      %v5213 = vpop.xlane.xlu0 %5212
      %v5214 = vsel %vm451, %v5194, 0.0
      %5215 = vadd.xlane.f32.xlu0 %v5214
      %v5216 = vpop.xlane.xlu0 %5215
      %v5217 = vsel %vm451, %v5195, 0.0
      %5218 = vadd.xlane.f32.xlu0 %v5217
      %v5219 = vpop.xlane.xlu0 %5218
      %v5220 = vsel %vm451, %v5196, 0.0
      %5221 = vadd.xlane.f32.xlu0 %v5220
      %v5222 = vpop.xlane.xlu0 %5221
      %v5223 = vsel %vm451, %v5197, 0.0
      %5224 = vadd.xlane.f32.xlu0 %v5223
      %v5225 = vpop.xlane.xlu0 %5224
      %v5226 = vsel %vm451, %v5198, 0.0
      %5227 = vadd.xlane.f32.xlu0 %v5226
      %v5228 = vpop.xlane.xlu0 %5227
      %v5229 = vsel %vm451, %v5199, 0.0
      %5230 = vadd.xlane.f32.xlu0 %v5229
      %v5231 = vpop.xlane.xlu0 %5230
      %v5232 = vsel %vm451, %v5200, 0.0
      %5233 = vadd.xlane.f32.xlu0 %v5232
      %v5234 = vpop.xlane.xlu0 %5233
      %v5235 = vsel %vm451, %v5201, 0.0
      %5236 = vadd.xlane.f32.xlu0 %v5235
      %v5237 = vpop.xlane.xlu0 %5236
      %v5238 = vsel %vm451, %v5202, 0.0
      %5239 = vadd.xlane.f32.xlu0 %v5238
      %v5240 = vpop.xlane.xlu0 %5239
      %v5241 = vsel %vm451, %v5203, 0.0
      %5242 = vadd.xlane.f32.xlu0 %v5241
      %v5243 = vpop.xlane.xlu0 %5242
      %v5244 = vsel %vm451, %v5204, 0.0
      %5245 = vadd.xlane.f32.xlu0 %v5244
      %v5246 = vpop.xlane.xlu0 %5245
      %v5247 = vsel %vm451, %v5205, 0.0
      %5248 = vadd.xlane.f32.xlu0 %v5247
      %v5249 = vpop.xlane.xlu0 %5248
      %v5250 = vsel %vm451, %v5206, 0.0
      %5251 = vadd.xlane.f32.xlu0 %v5250
      %v5252 = vpop.xlane.xlu0 %5251
      %v5253 = vsel %vm451, %v5207, 0.0
      %5254 = vadd.xlane.f32.xlu0 %v5253
      %v5255 = vpop.xlane.xlu0 %5254
      %v5256 = vmax.f32 %v5210, 1e-24
      %v5257 = vmax.f32 %v5213, 1e-24
      %v5258 = vmax.f32 %v5216, 1e-24
      %v5259 = vmax.f32 %v5219, 1e-24
      %v5260 = vmax.f32 %v5222, 1e-24
      %v5261 = vmax.f32 %v5225, 1e-24
      %v5262 = vmax.f32 %v5228, 1e-24
      %v5263 = vmax.f32 %v5231, 1e-24
      %v5264 = vmax.f32 %v5234, 1e-24
      %v5265 = vmax.f32 %v5237, 1e-24
      %v5266 = vmax.f32 %v5240, 1e-24
      %v5267 = vmax.f32 %v5243, 1e-24
      %v5268 = vmax.f32 %v5246, 1e-24
      %v5269 = vmax.f32 %v5249, 1e-24
      %v5270 = vmax.f32 %v5252, 1e-24
      %v5271 = vmax.f32 %v5255, 1e-24
      %v5272 = vrsqrt.pop %v5256
      %v5273 = vmul.f32 %v5272, %v5256
      %v5274 = vmul.f32 %v5273, %v5272
      %v5275 = vmul.f32 0.5, %v5274
      %v5276 = vsub.f32 1.5, %v5275
      %v5277 = vmul.f32 %v5272, %v5276
      %vm5278 = vweird.f32 %v5256
      %vm5279 = vweird.f32 %v5272
      %vm5280 = vmor %vm5278, %vm5279
      %v5281 = vsel %vm5280, %v5272, %v5277
      %v5282 = vrsqrt.pop %v5257
      %v5283 = vmul.f32 %v5282, %v5257
      %v5284 = vmul.f32 %v5283, %v5282
      %v5285 = vmul.f32 0.5, %v5284
      %v5286 = vsub.f32 1.5, %v5285
      %v5287 = vmul.f32 %v5282, %v5286
      %vm5288 = vweird.f32 %v5257
      %vm5289 = vweird.f32 %v5282
      %vm5290 = vmor %vm5288, %vm5289
      %v5291 = vsel %vm5290, %v5282, %v5287
      %v5292 = vrsqrt.pop %v5258
      %v5293 = vmul.f32 %v5292, %v5258
      %v5294 = vmul.f32 %v5293, %v5292
      %v5295 = vmul.f32 0.5, %v5294
      %v5296 = vsub.f32 1.5, %v5295
      %v5297 = vmul.f32 %v5292, %v5296
      %vm5298 = vweird.f32 %v5258
      %vm5299 = vweird.f32 %v5292
      %vm5300 = vmor %vm5298, %vm5299
      %v5301 = vsel %vm5300, %v5292, %v5297
      %v5302 = vrsqrt.pop %v5259
      %v5303 = vmul.f32 %v5302, %v5259
      %v5304 = vmul.f32 %v5303, %v5302
      %v5305 = vmul.f32 0.5, %v5304
      %v5306 = vsub.f32 1.5, %v5305
      %v5307 = vmul.f32 %v5302, %v5306
      %vm5308 = vweird.f32 %v5259
      %vm5309 = vweird.f32 %v5302
      %vm5310 = vmor %vm5308, %vm5309
      %v5311 = vsel %vm5310, %v5302, %v5307
      %v5312 = vrsqrt.pop %v5260
      %v5313 = vmul.f32 %v5312, %v5260
      %v5314 = vmul.f32 %v5313, %v5312
      %v5315 = vmul.f32 0.5, %v5314
      %v5316 = vsub.f32 1.5, %v5315
      %v5317 = vmul.f32 %v5312, %v5316
      %vm5318 = vweird.f32 %v5260
      %vm5319 = vweird.f32 %v5312
      %vm5320 = vmor %vm5318, %vm5319
      %v5321 = vsel %vm5320, %v5312, %v5317
      %v5322 = vrsqrt.pop %v5261
      %v5323 = vmul.f32 %v5322, %v5261
      %v5324 = vmul.f32 %v5323, %v5322
      %v5325 = vmul.f32 0.5, %v5324
      %v5326 = vsub.f32 1.5, %v5325
      %v5327 = vmul.f32 %v5322, %v5326
      %vm5328 = vweird.f32 %v5261
      %vm5329 = vweird.f32 %v5322
      %vm5330 = vmor %vm5328, %vm5329
      %v5331 = vsel %vm5330, %v5322, %v5327
      %v5332 = vrsqrt.pop %v5262
      %v5333 = vmul.f32 %v5332, %v5262
      %v5334 = vmul.f32 %v5333, %v5332
      %v5335 = vmul.f32 0.5, %v5334
      %v5336 = vsub.f32 1.5, %v5335
      %v5337 = vmul.f32 %v5332, %v5336
      %vm5338 = vweird.f32 %v5262
      %vm5339 = vweird.f32 %v5332
      %vm5340 = vmor %vm5338, %vm5339
      %v5341 = vsel %vm5340, %v5332, %v5337
      %v5342 = vrsqrt.pop %v5263
      %v5343 = vmul.f32 %v5342, %v5263
      %v5344 = vmul.f32 %v5343, %v5342
      %v5345 = vmul.f32 0.5, %v5344
      %v5346 = vsub.f32 1.5, %v5345
      %v5347 = vmul.f32 %v5342, %v5346
      %vm5348 = vweird.f32 %v5263
      %vm5349 = vweird.f32 %v5342
      %vm5350 = vmor %vm5348, %vm5349
      %v5351 = vsel %vm5350, %v5342, %v5347
      %v5352 = vrsqrt.pop %v5264
      %v5353 = vmul.f32 %v5352, %v5264
      %v5354 = vmul.f32 %v5353, %v5352
      %v5355 = vmul.f32 0.5, %v5354
      %v5356 = vsub.f32 1.5, %v5355
      %v5357 = vmul.f32 %v5352, %v5356
      %vm5358 = vweird.f32 %v5264
      %vm5359 = vweird.f32 %v5352
      %vm5360 = vmor %vm5358, %vm5359
      %v5361 = vsel %vm5360, %v5352, %v5357
      %v5362 = vrsqrt.pop %v5265
      %v5363 = vmul.f32 %v5362, %v5265
      %v5364 = vmul.f32 %v5363, %v5362
      %v5365 = vmul.f32 0.5, %v5364
      %v5366 = vsub.f32 1.5, %v5365
      %v5367 = vmul.f32 %v5362, %v5366
      %vm5368 = vweird.f32 %v5265
      %vm5369 = vweird.f32 %v5362
      %vm5370 = vmor %vm5368, %vm5369
      %v5371 = vsel %vm5370, %v5362, %v5367
      %v5372 = vrsqrt.pop %v5266
      %v5373 = vmul.f32 %v5372, %v5266
      %v5374 = vmul.f32 %v5373, %v5372
      %v5375 = vmul.f32 0.5, %v5374
      %v5376 = vsub.f32 1.5, %v5375
      %v5377 = vmul.f32 %v5372, %v5376
      %vm5378 = vweird.f32 %v5266
      %vm5379 = vweird.f32 %v5372
      %vm5380 = vmor %vm5378, %vm5379
      %v5381 = vsel %vm5380, %v5372, %v5377
      %v5382 = vrsqrt.pop %v5267
      %v5383 = vmul.f32 %v5382, %v5267
      %v5384 = vmul.f32 %v5383, %v5382
      %v5385 = vmul.f32 0.5, %v5384
      %v5386 = vsub.f32 1.5, %v5385
      %v5387 = vmul.f32 %v5382, %v5386
      %vm5388 = vweird.f32 %v5267
      %vm5389 = vweird.f32 %v5382
      %vm5390 = vmor %vm5388, %vm5389
      %v5391 = vsel %vm5390, %v5382, %v5387
      %v5392 = vrsqrt.pop %v5268
      %v5393 = vmul.f32 %v5392, %v5268
      %v5394 = vmul.f32 %v5393, %v5392
      %v5395 = vmul.f32 0.5, %v5394
      %v5396 = vsub.f32 1.5, %v5395
      %v5397 = vmul.f32 %v5392, %v5396
      %vm5398 = vweird.f32 %v5268
      %vm5399 = vweird.f32 %v5392
      %vm5400 = vmor %vm5398, %vm5399
      %v5401 = vsel %vm5400, %v5392, %v5397
      %v5402 = vrsqrt.pop %v5269
      %v5403 = vmul.f32 %v5402, %v5269
      %v5404 = vmul.f32 %v5403, %v5402
      %v5405 = vmul.f32 0.5, %v5404
      %v5406 = vsub.f32 1.5, %v5405
      %v5407 = vmul.f32 %v5402, %v5406
      %vm5408 = vweird.f32 %v5269
      %vm5409 = vweird.f32 %v5402
      %vm5410 = vmor %vm5408, %vm5409
      %v5411 = vsel %vm5410, %v5402, %v5407
      %v5412 = vrsqrt.pop %v5270
      %v5413 = vmul.f32 %v5412, %v5270
      %v5414 = vmul.f32 %v5413, %v5412
      %v5415 = vmul.f32 0.5, %v5414
      %v5416 = vsub.f32 1.5, %v5415
      %v5417 = vmul.f32 %v5412, %v5416
      %vm5418 = vweird.f32 %v5270
      %vm5419 = vweird.f32 %v5412
      %vm5420 = vmor %vm5418, %vm5419
      %v5421 = vsel %vm5420, %v5412, %v5417
      %v5422 = vrsqrt.pop %v5271
      %v5423 = vmul.f32 %v5422, %v5271
      %v5424 = vmul.f32 %v5423, %v5422
      %v5425 = vmul.f32 0.5, %v5424
      %v5426 = vsub.f32 1.5, %v5425
      %v5427 = vmul.f32 %v5422, %v5426
      %vm5428 = vweird.f32 %v5271
      %vm5429 = vweird.f32 %v5422
      %vm5430 = vmor %vm5428, %vm5429
      %v5431 = vsel %vm5430, %v5422, %v5427
      %v5432 = vmul.f32 %v5175, %v5281
      %v5433 = vmul.f32 %v5176, %v5291
      %v5434 = vmul.f32 %v5177, %v5301
      %v5435 = vmul.f32 %v5178, %v5311
      %v5436 = vmul.f32 %v5179, %v5321
      %v5437 = vmul.f32 %v5180, %v5331
      %v5438 = vmul.f32 %v5181, %v5341
      %v5439 = vmul.f32 %v5182, %v5351
      %v5440 = vmul.f32 %v5183, %v5361
      %v5441 = vmul.f32 %v5184, %v5371
      %v5442 = vmul.f32 %v5185, %v5381
      %v5443 = vmul.f32 %v5186, %v5391
      %v5444 = vmul.f32 %v5187, %v5401
      %v5445 = vmul.f32 %v5188, %v5411
      %v5446 = vmul.f32 %v5189, %v5421
      %v5447 = vmul.f32 %v5190, %v5431
      %v5449 = vperm.slane %v5191, 0
      %v5451 = vmul.f32 %v5432, %v5449
      %v5452 = vmul.f32 %v5433, %v5449
      %v5453 = vmul.f32 %v5434, %v5449
      %v5454 = vmul.f32 %v5435, %v5449
      %v5455 = vmul.f32 %v5436, %v5449
      %v5456 = vmul.f32 %v5437, %v5449
      %v5457 = vmul.f32 %v5438, %v5449
      %v5458 = vmul.f32 %v5439, %v5449
      %v5459 = vmul.f32 %v5440, %v5449
      %v5460 = vmul.f32 %v5441, %v5449
      %v5461 = vmul.f32 %v5442, %v5449
      %v5462 = vmul.f32 %v5443, %v5449
      %v5463 = vmul.f32 %v5444, %v5449
      %v5464 = vmul.f32 %v5445, %v5449
      %v5465 = vmul.f32 %v5446, %v5449
      %v5466 = vmul.f32 %v5447, %v5449
      %v5467 = vpack.c.bf16 %v5452, %v5451
      %v5468 = vpack.c.bf16 %v5454, %v5453
      %v5469 = vpack.c.bf16 %v5456, %v5455
      %v5470 = vpack.c.bf16 %v5458, %v5457
      %v5471 = vpack.c.bf16 %v5460, %v5459
      %v5472 = vpack.c.bf16 %v5462, %v5461
      %v5473 = vpack.c.bf16 %v5464, %v5463
      %v5474 = vpack.c.bf16 %v5466, %v5465
      %v5475 = vld [vmem:[%s8] sm:$0xf]
      %v5476 = vld [vmem:[%s8 + $0x4] sm:$0xf]
      %v5477 = vld [vmem:[%s8 + $0x8] sm:$0xf]
      %v5478 = vld [vmem:[%s8 + $0xc] sm:$0xf]
      %v5479 = vld [vmem:[%s9] sm:$0x1]
      %v5481 = vperm.slane %v5479, 0
      %v5487 = vunpack.c.l.b16 %v5475
      %v5488 = vunpack.c.l.b16 %v5476
      %v5489 = vunpack.c.l.b16 %v5477
      %v5490 = vunpack.c.l.b16 %v5478
      %v5491 = vpack.c.b16 %v5488, %v5487
      %v5492 = vpack.c.b16 %v5490, %v5489
      %v5496 = vsel %vm451, %v5467, 0
      %v5499 = vsel %vm451, %v5468, 0
      %v5502 = vsel %vm451, %v5469, 0
      %v5505 = vsel %vm451, %v5470, 0
      %v5508 = vsel %vm451, %v5471, 0
      %v5511 = vsel %vm451, %v5472, 0
      %v5514 = vsel %vm451, %v5473, 0
      %v5517 = vsel %vm451, %v5474, 0
      %5519 = vmatpush.bf16.msra.mxu0 0
      %5520 = vmatpush.bf16.msra.mxu0 0
      %5521 = vmatpush.bf16.msra.mxu0 0
      %5522 = vmatpush.bf16.msra.mxu0 0
      %5523 = vmatpush.bf16.msra.mxu0 0
      %5524 = vmatpush.bf16.msra.mxu0 0
      %5525 = vmatpush.bf16.msra.mxu0 %v5492
      %5526 = vmatpush.bf16.msra.mxu0 %v5491
      %5527 = vmatmul.bf16.gmra.mxu0 %v5496
      %v5528 = vpop.f32.mrf.mxu0
      %v5529 = vadd.f32 %v5481, %v5528
      %v5530 = vpop.f32.mrf.mxu0
      %v5531 = vadd.f32 %v5481, %v5530
      %5532 = vmatmul.bf16.gmra.mxu0 %v5499
      %v5533 = vpop.f32.mrf.mxu0
      %v5534 = vadd.f32 %v5481, %v5533
      %v5535 = vpop.f32.mrf.mxu0
      %v5536 = vadd.f32 %v5481, %v5535
      %5537 = vmatmul.bf16.gmra.mxu0 %v5502
      %v5538 = vpop.f32.mrf.mxu0
      %v5539 = vadd.f32 %v5481, %v5538
      %v5540 = vpop.f32.mrf.mxu0
      %v5541 = vadd.f32 %v5481, %v5540
      %5542 = vmatmul.bf16.gmra.mxu0 %v5505
      %v5543 = vpop.f32.mrf.mxu0
      %v5544 = vadd.f32 %v5481, %v5543
      %v5545 = vpop.f32.mrf.mxu0
      %v5546 = vadd.f32 %v5481, %v5545
      %5547 = vmatmul.bf16.gmra.mxu0 %v5508
      %v5548 = vpop.f32.mrf.mxu0
      %v5549 = vadd.f32 %v5481, %v5548
      %v5550 = vpop.f32.mrf.mxu0
      %v5551 = vadd.f32 %v5481, %v5550
      %5552 = vmatmul.bf16.gmra.mxu0 %v5511
      %v5553 = vpop.f32.mrf.mxu0
      %v5554 = vadd.f32 %v5481, %v5553
      %v5555 = vpop.f32.mrf.mxu0
      %v5556 = vadd.f32 %v5481, %v5555
      %5557 = vmatmul.bf16.gmra.mxu0 %v5514
      %v5558 = vpop.f32.mrf.mxu0
      %v5559 = vadd.f32 %v5481, %v5558
      %v5560 = vpop.f32.mrf.mxu0
      %v5561 = vadd.f32 %v5481, %v5560
      %5562 = vmatmul.bf16.gmra.mxu0 %v5517
      %v5563 = vpop.f32.mrf.mxu0
      %v5564 = vadd.f32 %v5481, %v5563
      %v5565 = vpop.f32.mrf.mxu0
      %v5566 = vadd.f32 %v5481, %v5565
      %5567 = vdwg.mxu0
      %v5568 = vmul.f32 %v5529, 0.5
      %v5569 = vmul.f32 %v5531, 0.5
      %v5570 = vmul.f32 %v5534, 0.5
      %v5571 = vmul.f32 %v5536, 0.5
      %v5572 = vmul.f32 %v5539, 0.5
      %v5573 = vmul.f32 %v5541, 0.5
      %v5574 = vmul.f32 %v5544, 0.5
      %v5575 = vmul.f32 %v5546, 0.5
      %v5576 = vmul.f32 %v5549, 0.5
      %v5577 = vmul.f32 %v5551, 0.5
      %v5578 = vmul.f32 %v5554, 0.5
      %v5579 = vmul.f32 %v5556, 0.5
      %v5580 = vmul.f32 %v5559, 0.5
      %v5581 = vmul.f32 %v5561, 0.5
      %v5582 = vmul.f32 %v5564, 0.5
      %v5583 = vmul.f32 %v5566, 0.5
      %v5584 = vmul.f32 %v5529, 0.70710677
      %v5585 = vmul.f32 %v5531, 0.70710677
      %v5586 = vmul.f32 %v5534, 0.70710677
      %v5587 = vmul.f32 %v5536, 0.70710677
      %v5588 = vmul.f32 %v5539, 0.70710677
      %v5589 = vmul.f32 %v5541, 0.70710677
      %v5590 = vmul.f32 %v5544, 0.70710677
      %v5591 = vmul.f32 %v5546, 0.70710677
      %v5592 = vmul.f32 %v5549, 0.70710677
      %v5593 = vmul.f32 %v5551, 0.70710677
      %v5594 = vmul.f32 %v5554, 0.70710677
      %v5595 = vmul.f32 %v5556, 0.70710677
      %v5596 = vmul.f32 %v5559, 0.70710677
      %v5597 = vmul.f32 %v5561, 0.70710677
      %v5598 = vmul.f32 %v5564, 0.70710677
      %v5599 = vmul.f32 %v5566, 0.70710677
      %v5600 = vand.u32 2147483647, %v5584
      %v5601 = vand.u32 2147483647, %v5585
      %v5602 = vand.u32 2147483647, %v5586
      %v5603 = vand.u32 2147483647, %v5587
      %v5604 = vand.u32 2147483647, %v5588
      %v5605 = vand.u32 2147483647, %v5589
      %v5606 = vand.u32 2147483647, %v5590
      %v5607 = vand.u32 2147483647, %v5591
      %v5608 = vand.u32 2147483647, %v5592
      %v5609 = vand.u32 2147483647, %v5593
      %v5610 = vand.u32 2147483647, %v5594
      %v5611 = vand.u32 2147483647, %v5595
      %v5612 = vand.u32 2147483647, %v5596
      %v5613 = vand.u32 2147483647, %v5597
      %v5614 = vand.u32 2147483647, %v5598
      %v5615 = vand.u32 2147483647, %v5599
      %v5616 = vmul.f32 %v5600, 0.3275911
      %v5617 = vmul.f32 %v5601, 0.3275911
      %v5618 = vmul.f32 %v5602, 0.3275911
      %v5619 = vmul.f32 %v5603, 0.3275911
      %v5620 = vmul.f32 %v5604, 0.3275911
      %v5621 = vmul.f32 %v5605, 0.3275911
      %v5622 = vmul.f32 %v5606, 0.3275911
      %v5623 = vmul.f32 %v5607, 0.3275911
      %v5624 = vmul.f32 %v5608, 0.3275911
      %v5625 = vmul.f32 %v5609, 0.3275911
      %v5626 = vmul.f32 %v5610, 0.3275911
      %v5627 = vmul.f32 %v5611, 0.3275911
      %v5628 = vmul.f32 %v5612, 0.3275911
      %v5629 = vmul.f32 %v5613, 0.3275911
      %v5630 = vmul.f32 %v5614, 0.3275911
      %v5631 = vmul.f32 %v5615, 0.3275911
      %v5632 = vadd.f32 %v5616, 1.0
      %v5633 = vadd.f32 %v5617, 1.0
      %v5634 = vadd.f32 %v5618, 1.0
      %v5635 = vadd.f32 %v5619, 1.0
      %v5636 = vadd.f32 %v5620, 1.0
      %v5637 = vadd.f32 %v5621, 1.0
      %v5638 = vadd.f32 %v5622, 1.0
      %v5639 = vadd.f32 %v5623, 1.0
      %v5640 = vadd.f32 %v5624, 1.0
      %v5641 = vadd.f32 %v5625, 1.0
      %v5642 = vadd.f32 %v5626, 1.0
      %v5643 = vadd.f32 %v5627, 1.0
      %v5644 = vadd.f32 %v5628, 1.0
      %v5645 = vadd.f32 %v5629, 1.0
      %v5646 = vadd.f32 %v5630, 1.0
      %v5647 = vadd.f32 %v5631, 1.0
      %v5648 = vrcp.pop %v5632
      %v5649 = vmul.f32 %v5632, %v5648
      %v5650 = vsub.f32 1.0, %v5649
      %v5651 = vmul.f32 %v5648, %v5650
      %v5652 = vadd.f32 %v5648, %v5651
      %vm5653 = vweird.f32 %v5632
      %vm5654 = vweird.f32 %v5648
      %vm5655 = vmor %vm5653, %vm5654
      %v5656 = vsel %vm5655, %v5648, %v5652
      %v5657 = vand.u32 2147483647, %v5632
      %vm5658 = vcmp.eq.f32.partialorder %v5657, 8.507059e+37
      %v5659 = vand.u32 %v5632, 2147483648
      %v5660 = vor.u32 1.1754944e-38, %v5659
      %v5661 = vsel %vm5658, %v5660, %v5656
      %v5662 = vmul.f32 1.0, %v5661
      %v5663 = vrcp.pop %v5633
      %v5664 = vmul.f32 %v5633, %v5663
      %v5665 = vsub.f32 1.0, %v5664
      %v5666 = vmul.f32 %v5663, %v5665
      %v5667 = vadd.f32 %v5663, %v5666
      %vm5668 = vweird.f32 %v5633
      %vm5669 = vweird.f32 %v5663
      %vm5670 = vmor %vm5668, %vm5669
      %v5671 = vsel %vm5670, %v5663, %v5667
      %v5672 = vand.u32 2147483647, %v5633
      %vm5673 = vcmp.eq.f32.partialorder %v5672, 8.507059e+37
      %v5674 = vand.u32 %v5633, 2147483648
      %v5675 = vor.u32 1.1754944e-38, %v5674
      %v5676 = vsel %vm5673, %v5675, %v5671
      %v5677 = vmul.f32 1.0, %v5676
      %v5678 = vrcp.pop %v5634
      %v5679 = vmul.f32 %v5634, %v5678
      %v5680 = vsub.f32 1.0, %v5679
      %v5681 = vmul.f32 %v5678, %v5680
      %v5682 = vadd.f32 %v5678, %v5681
      %vm5683 = vweird.f32 %v5634
      %vm5684 = vweird.f32 %v5678
      %vm5685 = vmor %vm5683, %vm5684
      %v5686 = vsel %vm5685, %v5678, %v5682
      %v5687 = vand.u32 2147483647, %v5634
      %vm5688 = vcmp.eq.f32.partialorder %v5687, 8.507059e+37
      %v5689 = vand.u32 %v5634, 2147483648
      %v5690 = vor.u32 1.1754944e-38, %v5689
      %v5691 = vsel %vm5688, %v5690, %v5686
      %v5692 = vmul.f32 1.0, %v5691
      %v5693 = vrcp.pop %v5635
      %v5694 = vmul.f32 %v5635, %v5693
      %v5695 = vsub.f32 1.0, %v5694
      %v5696 = vmul.f32 %v5693, %v5695
      %v5697 = vadd.f32 %v5693, %v5696
      %vm5698 = vweird.f32 %v5635
      %vm5699 = vweird.f32 %v5693
      %vm5700 = vmor %vm5698, %vm5699
      %v5701 = vsel %vm5700, %v5693, %v5697
      %v5702 = vand.u32 2147483647, %v5635
      %vm5703 = vcmp.eq.f32.partialorder %v5702, 8.507059e+37
      %v5704 = vand.u32 %v5635, 2147483648
      %v5705 = vor.u32 1.1754944e-38, %v5704
      %v5706 = vsel %vm5703, %v5705, %v5701
      %v5707 = vmul.f32 1.0, %v5706
      %v5708 = vrcp.pop %v5636
      %v5709 = vmul.f32 %v5636, %v5708
      %v5710 = vsub.f32 1.0, %v5709
      %v5711 = vmul.f32 %v5708, %v5710
      %v5712 = vadd.f32 %v5708, %v5711
      %vm5713 = vweird.f32 %v5636
      %vm5714 = vweird.f32 %v5708
      %vm5715 = vmor %vm5713, %vm5714
      %v5716 = vsel %vm5715, %v5708, %v5712
      %v5717 = vand.u32 2147483647, %v5636
      %vm5718 = vcmp.eq.f32.partialorder %v5717, 8.507059e+37
      %v5719 = vand.u32 %v5636, 2147483648
      %v5720 = vor.u32 1.1754944e-38, %v5719
      %v5721 = vsel %vm5718, %v5720, %v5716
      %v5722 = vmul.f32 1.0, %v5721
      %v5723 = vrcp.pop %v5637
      %v5724 = vmul.f32 %v5637, %v5723
      %v5725 = vsub.f32 1.0, %v5724
      %v5726 = vmul.f32 %v5723, %v5725
      %v5727 = vadd.f32 %v5723, %v5726
      %vm5728 = vweird.f32 %v5637
      %vm5729 = vweird.f32 %v5723
      %vm5730 = vmor %vm5728, %vm5729
      %v5731 = vsel %vm5730, %v5723, %v5727
      %v5732 = vand.u32 2147483647, %v5637
      %vm5733 = vcmp.eq.f32.partialorder %v5732, 8.507059e+37
      %v5734 = vand.u32 %v5637, 2147483648
      %v5735 = vor.u32 1.1754944e-38, %v5734
      %v5736 = vsel %vm5733, %v5735, %v5731
      %v5737 = vmul.f32 1.0, %v5736
      %v5738 = vrcp.pop %v5638
      %v5739 = vmul.f32 %v5638, %v5738
      %v5740 = vsub.f32 1.0, %v5739
      %v5741 = vmul.f32 %v5738, %v5740
      %v5742 = vadd.f32 %v5738, %v5741
      %vm5743 = vweird.f32 %v5638
      %vm5744 = vweird.f32 %v5738
      %vm5745 = vmor %vm5743, %vm5744
      %v5746 = vsel %vm5745, %v5738, %v5742
      %v5747 = vand.u32 2147483647, %v5638
      %vm5748 = vcmp.eq.f32.partialorder %v5747, 8.507059e+37
      %v5749 = vand.u32 %v5638, 2147483648
      %v5750 = vor.u32 1.1754944e-38, %v5749
      %v5751 = vsel %vm5748, %v5750, %v5746
      %v5752 = vmul.f32 1.0, %v5751
      %v5753 = vrcp.pop %v5639
      %v5754 = vmul.f32 %v5639, %v5753
      %v5755 = vsub.f32 1.0, %v5754
      %v5756 = vmul.f32 %v5753, %v5755
      %v5757 = vadd.f32 %v5753, %v5756
      %vm5758 = vweird.f32 %v5639
      %vm5759 = vweird.f32 %v5753
      %vm5760 = vmor %vm5758, %vm5759
      %v5761 = vsel %vm5760, %v5753, %v5757
      %v5762 = vand.u32 2147483647, %v5639
      %vm5763 = vcmp.eq.f32.partialorder %v5762, 8.507059e+37
      %v5764 = vand.u32 %v5639, 2147483648
      %v5765 = vor.u32 1.1754944e-38, %v5764
      %v5766 = vsel %vm5763, %v5765, %v5761
      %v5767 = vmul.f32 1.0, %v5766
      %v5768 = vrcp.pop %v5640
      %v5769 = vmul.f32 %v5640, %v5768
      %v5770 = vsub.f32 1.0, %v5769
      %v5771 = vmul.f32 %v5768, %v5770
      %v5772 = vadd.f32 %v5768, %v5771
      %vm5773 = vweird.f32 %v5640
      %vm5774 = vweird.f32 %v5768
      %vm5775 = vmor %vm5773, %vm5774
      %v5776 = vsel %vm5775, %v5768, %v5772
      %v5777 = vand.u32 2147483647, %v5640
      %vm5778 = vcmp.eq.f32.partialorder %v5777, 8.507059e+37
      %v5779 = vand.u32 %v5640, 2147483648
      %v5780 = vor.u32 1.1754944e-38, %v5779
      %v5781 = vsel %vm5778, %v5780, %v5776
      %v5782 = vmul.f32 1.0, %v5781
      %v5783 = vrcp.pop %v5641
      %v5784 = vmul.f32 %v5641, %v5783
      %v5785 = vsub.f32 1.0, %v5784
      %v5786 = vmul.f32 %v5783, %v5785
      %v5787 = vadd.f32 %v5783, %v5786
      %vm5788 = vweird.f32 %v5641
      %vm5789 = vweird.f32 %v5783
      %vm5790 = vmor %vm5788, %vm5789
      %v5791 = vsel %vm5790, %v5783, %v5787
      %v5792 = vand.u32 2147483647, %v5641
      %vm5793 = vcmp.eq.f32.partialorder %v5792, 8.507059e+37
      %v5794 = vand.u32 %v5641, 2147483648
      %v5795 = vor.u32 1.1754944e-38, %v5794
      %v5796 = vsel %vm5793, %v5795, %v5791
      %v5797 = vmul.f32 1.0, %v5796
      %v5798 = vrcp.pop %v5642
      %v5799 = vmul.f32 %v5642, %v5798
      %v5800 = vsub.f32 1.0, %v5799
      %v5801 = vmul.f32 %v5798, %v5800
      %v5802 = vadd.f32 %v5798, %v5801
      %vm5803 = vweird.f32 %v5642
      %vm5804 = vweird.f32 %v5798
      %vm5805 = vmor %vm5803, %vm5804
      %v5806 = vsel %vm5805, %v5798, %v5802
      %v5807 = vand.u32 2147483647, %v5642
      %vm5808 = vcmp.eq.f32.partialorder %v5807, 8.507059e+37
      %v5809 = vand.u32 %v5642, 2147483648
      %v5810 = vor.u32 1.1754944e-38, %v5809
      %v5811 = vsel %vm5808, %v5810, %v5806
      %v5812 = vmul.f32 1.0, %v5811
      %v5813 = vrcp.pop %v5643
      %v5814 = vmul.f32 %v5643, %v5813
      %v5815 = vsub.f32 1.0, %v5814
      %v5816 = vmul.f32 %v5813, %v5815
      %v5817 = vadd.f32 %v5813, %v5816
      %vm5818 = vweird.f32 %v5643
      %vm5819 = vweird.f32 %v5813
      %vm5820 = vmor %vm5818, %vm5819
      %v5821 = vsel %vm5820, %v5813, %v5817
      %v5822 = vand.u32 2147483647, %v5643
      %vm5823 = vcmp.eq.f32.partialorder %v5822, 8.507059e+37
      %v5824 = vand.u32 %v5643, 2147483648
      %v5825 = vor.u32 1.1754944e-38, %v5824
      %v5826 = vsel %vm5823, %v5825, %v5821
      %v5827 = vmul.f32 1.0, %v5826
      %v5828 = vrcp.pop %v5644
      %v5829 = vmul.f32 %v5644, %v5828
      %v5830 = vsub.f32 1.0, %v5829
      %v5831 = vmul.f32 %v5828, %v5830
      %v5832 = vadd.f32 %v5828, %v5831
      %vm5833 = vweird.f32 %v5644
      %vm5834 = vweird.f32 %v5828
      %vm5835 = vmor %vm5833, %vm5834
      %v5836 = vsel %vm5835, %v5828, %v5832
      %v5837 = vand.u32 2147483647, %v5644
      %vm5838 = vcmp.eq.f32.partialorder %v5837, 8.507059e+37
      %v5839 = vand.u32 %v5644, 2147483648
      %v5840 = vor.u32 1.1754944e-38, %v5839
      %v5841 = vsel %vm5838, %v5840, %v5836
      %v5842 = vmul.f32 1.0, %v5841
      %v5843 = vrcp.pop %v5645
      %v5844 = vmul.f32 %v5645, %v5843
      %v5845 = vsub.f32 1.0, %v5844
      %v5846 = vmul.f32 %v5843, %v5845
      %v5847 = vadd.f32 %v5843, %v5846
      %vm5848 = vweird.f32 %v5645
      %vm5849 = vweird.f32 %v5843
      %vm5850 = vmor %vm5848, %vm5849
      %v5851 = vsel %vm5850, %v5843, %v5847
      %v5852 = vand.u32 2147483647, %v5645
      %vm5853 = vcmp.eq.f32.partialorder %v5852, 8.507059e+37
      %v5854 = vand.u32 %v5645, 2147483648
      %v5855 = vor.u32 1.1754944e-38, %v5854
      %v5856 = vsel %vm5853, %v5855, %v5851
      %v5857 = vmul.f32 1.0, %v5856
      %v5858 = vrcp.pop %v5646
      %v5859 = vmul.f32 %v5646, %v5858
      %v5860 = vsub.f32 1.0, %v5859
      %v5861 = vmul.f32 %v5858, %v5860
      %v5862 = vadd.f32 %v5858, %v5861
      %vm5863 = vweird.f32 %v5646
      %vm5864 = vweird.f32 %v5858
      %vm5865 = vmor %vm5863, %vm5864
      %v5866 = vsel %vm5865, %v5858, %v5862
      %v5867 = vand.u32 2147483647, %v5646
      %vm5868 = vcmp.eq.f32.partialorder %v5867, 8.507059e+37
      %v5869 = vand.u32 %v5646, 2147483648
      %v5870 = vor.u32 1.1754944e-38, %v5869
      %v5871 = vsel %vm5868, %v5870, %v5866
      %v5872 = vmul.f32 1.0, %v5871
      %v5873 = vrcp.pop %v5647
      %v5874 = vmul.f32 %v5647, %v5873
      %v5875 = vsub.f32 1.0, %v5874
      %v5876 = vmul.f32 %v5873, %v5875
      %v5877 = vadd.f32 %v5873, %v5876
      %vm5878 = vweird.f32 %v5647
      %vm5879 = vweird.f32 %v5873
      %vm5880 = vmor %vm5878, %vm5879
      %v5881 = vsel %vm5880, %v5873, %v5877
      %v5882 = vand.u32 2147483647, %v5647
      %vm5883 = vcmp.eq.f32.partialorder %v5882, 8.507059e+37
      %v5884 = vand.u32 %v5647, 2147483648
      %v5885 = vor.u32 1.1754944e-38, %v5884
      %v5886 = vsel %vm5883, %v5885, %v5881
      %v5887 = vmul.f32 1.0, %v5886
      %v5888 = vmul.f32 %v5662, 1.0614054
      %v5889 = vmul.f32 %v5677, 1.0614054
      %v5890 = vmul.f32 %v5692, 1.0614054
      %v5891 = vmul.f32 %v5707, 1.0614054
      %v5892 = vmul.f32 %v5722, 1.0614054
      %v5893 = vmul.f32 %v5737, 1.0614054
      %v5894 = vmul.f32 %v5752, 1.0614054
      %v5895 = vmul.f32 %v5767, 1.0614054
      %v5896 = vmul.f32 %v5782, 1.0614054
      %v5897 = vmul.f32 %v5797, 1.0614054
      %v5898 = vmul.f32 %v5812, 1.0614054
      %v5899 = vmul.f32 %v5827, 1.0614054
      %v5900 = vmul.f32 %v5842, 1.0614054
      %v5901 = vmul.f32 %v5857, 1.0614054
      %v5902 = vmul.f32 %v5872, 1.0614054
      %v5903 = vmul.f32 %v5887, 1.0614054
      %v5904 = vadd.f32 %v5888, -1.4531521
      %v5905 = vadd.f32 %v5889, -1.4531521
      %v5906 = vadd.f32 %v5890, -1.4531521
      %v5907 = vadd.f32 %v5891, -1.4531521
      %v5908 = vadd.f32 %v5892, -1.4531521
      %v5909 = vadd.f32 %v5893, -1.4531521
      %v5910 = vadd.f32 %v5894, -1.4531521
      %v5911 = vadd.f32 %v5895, -1.4531521
      %v5912 = vadd.f32 %v5896, -1.4531521
      %v5913 = vadd.f32 %v5897, -1.4531521
      %v5914 = vadd.f32 %v5898, -1.4531521
      %v5915 = vadd.f32 %v5899, -1.4531521
      %v5916 = vadd.f32 %v5900, -1.4531521
      %v5917 = vadd.f32 %v5901, -1.4531521
      %v5918 = vadd.f32 %v5902, -1.4531521
      %v5919 = vadd.f32 %v5903, -1.4531521
      %v5920 = vmul.f32 %v5904, %v5662
      %v5921 = vmul.f32 %v5905, %v5677
      %v5922 = vmul.f32 %v5906, %v5692
      %v5923 = vmul.f32 %v5907, %v5707
      %v5924 = vmul.f32 %v5908, %v5722
      %v5925 = vmul.f32 %v5909, %v5737
      %v5926 = vmul.f32 %v5910, %v5752
      %v5927 = vmul.f32 %v5911, %v5767
      %v5928 = vmul.f32 %v5912, %v5782
      %v5929 = vmul.f32 %v5913, %v5797
      %v5930 = vmul.f32 %v5914, %v5812
      %v5931 = vmul.f32 %v5915, %v5827
      %v5932 = vmul.f32 %v5916, %v5842
      %v5933 = vmul.f32 %v5917, %v5857
      %v5934 = vmul.f32 %v5918, %v5872
      %v5935 = vmul.f32 %v5919, %v5887
      %v5936 = vadd.f32 %v5920, 1.4214138
      %v5937 = vadd.f32 %v5921, 1.4214138
      %v5938 = vadd.f32 %v5922, 1.4214138
      %v5939 = vadd.f32 %v5923, 1.4214138
      %v5940 = vadd.f32 %v5924, 1.4214138
      %v5941 = vadd.f32 %v5925, 1.4214138
      %v5942 = vadd.f32 %v5926, 1.4214138
      %v5943 = vadd.f32 %v5927, 1.4214138
      %v5944 = vadd.f32 %v5928, 1.4214138
      %v5945 = vadd.f32 %v5929, 1.4214138
      %v5946 = vadd.f32 %v5930, 1.4214138
      %v5947 = vadd.f32 %v5931, 1.4214138
      %v5948 = vadd.f32 %v5932, 1.4214138
      %v5949 = vadd.f32 %v5933, 1.4214138
      %v5950 = vadd.f32 %v5934, 1.4214138
      %v5951 = vadd.f32 %v5935, 1.4214138
      %v5952 = vmul.f32 %v5936, %v5662
      %v5953 = vmul.f32 %v5937, %v5677
      %v5954 = vmul.f32 %v5938, %v5692
      %v5955 = vmul.f32 %v5939, %v5707
      %v5956 = vmul.f32 %v5940, %v5722
      %v5957 = vmul.f32 %v5941, %v5737
      %v5958 = vmul.f32 %v5942, %v5752
      %v5959 = vmul.f32 %v5943, %v5767
      %v5960 = vmul.f32 %v5944, %v5782
      %v5961 = vmul.f32 %v5945, %v5797
      %v5962 = vmul.f32 %v5946, %v5812
      %v5963 = vmul.f32 %v5947, %v5827
      %v5964 = vmul.f32 %v5948, %v5842
      %v5965 = vmul.f32 %v5949, %v5857
      %v5966 = vmul.f32 %v5950, %v5872
      %v5967 = vmul.f32 %v5951, %v5887
      %v5968 = vadd.f32 %v5952, -0.28449672
      %v5969 = vadd.f32 %v5953, -0.28449672
      %v5970 = vadd.f32 %v5954, -0.28449672
      %v5971 = vadd.f32 %v5955, -0.28449672
      %v5972 = vadd.f32 %v5956, -0.28449672
      %v5973 = vadd.f32 %v5957, -0.28449672
      %v5974 = vadd.f32 %v5958, -0.28449672
      %v5975 = vadd.f32 %v5959, -0.28449672
      %v5976 = vadd.f32 %v5960, -0.28449672
      %v5977 = vadd.f32 %v5961, -0.28449672
      %v5978 = vadd.f32 %v5962, -0.28449672
      %v5979 = vadd.f32 %v5963, -0.28449672
      %v5980 = vadd.f32 %v5964, -0.28449672
      %v5981 = vadd.f32 %v5965, -0.28449672
      %v5982 = vadd.f32 %v5966, -0.28449672
      %v5983 = vadd.f32 %v5967, -0.28449672
      %v5984 = vmul.f32 %v5968, %v5662
      %v5985 = vmul.f32 %v5969, %v5677
      %v5986 = vmul.f32 %v5970, %v5692
      %v5987 = vmul.f32 %v5971, %v5707
      %v5988 = vmul.f32 %v5972, %v5722
      %v5989 = vmul.f32 %v5973, %v5737
      %v5990 = vmul.f32 %v5974, %v5752
      %v5991 = vmul.f32 %v5975, %v5767
      %v5992 = vmul.f32 %v5976, %v5782
      %v5993 = vmul.f32 %v5977, %v5797
      %v5994 = vmul.f32 %v5978, %v5812
      %v5995 = vmul.f32 %v5979, %v5827
      %v5996 = vmul.f32 %v5980, %v5842
      %v5997 = vmul.f32 %v5981, %v5857
      %v5998 = vmul.f32 %v5982, %v5872
      %v5999 = vmul.f32 %v5983, %v5887
      %v6000 = vadd.f32 %v5984, 0.2548296
      %v6001 = vadd.f32 %v5985, 0.2548296
      %v6002 = vadd.f32 %v5986, 0.2548296
      %v6003 = vadd.f32 %v5987, 0.2548296
      %v6004 = vadd.f32 %v5988, 0.2548296
      %v6005 = vadd.f32 %v5989, 0.2548296
      %v6006 = vadd.f32 %v5990, 0.2548296
      %v6007 = vadd.f32 %v5991, 0.2548296
      %v6008 = vadd.f32 %v5992, 0.2548296
      %v6009 = vadd.f32 %v5993, 0.2548296
      %v6010 = vadd.f32 %v5994, 0.2548296
      %v6011 = vadd.f32 %v5995, 0.2548296
      %v6012 = vadd.f32 %v5996, 0.2548296
      %v6013 = vadd.f32 %v5997, 0.2548296
      %v6014 = vadd.f32 %v5998, 0.2548296
      %v6015 = vadd.f32 %v5999, 0.2548296
      %v6016 = vmul.f32 %v6000, %v5662
      %v6017 = vmul.f32 %v6001, %v5677
      %v6018 = vmul.f32 %v6002, %v5692
      %v6019 = vmul.f32 %v6003, %v5707
      %v6020 = vmul.f32 %v6004, %v5722
      %v6021 = vmul.f32 %v6005, %v5737
      %v6022 = vmul.f32 %v6006, %v5752
      %v6023 = vmul.f32 %v6007, %v5767
      %v6024 = vmul.f32 %v6008, %v5782
      %v6025 = vmul.f32 %v6009, %v5797
      %v6026 = vmul.f32 %v6010, %v5812
      %v6027 = vmul.f32 %v6011, %v5827
      %v6028 = vmul.f32 %v6012, %v5842
      %v6029 = vmul.f32 %v6013, %v5857
      %v6030 = vmul.f32 %v6014, %v5872
      %v6031 = vmul.f32 %v6015, %v5887
      %v6032 = vsub.f32 0.0, %v5600
      %v6033 = vsub.f32 0.0, %v5601
      %v6034 = vsub.f32 0.0, %v5602
      %v6035 = vsub.f32 0.0, %v5603
      %v6036 = vsub.f32 0.0, %v5604
      %v6037 = vsub.f32 0.0, %v5605
      %v6038 = vsub.f32 0.0, %v5606
      %v6039 = vsub.f32 0.0, %v5607
      %v6040 = vsub.f32 0.0, %v5608
      %v6041 = vsub.f32 0.0, %v5609
      %v6042 = vsub.f32 0.0, %v5610
      %v6043 = vsub.f32 0.0, %v5611
      %v6044 = vsub.f32 0.0, %v5612
      %v6045 = vsub.f32 0.0, %v5613
      %v6046 = vsub.f32 0.0, %v5614
      %v6047 = vsub.f32 0.0, %v5615
      %v6048 = vmul.f32 %v6032, %v5600
      %v6049 = vmul.f32 %v6033, %v5601
      %v6050 = vmul.f32 %v6034, %v5602
      %v6051 = vmul.f32 %v6035, %v5603
      %v6052 = vmul.f32 %v6036, %v5604
      %v6053 = vmul.f32 %v6037, %v5605
      %v6054 = vmul.f32 %v6038, %v5606
      %v6055 = vmul.f32 %v6039, %v5607
      %v6056 = vmul.f32 %v6040, %v5608
      %v6057 = vmul.f32 %v6041, %v5609
      %v6058 = vmul.f32 %v6042, %v5610
      %v6059 = vmul.f32 %v6043, %v5611
      %v6060 = vmul.f32 %v6044, %v5612
      %v6061 = vmul.f32 %v6045, %v5613
      %v6062 = vmul.f32 %v6046, %v5614
      %v6063 = vmul.f32 %v6047, %v5615
      %v6064 = vmul.f32 %v6048, 1.442695
      %v6065 = vpow.pop %v6064
      %v6066 = vmul.f32 %v6049, 1.442695
      %v6067 = vpow.pop %v6066
      %v6068 = vmul.f32 %v6050, 1.442695
      %v6069 = vpow.pop %v6068
      %v6070 = vmul.f32 %v6051, 1.442695
      %v6071 = vpow.pop %v6070
      %v6072 = vmul.f32 %v6052, 1.442695
      %v6073 = vpow.pop %v6072
      %v6074 = vmul.f32 %v6053, 1.442695
      %v6075 = vpow.pop %v6074
      %v6076 = vmul.f32 %v6054, 1.442695
      %v6077 = vpow.pop %v6076
      %v6078 = vmul.f32 %v6055, 1.442695
      %v6079 = vpow.pop %v6078
      %v6080 = vmul.f32 %v6056, 1.442695
      %v6081 = vpow.pop %v6080
      %v6082 = vmul.f32 %v6057, 1.442695
      %v6083 = vpow.pop %v6082
      %v6084 = vmul.f32 %v6058, 1.442695
      %v6085 = vpow.pop %v6084
      %v6086 = vmul.f32 %v6059, 1.442695
      %v6087 = vpow.pop %v6086
      %v6088 = vmul.f32 %v6060, 1.442695
      %v6089 = vpow.pop %v6088
      %v6090 = vmul.f32 %v6061, 1.442695
      %v6091 = vpow.pop %v6090
      %v6092 = vmul.f32 %v6062, 1.442695
      %v6093 = vpow.pop %v6092
      %v6094 = vmul.f32 %v6063, 1.442695
      %v6095 = vpow.pop %v6094
      %v6096 = vmul.f32 %v6016, %v6065
      %v6097 = vmul.f32 %v6017, %v6067
      %v6098 = vmul.f32 %v6018, %v6069
      %v6099 = vmul.f32 %v6019, %v6071
      %v6100 = vmul.f32 %v6020, %v6073
      %v6101 = vmul.f32 %v6021, %v6075
      %v6102 = vmul.f32 %v6022, %v6077
      %v6103 = vmul.f32 %v6023, %v6079
      %v6104 = vmul.f32 %v6024, %v6081
      %v6105 = vmul.f32 %v6025, %v6083
      %v6106 = vmul.f32 %v6026, %v6085
      %v6107 = vmul.f32 %v6027, %v6087
      %v6108 = vmul.f32 %v6028, %v6089
      %v6109 = vmul.f32 %v6029, %v6091
      %v6110 = vmul.f32 %v6030, %v6093
      %v6111 = vmul.f32 %v6031, %v6095
      %v6112 = vsub.f32 1.0, %v6096
      %v6113 = vsub.f32 1.0, %v6097
      %v6114 = vsub.f32 1.0, %v6098
      %v6115 = vsub.f32 1.0, %v6099
      %v6116 = vsub.f32 1.0, %v6100
      %v6117 = vsub.f32 1.0, %v6101
      %v6118 = vsub.f32 1.0, %v6102
      %v6119 = vsub.f32 1.0, %v6103
      %v6120 = vsub.f32 1.0, %v6104
      %v6121 = vsub.f32 1.0, %v6105
      %v6122 = vsub.f32 1.0, %v6106
      %v6123 = vsub.f32 1.0, %v6107
      %v6124 = vsub.f32 1.0, %v6108
      %v6125 = vsub.f32 1.0, %v6109
      %v6126 = vsub.f32 1.0, %v6110
      %v6127 = vsub.f32 1.0, %v6111
      %vm6128 = vcmp.ge.f32.partialorder %v5584, 0.0
      %vm6129 = vcmp.ge.f32.partialorder %v5585, 0.0
      %vm6130 = vcmp.ge.f32.partialorder %v5586, 0.0
      %vm6131 = vcmp.ge.f32.partialorder %v5587, 0.0
      %vm6132 = vcmp.ge.f32.partialorder %v5588, 0.0
      %vm6133 = vcmp.ge.f32.partialorder %v5589, 0.0
      %vm6134 = vcmp.ge.f32.partialorder %v5590, 0.0
      %vm6135 = vcmp.ge.f32.partialorder %v5591, 0.0
      %vm6136 = vcmp.ge.f32.partialorder %v5592, 0.0
      %vm6137 = vcmp.ge.f32.partialorder %v5593, 0.0
      %vm6138 = vcmp.ge.f32.partialorder %v5594, 0.0
      %vm6139 = vcmp.ge.f32.partialorder %v5595, 0.0
      %vm6140 = vcmp.ge.f32.partialorder %v5596, 0.0
      %vm6141 = vcmp.ge.f32.partialorder %v5597, 0.0
      %vm6142 = vcmp.ge.f32.partialorder %v5598, 0.0
      %vm6143 = vcmp.ge.f32.partialorder %v5599, 0.0
      %v6144 = vsub.f32 0.0, %v6112
      %v6145 = vsub.f32 0.0, %v6113
      %v6146 = vsub.f32 0.0, %v6114
      %v6147 = vsub.f32 0.0, %v6115
      %v6148 = vsub.f32 0.0, %v6116
      %v6149 = vsub.f32 0.0, %v6117
      %v6150 = vsub.f32 0.0, %v6118
      %v6151 = vsub.f32 0.0, %v6119
      %v6152 = vsub.f32 0.0, %v6120
      %v6153 = vsub.f32 0.0, %v6121
      %v6154 = vsub.f32 0.0, %v6122
      %v6155 = vsub.f32 0.0, %v6123
      %v6156 = vsub.f32 0.0, %v6124
      %v6157 = vsub.f32 0.0, %v6125
      %v6158 = vsub.f32 0.0, %v6126
      %v6159 = vsub.f32 0.0, %v6127
      %v6160 = vsel %vm6128, %v6112, %v6144
      %v6161 = vsel %vm6129, %v6113, %v6145
      %v6162 = vsel %vm6130, %v6114, %v6146
      %v6163 = vsel %vm6131, %v6115, %v6147
      %v6164 = vsel %vm6132, %v6116, %v6148
      %v6165 = vsel %vm6133, %v6117, %v6149
      %v6166 = vsel %vm6134, %v6118, %v6150
      %v6167 = vsel %vm6135, %v6119, %v6151
      %v6168 = vsel %vm6136, %v6120, %v6152
      %v6169 = vsel %vm6137, %v6121, %v6153
      %v6170 = vsel %vm6138, %v6122, %v6154
      %v6171 = vsel %vm6139, %v6123, %v6155
      %v6172 = vsel %vm6140, %v6124, %v6156
      %v6173 = vsel %vm6141, %v6125, %v6157
      %v6174 = vsel %vm6142, %v6126, %v6158
      %v6175 = vsel %vm6143, %v6127, %v6159
      %v6176 = vadd.f32 %v6160, 1.0
      %v6177 = vadd.f32 %v6161, 1.0
      %v6178 = vadd.f32 %v6162, 1.0
      %v6179 = vadd.f32 %v6163, 1.0
      %v6180 = vadd.f32 %v6164, 1.0
      %v6181 = vadd.f32 %v6165, 1.0
      %v6182 = vadd.f32 %v6166, 1.0
      %v6183 = vadd.f32 %v6167, 1.0
      %v6184 = vadd.f32 %v6168, 1.0
      %v6185 = vadd.f32 %v6169, 1.0
      %v6186 = vadd.f32 %v6170, 1.0
      %v6187 = vadd.f32 %v6171, 1.0
      %v6188 = vadd.f32 %v6172, 1.0
      %v6189 = vadd.f32 %v6173, 1.0
      %v6190 = vadd.f32 %v6174, 1.0
      %v6191 = vadd.f32 %v6175, 1.0
      %v6192 = vmul.f32 %v5568, %v6176
      %v6193 = vmul.f32 %v5569, %v6177
      %v6194 = vmul.f32 %v5570, %v6178
      %v6195 = vmul.f32 %v5571, %v6179
      %v6196 = vmul.f32 %v5572, %v6180
      %v6197 = vmul.f32 %v5573, %v6181
      %v6198 = vmul.f32 %v5574, %v6182
      %v6199 = vmul.f32 %v5575, %v6183
      %v6200 = vmul.f32 %v5576, %v6184
      %v6201 = vmul.f32 %v5577, %v6185
      %v6202 = vmul.f32 %v5578, %v6186
      %v6203 = vmul.f32 %v5579, %v6187
      %v6204 = vmul.f32 %v5580, %v6188
      %v6205 = vmul.f32 %v5581, %v6189
      %v6206 = vmul.f32 %v5582, %v6190
      %v6207 = vmul.f32 %v5583, %v6191
      %v6208 = vpack.c.bf16 %v6193, %v6192
      %v6209 = vpack.c.bf16 %v6195, %v6194
      %v6210 = vpack.c.bf16 %v6197, %v6196
      %v6211 = vpack.c.bf16 %v6199, %v6198
      %v6212 = vpack.c.bf16 %v6201, %v6200
      %v6213 = vpack.c.bf16 %v6203, %v6202
      %v6214 = vpack.c.bf16 %v6205, %v6204
      %v6215 = vpack.c.bf16 %v6207, %v6206
      %v6216 = vld [vmem:[%s10] sm:$0xf]
      %v6217 = vld [vmem:[%s10 + $0x4] sm:$0xf]
      %v6218 = vld [vmem:[%s10 + $0x8] sm:$0xf]
      %v6219 = vld [vmem:[%s10 + $0xc] sm:$0xf]
      %v6220 = vld [vmem:[%s10 + $0x10] sm:$0xf]
      %v6221 = vld [vmem:[%s10 + $0x14] sm:$0xf]
      %v6222 = vld [vmem:[%s10 + $0x18] sm:$0xf]
      %v6223 = vld [vmem:[%s10 + $0x1c] sm:$0xf]
      %v6224 = vld [vmem:[%s10 + $0x20] sm:$0xf]
      %v6225 = vld [vmem:[%s10 + $0x24] sm:$0xf]
      %v6226 = vld [vmem:[%s10 + $0x28] sm:$0xf]
      %v6227 = vld [vmem:[%s10 + $0x2c] sm:$0xf]
      %v6228 = vld [vmem:[%s10 + $0x30] sm:$0xf]
      %v6229 = vld [vmem:[%s10 + $0x34] sm:$0xf]
      %v6230 = vld [vmem:[%s10 + $0x38] sm:$0xf]
      %v6231 = vld [vmem:[%s10 + $0x3c] sm:$0xf]
      %v6232 = vld [vmem:[%s11] sm:$0x1]
      %v6234 = vperm.slane %v6232, 0
      %v6252 = vunpack.c.l.b16 %v6216
      %v6253 = vunpack.c.l.b16 %v6217
      %v6254 = vunpack.c.l.b16 %v6218
      %v6255 = vunpack.c.l.b16 %v6219
      %v6256 = vunpack.c.l.b16 %v6220
      %v6257 = vunpack.c.l.b16 %v6221
      %v6258 = vunpack.c.l.b16 %v6222
      %v6259 = vunpack.c.l.b16 %v6223
      %v6260 = vunpack.c.l.b16 %v6224
      %v6261 = vunpack.c.l.b16 %v6225
      %v6262 = vunpack.c.l.b16 %v6226
      %v6263 = vunpack.c.l.b16 %v6227
      %v6264 = vunpack.c.l.b16 %v6228
      %v6265 = vunpack.c.l.b16 %v6229
      %v6266 = vunpack.c.l.b16 %v6230
      %v6267 = vunpack.c.l.b16 %v6231
      %v6268 = vpack.c.b16 %v6253, %v6252
      %v6269 = vpack.c.b16 %v6255, %v6254
      %v6270 = vpack.c.b16 %v6257, %v6256
      %v6271 = vpack.c.b16 %v6259, %v6258
      %v6272 = vpack.c.b16 %v6261, %v6260
      %v6273 = vpack.c.b16 %v6263, %v6262
      %v6274 = vpack.c.b16 %v6265, %v6264
      %v6275 = vpack.c.b16 %v6267, %v6266
      %6284 = vmatpush.bf16.msra.mxu0 %v6275
      %6285 = vmatpush.bf16.msra.mxu0 %v6274
      %6286 = vmatpush.bf16.msra.mxu0 %v6273
      %6287 = vmatpush.bf16.msra.mxu0 %v6272
      %6288 = vmatpush.bf16.msra.mxu0 %v6271
      %6289 = vmatpush.bf16.msra.mxu0 %v6270
      %6290 = vmatpush.bf16.msra.mxu0 %v6269
      %6291 = vmatpush.bf16.msra.mxu0 %v6268
      %6292 = vmatmul.bf16.gmra.mxu0 %v6208
      %v6293 = vpop.f32.mrf.mxu0
      %v6294 = vadd.f32 %v6234, %v6293
      %v6295 = vpop.f32.mrf.mxu0
      %v6296 = vadd.f32 %v6234, %v6295
      %6297 = vmatmul.bf16.gmra.mxu0 %v6209
      %v6298 = vpop.f32.mrf.mxu0
      %v6299 = vadd.f32 %v6234, %v6298
      %v6300 = vpop.f32.mrf.mxu0
      %v6301 = vadd.f32 %v6234, %v6300
      %6302 = vmatmul.bf16.gmra.mxu0 %v6210
      %v6303 = vpop.f32.mrf.mxu0
      %v6304 = vadd.f32 %v6234, %v6303
      %v6305 = vpop.f32.mrf.mxu0
      %v6306 = vadd.f32 %v6234, %v6305
      %6307 = vmatmul.bf16.gmra.mxu0 %v6211
      %v6308 = vpop.f32.mrf.mxu0
      %v6309 = vadd.f32 %v6234, %v6308
      %v6310 = vpop.f32.mrf.mxu0
      %v6311 = vadd.f32 %v6234, %v6310
      %6312 = vmatmul.bf16.gmra.mxu0 %v6212
      %v6313 = vpop.f32.mrf.mxu0
      %v6314 = vadd.f32 %v6234, %v6313
      %v6315 = vpop.f32.mrf.mxu0
      %v6316 = vadd.f32 %v6234, %v6315
      %6317 = vmatmul.bf16.gmra.mxu0 %v6213
      %v6318 = vpop.f32.mrf.mxu0
      %v6319 = vadd.f32 %v6234, %v6318
      %v6320 = vpop.f32.mrf.mxu0
      %v6321 = vadd.f32 %v6234, %v6320
      %6322 = vmatmul.bf16.gmra.mxu0 %v6214
      %v6323 = vpop.f32.mrf.mxu0
      %v6324 = vadd.f32 %v6234, %v6323
      %v6325 = vpop.f32.mrf.mxu0
      %v6326 = vadd.f32 %v6234, %v6325
      %6327 = vmatmul.bf16.gmra.mxu0 %v6215
      %v6328 = vpop.f32.mrf.mxu0
      %v6329 = vadd.f32 %v6234, %v6328
      %v6330 = vpop.f32.mrf.mxu0
      %v6331 = vadd.f32 %v6234, %v6330
      %6332 = vdwg.mxu0
      %v6333 = vadd.f32 %v5175, %v6294
      %v6334 = vadd.f32 %v5176, %v6296
      %v6335 = vadd.f32 %v5177, %v6299
      %v6336 = vadd.f32 %v5178, %v6301
      %v6337 = vadd.f32 %v5179, %v6304
      %v6338 = vadd.f32 %v5180, %v6306
      %v6339 = vadd.f32 %v5181, %v6309
      %v6340 = vadd.f32 %v5182, %v6311
      %v6341 = vadd.f32 %v5183, %v6314
      %v6342 = vadd.f32 %v5184, %v6316
      %v6343 = vadd.f32 %v5185, %v6319
      %v6344 = vadd.f32 %v5186, %v6321
      %v6345 = vadd.f32 %v5187, %v6324
      %v6346 = vadd.f32 %v5188, %v6326
      %v6347 = vadd.f32 %v5189, %v6329
      %v6348 = vadd.f32 %v5190, %v6331
      %6349 = vst.msk [vmem:[%s415] sm:$0xff] %vm451, %v6333
      %6350 = vst.msk [vmem:[%s415 + $0x8] sm:$0xff] %vm451, %v6334
      %6351 = vst.msk [vmem:[%s415 + $0x10] sm:$0xff] %vm451, %v6335
      %6352 = vst.msk [vmem:[%s415 + $0x18] sm:$0xff] %vm451, %v6336
      %6353 = vst.msk [vmem:[%s415 + $0x20] sm:$0xff] %vm451, %v6337
      %6354 = vst.msk [vmem:[%s415 + $0x28] sm:$0xff] %vm451, %v6338
      %6355 = vst.msk [vmem:[%s415 + $0x30] sm:$0xff] %vm451, %v6339
      %6356 = vst.msk [vmem:[%s415 + $0x38] sm:$0xff] %vm451, %v6340
      %6357 = vst.msk [vmem:[%s415 + $0x40] sm:$0xff] %vm451, %v6341
      %6358 = vst.msk [vmem:[%s415 + $0x48] sm:$0xff] %vm451, %v6342
      %6359 = vst.msk [vmem:[%s415 + $0x50] sm:$0xff] %vm451, %v6343
      %6360 = vst.msk [vmem:[%s415 + $0x58] sm:$0xff] %vm451, %v6344
      %6361 = vst.msk [vmem:[%s415 + $0x60] sm:$0xff] %vm451, %v6345
      %6362 = vst.msk [vmem:[%s415 + $0x68] sm:$0xff] %vm451, %v6346
      %6363 = vst.msk [vmem:[%s415 + $0x70] sm:$0xff] %vm451, %v6347
      %6364 = vst.msk [vmem:[%s415 + $0x78] sm:$0xff] %vm451, %v6348
      %s6365 = smul.u32 16, %s23
      %p6366 = scmp.lt.s32.totalorder %s6365, 31
      %s6367 = scalar_select %p6366, %s6365, 31
      %s6368 = smul.addr %s6367, 8
      %s6369 = scalar_lea.vmem %s12, %s6368
      // Predicated region
      $region69: #{tpu_custom_call.1} parent=67 // pred_check
        %p6370 = pneg %p298
      $region70: #{tpu_custom_call.1} parent=67 // pred_check_branch
        %6372 = sbr.rel (%p6370) target = $region72
      $region71: #{tpu_custom_call.1} parent=67 // pred_region
        %s6373 = smul.u32 16, %s23
      $region72: #{tpu_custom_call.1} parent=67 // pred_fallthru
        _
    $region68: #{tpu_custom_call.1} parent=5 // pred_fallthru
      _
    %p6374 = scmp.le.s32.totalorder 2, %s18
    // Predicated region
    $region73: #{tpu_custom_call.1} parent=5 // pred_check
      %p6375 = pneg %p6374
    $region74: #{tpu_custom_call.1} parent=5 // pred_check_branch
      %6377 = sbr.rel (%p6375) target = $region76
    $region75: #{tpu_custom_call.1} parent=5 // pred_region
      %s6378 = ssub.s32 %s18, 2
      // Predicated region
      $region77: #{tpu_custom_call.1} parent=75 // pred_check
        %p6379 = pneg %p304
      $region78: #{tpu_custom_call.1} parent=75 // pred_check_branch
        %6381 = sbr.rel (%p6379) target = $region80
      $region79: #{tpu_custom_call.1} parent=75 // pred_region
        %s6382 = smul.u32 16, %s24
        %p6383 = scmp.lt.s32.totalorder %s6382, 31
        %s6384 = scalar_select %p6383, %s6382, 31
        %s6385 = smul.addr %s6384, 8
        %s6386 = scalar_lea.vmem %s12, %s6385
      $region80: #{tpu_custom_call.1} parent=75 // pred_fallthru
        _
    $region76: #{tpu_custom_call.1} parent=5 // pred_fallthru
      _
  $region6: #{tpu_custom_call.1} parent=0 // loop_footer
    %s22 = sadd.s32 1, %s18
  $region7: #{tpu_custom_call.1} parent=0 // loop_footer_branch
    %17 = sbr.rel target = $region3
  $region8: #{tpu_custom_call.1} parent=0 // loop_exit
    _

</llo_original>
